<compile_context>
chip_gen: v5e
topology: v5e:2x2
jax: 0.10.0
libtpu: 0.0.40
codegen_flags: <defaults>
</compile_context>

<pallas_src>
import jax
import jax.numpy as jnp
import numpy as np
from jax.experimental import pallas as pl
from jax.experimental.pallas import tpu as pltpu

_HIGHEST = jax.lax.Precision.HIGHEST


def _round_up(v, m):
    return -(-v // m) * m


def _hint(v, m):
    """Alignment hint for dynamic offsets; static (Python int) offsets need none."""
    return v if isinstance(v, int) else pl.multiple_of(v, m)


def _pick_block_rows(N, H, W, C_in, C_out_p, in_isz, out_isz, *,
                     budget_bytes=16 * 1024 * 1024, min_steps=4):
    """Number of input rows `th` handled per grid step.

    Constraints:
      * th divides H,
      * the (1, C_in, th*W) / (1, C_out, th*4W) blocks satisfy the (8, 128)
        BlockSpec rule: th*W % 128 == 0, or th == H (full-dim exemption),
      * the per-step working set (double-buffered in/out blocks + f32
        contraction scratch + constants) fits `budget_bytes`,
      * prefer >= `min_steps` grid steps so the BlockSpec pipeline overlaps
        DMA with compute and both v7x TensorCores get work.
    """
    cands = [t for t in range(1, H + 1)
             if H % t == 0 and ((t * W) % 128 == 0 or t == H)]

    def step_bytes(t):
        L = t * W
        return (2 * C_in * L * in_isz             # input block, double-buffered
                + 2 * 4 * C_out_p * L * out_isz   # output block, double-buffered
                + 4 * C_out_p * L * 4             # f32 contraction scratch
                + 4 * 1024 * 1024)                # weights + scatter tiles + slack

    fitting = [t for t in cands if step_bytes(t) <= budget_bytes]
    if not fitting:
        # Smallest legal block; may exceed budget.
        # TODO(synk): if even the smallest legal block overflows VMEM, tile the
        # spatial W axis (or the channel axis) as well.
        fitting = [min(cands)]
    stepping = [t for t in fitting if N * (H // t) >= min_steps]
    pool = stepping if stepping else fitting
    return max(pool)


def _row_window_tiles(W, g):
    """Per-tap scatter tiles T[t] of shape (g, 4g).

    A window of g input lanes (= g // W whole rows) maps to its 4g output lanes:
        T[2*ki+kj][r*W + j, r*4W + ki*2W + 2j + kj] = 1
    The pattern is identical for every window, so one small constant is reused
    for the whole image (no O(W^2) scatter matrices)."""
    p = np.arange(g)
    r, j = p // W, p % W
    tiles = np.zeros((4, g, 4 * g), np.float32)
    for t, (ki, kj) in enumerate(((0, 0), (0, 1), (1, 0), (1, 1))):
        tiles[t, p, r * 4 * W + ki * 2 * W + 2 * j + kj] = 1.0
    return jnp.asarray(tiles)


def _col_window_tiles():
    """Per-kj column-interleave tiles S[kj] of shape (128, 256):
        S[kj][p, 2p + kj] = 1    (used when W is a multiple of 128)."""
    p = np.arange(128)
    tiles = np.zeros((2, 128, 256), np.float32)
    for kj in range(2):
        tiles[kj, p, 2 * p + kj] = 1.0
    return jnp.asarray(tiles)


def _make_row_window_kernel(th, W, g, C_out, C_out_p, out_dtype):
    """Scatter windows made of whole input rows (used when W divides 128,
    or per-row fallback with g == W)."""
    L = th * W
    assert L % g == 0
    n_win = L // g
    four_g = 4 * g

    def kernel(x_ref, w_ref, t_ref, b_ref, o_ref, r_ref):
        # x_ref: (1, C_in, L)        w_ref: (4*C_out_p, C_in)
        # t_ref: (4, g, 4g)          b_ref: (C_out_p, 1)
        # o_ref: (1, C_out, 4L)      r_ref: (4*C_out_p, L) f32 scratch
        # 1) one lane-dense channel contraction for all 4 taps / all rows.
        r_ref[...] = jnp.dot(w_ref[...], x_ref[0].astype(jnp.float32),
                             preferred_element_type=jnp.float32,
                             precision=_HIGHEST)
        # 2) bias broadcast hoisted out of the window loop.
        bias = jnp.broadcast_to(b_ref[...], (C_out_p, four_g))

        # 3) fused pixel-shuffle scatter: one (C_out, 4g) aligned store / window.
        def window(src, dst):
            src = _hint(src, g)
            dst = _hint(dst, four_g)
            acc = bias
            for t in range(4):                       # static 4-tap loop
                acc = acc + jnp.dot(
                    r_ref[pl.ds(t * C_out_p, C_out_p), pl.ds(src, g)],
                    t_ref[t],
                    preferred_element_type=jnp.float32,
                    precision=_HIGHEST)
            out_rows = acc if C_out == C_out_p else acc[:C_out, :]
            o_ref[0, :, pl.ds(dst, four_g)] = out_rows.astype(out_dtype)

        if n_win <= 8:                               # short: keep it unrolled
            for wi in range(n_win):
                window(wi * g, wi * four_g)
        else:                                        # long: bound live ranges
            def body(wi, carry):
                window(wi * g, wi * four_g)
                return carry
            jax.lax.fori_loop(0, n_win, body, 0)

    return kernel


def _make_col_window_kernel(th, W, C_out, C_out_p, out_dtype):
    """Scatter windows of 128 columns within a row (used when W % 128 == 0)."""
    assert W % 128 == 0
    cpr = W // 128                   # 128-lane column windows per input row
    n_win = th * cpr

    def kernel(x_ref, w_ref, s_ref, b_ref, o_ref, r_ref):
        r_ref[...] = jnp.dot(w_ref[...], x_ref[0].astype(jnp.float32),
                             preferred_element_type=jnp.float32,
                             precision=_HIGHEST)
        bias = jnp.broadcast_to(b_ref[...], (C_out_p, 256))

        def window(wi):
            ii = wi // cpr
            jo = (wi % cpr) * 128
            src = _hint(ii * W + jo, 128)
            for ki in range(2):
                acc = bias
                for kj in range(2):
                    acc = acc + jnp.dot(
                        r_ref[pl.ds((2 * ki + kj) * C_out_p, C_out_p),
                              pl.ds(src, 128)],
                        s_ref[kj],
                        preferred_element_type=jnp.float32,
                        precision=_HIGHEST)
                dst = _hint(ii * 4 * W + ki * 2 * W + 2 * jo, 256)
                out_rows = acc if C_out == C_out_p else acc[:C_out, :]
                o_ref[0, :, pl.ds(dst, 256)] = out_rows.astype(out_dtype)

        if n_win <= 8:
            for wi in range(n_win):
                window(wi)
        else:
            def body(wi, carry):
                window(wi)
                return carry
            jax.lax.fori_loop(0, n_win, body, 0)

    return kernel


def deconv_block_pallas(x, weight, bias):
    """ConvTranspose2d(kernel_size=2, stride=2, padding=0) forward.

    x:      (N, C_in, H, W)      NCHW (PyTorch layout)
    weight: (C_in, C_out, 2, 2)  PyTorch ConvTranspose2d weight layout
    bias:   (C_out,)
    returns (N, C_out, 2H, 2W)   NCHW
    """
    N, C_in, H, W = x.shape
    assert weight.shape[0] == C_in and weight.shape[2:] == (2, 2)
    C_out = weight.shape[1]
    out_dtype = x.dtype
    in_isz = jnp.dtype(x.dtype).itemsize
    out_isz = jnp.dtype(out_dtype).itemsize

    # Sublane-aligned per-tap row blocks in the fused contraction result.
    C_out_p = _round_up(C_out, 8)
    # TODO(synk): for very small C_in/C_out a VPU broadcast-FMA over C_in would
    # free the MXU entirely; the kernel is HBM-bound in that regime anyway.

    # ---- tiny parameter repacks (negligible traffic) ----
    # fused tap-major weight: w_all[t*C_out_p + co, ci] = weight[ci, co, ki, kj],
    # t = 2*ki + kj  ->  ONE (4*C_out_p, C_in) x (C_in, th*W) matmul per block.
    wt = jnp.transpose(weight, (2, 3, 1, 0)).reshape(4, C_out, C_in)
    if C_out_p != C_out:
        wt = jnp.pad(wt, ((0, 0), (0, C_out_p - C_out), (0, 0)))
    w_all = wt.reshape(4 * C_out_p, C_in).astype(jnp.float32)

    b_pad = bias if C_out_p == C_out else jnp.pad(bias, (0, C_out_p - C_out))
    b2 = b_pad.reshape(C_out_p, 1).astype(jnp.float32)

    # x / out stay in native NCHW; these reshapes are free (contiguous).
    x_flat = x.reshape(N, C_in, H * W)

    th = _pick_block_rows(N, H, W, C_in, C_out_p, in_isz, out_isz)
    L = th * W
    grid = (N, H // th)

    # ---- choose the pixel-shuffle scatter scheme ----
    if W <= 128 and 128 % W == 0 and L % 128 == 0:
        mode, g = "row", 128              # whole-row windows, 512-wide stores
    elif W % 128 == 0:
        mode, g = "col", 128              # within-row windows, 256-wide stores
    else:
        mode, g = "row", W                # per-row fallback
        # TODO(synk): stores are 4*W wide here; if 4*W % 128 != 0 they lower to
        # masked partial stores (rare for UNETR shapes, W is a power of two).

    if mode == "row":
        tiles = _row_window_tiles(W, g)
        kernel = _make_row_window_kernel(th, W, g, C_out, C_out_p, out_dtype)
        tile_spec = pl.BlockSpec((4, g, 4 * g), lambda n, hb: (0, 0, 0))
    else:
        tiles = _col_window_tiles()
        kernel = _make_col_window_kernel(th, W, C_out, C_out_p, out_dtype)
        tile_spec = pl.BlockSpec((2, 128, 256), lambda n, hb: (0, 0, 0))

    cost = pl.CostEstimate(
        flops=(2 * N * H * W * C_in * 4 * C_out          # channel contraction
               + 2 * N * H * W * 4 * C_out_p * 4 * g),   # scatter matmuls
        transcendentals=0,
        bytes_accessed=N * (C_in * H * W * in_isz + 4 * C_out * H * W * out_isz),
    )

    out_flat = pl.pallas_call(
        kernel,
        out_shape=jax.ShapeDtypeStruct((N, C_out, 4 * H * W), out_dtype),
        grid_spec=pltpu.PrefetchScalarGridSpec(
            num_scalar_prefetch=0,
            grid=grid,
            in_specs=[
                pl.BlockSpec((1, C_in, L), lambda n, hb: (n, 0, hb)),
                pl.BlockSpec((4 * C_out_p, C_in), lambda n, hb: (0, 0)),
                tile_spec,
                pl.BlockSpec((C_out_p, 1), lambda n, hb: (0, 0)),
            ],
            out_specs=pl.BlockSpec((1, C_out, 4 * L), lambda n, hb: (n, 0, hb)),
            scratch_shapes=[pltpu.VMEM((4 * C_out_p, L), jnp.float32)],
        ),
        compiler_params=pltpu.CompilerParams(
            dimension_semantics=("parallel", "parallel"),
            vmem_limit_bytes=40 * 1024 * 1024,
        ),
        cost_estimate=cost,
    )(x_flat, w_all, tiles, b2)

    # Free reshape: lane index i*4W + ki*2W + 2j + kj == (2i+ki)*2W + (2j+kj),
    # i.e. out_flat is already the NCHW (N, C_out, 2H, 2W) buffer.
    return out_flat.reshape(N, C_out, 2 * H, 2 * W)


def _reference_deconv(x, weight, bias):
    # f32-exact reference (HIGHEST so the MXU does not round the contraction).
    N, C_in, H, W = x.shape
    C_out = weight.shape[1]
    ref = jnp.einsum("ncij,cokl->noikjl", x, weight, precision=_HIGHEST)
    ref = ref.reshape(N, C_out, 2 * H, 2 * W)
    return ref + bias[None, :, None, None]


if __name__ == "__main__":
    # small shapes consistent with the module
    N, C_in, C_out, H, W = 2, 4, 8, 16, 16

    key = jax.random.PRNGKey(0)
    kx, kw, kb = jax.random.split(key, 3)

    x = jax.random.normal(kx, (N, C_in, H, W), dtype=jnp.float32)
    # PyTorch ConvTranspose2d weight shape: (C_in, C_out, kH, kW)
    fan_in = C_in * 2 * 2
    bound = 1.0 / (fan_in ** 0.5)
    weight = jax.random.uniform(kw, (C_in, C_out, 2, 2), jnp.float32, -bound, bound)
    bias = jax.random.uniform(kb, (C_out,), jnp.float32, -bound, bound)

    out = jax.jit(deconv_block_pallas)(x, weight, bias)
    out = jax.block_until_ready(out)

    ref = _reference_deconv(x, weight, bias)
    assert out.shape == (N, C_out, 2 * H, 2 * W)
    err = float(jnp.max(jnp.abs(out - ref)))
    assert jnp.allclose(out, ref, atol=2e-5, rtol=2e-5), err

    print("KERNEL_OK")
</pallas_src>

<mosaic_0001>
module attributes {stable_mosaic.version = 11 : i64} {
  func.func @kernel(%arg0: i32, %arg1: i32, %arg2: memref<1x4x128xf32, #tpu.memory_space<vmem>>, %arg3: memref<32x4xf32, #tpu.memory_space<vmem>>, %arg4: memref<4x128x512xf32, #tpu.memory_space<vmem>>, %arg5: memref<8x1xf32, #tpu.memory_space<vmem>>, %arg6: memref<1x8x512xf32, #tpu.memory_space<vmem>>, %arg7: memref<32x128xf32, #tpu.memory_space<vmem>>) attributes {dimension_semantics = [#tpu.dimension_semantics<parallel>, #tpu.dimension_semantics<parallel>], iteration_bounds = array<i64: 2, 2>, scalar_prefetch = 0 : i64, scratch_operands = 1 : i64, tpu.core_type = #tpu.core_type<tc>, window_params = [{transform_indices = @transform_0, window_bounds = array<i64: 1, 4, 128>}, {pipeline_mode = #tpu.pipeline_mode<synchronous>, transform_indices = @transform_1, window_bounds = array<i64: 32, 4>}, {pipeline_mode = #tpu.pipeline_mode<synchronous>, transform_indices = @transform_2, window_bounds = array<i64: 4, 128, 512>}, {pipeline_mode = #tpu.pipeline_mode<synchronous>, transform_indices = @transform_3, window_bounds = array<i64: 8, 1>}, {transform_indices = @transform_4, window_bounds = array<i64: 1, 8, 512>}]} {
    %c0 = arith.constant 0 : index
    %c0_0 = arith.constant 0 : index
    %0 = vector.load %arg3[%c0, %c0_0] : memref<32x4xf32, #tpu.memory_space<vmem>>, vector<32x4xf32>
    %c0_1 = arith.constant 0 : index
    %c0_2 = arith.constant 0 : index
    %c0_3 = arith.constant 0 : index
    %1 = vector.load %arg2[%c0_1, %c0_2, %c0_3] : memref<1x4x128xf32, #tpu.memory_space<vmem>>, vector<1x4x128xf32>
    %2 = vector.shape_cast %1 : vector<1x4x128xf32> to vector<4x128xf32>
    %cst = arith.constant dense<0.000000e+00> : vector<32x128xf32>
    %3 = tpu.matmul %0, %2, %cst {dimension_numbers = #tpu.dot_dimension_numbers<[1], [0], [0], [1], [0, 0, 1, 1], [], []>, precision = #tpu.contract_precision<fp32>} : vector<32x4xf32>, vector<4x128xf32>, vector<32x128xf32> -> vector<32x128xf32>
    %c0_4 = arith.constant 0 : index
    %c0_5 = arith.constant 0 : index
    %4 = vector.load %arg7[%c0_4, %c0_5] : memref<32x128xf32, #tpu.memory_space<vmem>>, vector<32x128xf32>
    tpu.vector_store %arg7[%c0_4, %c0_5], %3 {strides = array<i32>} : memref<32x128xf32, #tpu.memory_space<vmem>>, vector<32x128xf32>,
    %c0_6 = arith.constant 0 : index
    %c0_7 = arith.constant 0 : index
    %5 = vector.load %arg5[%c0_6, %c0_7] : memref<8x1xf32, #tpu.memory_space<vmem>>, vector<8x1xf32>
    %6 = vector.shape_cast %5 : vector<8x1xf32> to vector<8x1xf32>
    %7 = vector.broadcast %6 : vector<8x1xf32> to vector<8x512xf32>
    %c0_8 = arith.constant 0 : index
    %c0_9 = arith.constant 0 : index
    %8 = vector.load %arg7[%c0_8, %c0_9] : memref<32x128xf32, #tpu.memory_space<vmem>>, vector<8x128xf32>
    %c0_10 = arith.constant 0 : index
    %c0_11 = arith.constant 0 : index
    %c0_12 = arith.constant 0 : index
    %9 = vector.load %arg4[%c0_10, %c0_11, %c0_12] : memref<4x128x512xf32, #tpu.memory_space<vmem>>, vector<1x128x512xf32>
    %10 = vector.shape_cast %9 : vector<1x128x512xf32> to vector<128x512xf32>
    %cst_13 = arith.constant dense<0.000000e+00> : vector<8x512xf32>
    %11 = tpu.matmul %8, %10, %cst_13 {dimension_numbers = #tpu.dot_dimension_numbers<[1], [0], [0], [1], [0, 0, 1, 1], [], []>, precision = #tpu.contract_precision<fp32>} : vector<8x128xf32>, vector<128x512xf32>, vector<8x512xf32> -> vector<8x512xf32>
    %12 = arith.addf %7, %11 : vector<8x512xf32>
    %c8 = arith.constant 8 : index
    %c0_14 = arith.constant 0 : index
    %13 = vector.load %arg7[%c8, %c0_14] : memref<32x128xf32, #tpu.memory_space<vmem>>, vector<8x128xf32>
    %c1 = arith.constant 1 : index
    %c0_15 = arith.constant 0 : index
    %c0_16 = arith.constant 0 : index
    %14 = vector.load %arg4[%c1, %c0_15, %c0_16] : memref<4x128x512xf32, #tpu.memory_space<vmem>>, vector<1x128x512xf32>
    %15 = vector.shape_cast %14 : vector<1x128x512xf32> to vector<128x512xf32>
    %cst_17 = arith.constant dense<0.000000e+00> : vector<8x512xf32>
    %16 = tpu.matmul %13, %15, %cst_17 {dimension_numbers = #tpu.dot_dimension_numbers<[1], [0], [0], [1], [0, 0, 1, 1], [], []>, precision = #tpu.contract_precision<fp32>} : vector<8x128xf32>, vector<128x512xf32>, vector<8x512xf32> -> vector<8x512xf32>
    %17 = arith.addf %12, %16 : vector<8x512xf32>
    %c16 = arith.constant 16 : index
    %c0_18 = arith.constant 0 : index
    %18 = vector.load %arg7[%c16, %c0_18] : memref<32x128xf32, #tpu.memory_space<vmem>>, vector<8x128xf32>
    %c2 = arith.constant 2 : index
    %c0_19 = arith.constant 0 : index
    %c0_20 = arith.constant 0 : index
    %19 = vector.load %arg4[%c2, %c0_19, %c0_20] : memref<4x128x512xf32, #tpu.memory_space<vmem>>, vector<1x128x512xf32>
    %20 = vector.shape_cast %19 : vector<1x128x512xf32> to vector<128x512xf32>
    %cst_21 = arith.constant dense<0.000000e+00> : vector<8x512xf32>
    %21 = tpu.matmul %18, %20, %cst_21 {dimension_numbers = #tpu.dot_dimension_numbers<[1], [0], [0], [1], [0, 0, 1, 1], [], []>, precision = #tpu.contract_precision<fp32>} : vector<8x128xf32>, vector<128x512xf32>, vector<8x512xf32> -> vector<8x512xf32>
    %22 = arith.addf %17, %21 : vector<8x512xf32>
    %c24 = arith.constant 24 : index
    %c0_22 = arith.constant 0 : index
    %23 = vector.load %arg7[%c24, %c0_22] : memref<32x128xf32, #tpu.memory_space<vmem>>, vector<8x128xf32>
    %c3 = arith.constant 3 : index
    %c0_23 = arith.constant 0 : index
    %c0_24 = arith.constant 0 : index
    %24 = vector.load %arg4[%c3, %c0_23, %c0_24] : memref<4x128x512xf32, #tpu.memory_space<vmem>>, vector<1x128x512xf32>
    %25 = vector.shape_cast %24 : vector<1x128x512xf32> to vector<128x512xf32>
    %cst_25 = arith.constant dense<0.000000e+00> : vector<8x512xf32>
    %26 = tpu.matmul %23, %25, %cst_25 {dimension_numbers = #tpu.dot_dimension_numbers<[1], [0], [0], [1], [0, 0, 1, 1], [], []>, precision = #tpu.contract_precision<fp32>} : vector<8x128xf32>, vector<128x512xf32>, vector<8x512xf32> -> vector<8x512xf32>
    %27 = arith.addf %22, %26 : vector<8x512xf32>
    %c0_26 = arith.constant 0 : index
    %c0_27 = arith.constant 0 : index
    %c0_28 = arith.constant 0 : index
    %28 = vector.load %arg6[%c0_26, %c0_27, %c0_28] : memref<1x8x512xf32, #tpu.memory_space<vmem>>, vector<1x8x512xf32>
    %29 = vector.shape_cast %28 : vector<1x8x512xf32> to vector<8x512xf32>
    %30 = vector.shape_cast %27 : vector<8x512xf32> to vector<1x8x512xf32>
    tpu.vector_store %arg6[%c0_26, %c0_27, %c0_28], %30 {strides = array<i32>} : memref<1x8x512xf32, #tpu.memory_space<vmem>>, vector<1x8x512xf32>,
    return
  }
  func.func @transform_0(%arg0: i32, %arg1: i32) -> (i32, i32, i32) {
    %c0_i32 = arith.constant 0 : i32
    %c0_i32_0 = arith.constant 0 : i32
    return %arg0, %c0_i32, %arg1 : i32, i32, i32
  }
  func.func @transform_1(%arg0: i32, %arg1: i32) -> (i32, i32) {
    %c0_i32 = arith.constant 0 : i32
    %c0_i32_0 = arith.constant 0 : i32
    %c0_i32_1 = arith.constant 0 : i32
    return %c0_i32, %c0_i32_0 : i32, i32
  }
  func.func @transform_2(%arg0: i32, %arg1: i32) -> (i32, i32, i32) {
    %c0_i32 = arith.constant 0 : i32
    %c0_i32_0 = arith.constant 0 : i32
    %c0_i32_1 = arith.constant 0 : i32
    %c0_i32_2 = arith.constant 0 : i32
    return %c0_i32, %c0_i32_0, %c0_i32_1 : i32, i32, i32
  }
  func.func @transform_3(%arg0: i32, %arg1: i32) -> (i32, i32) {
    %c0_i32 = arith.constant 0 : i32
    %c0_i32_0 = arith.constant 0 : i32
    %c0_i32_1 = arith.constant 0 : i32
    return %c0_i32, %c0_i32_0 : i32, i32
  }
  func.func @transform_4(%arg0: i32, %arg1: i32) -> (i32, i32, i32) {
    %c0_i32 = arith.constant 0 : i32
    %c0_i32_0 = arith.constant 0 : i32
    return %arg0, %c0_i32, %arg1 : i32, i32, i32
  }
}

</mosaic_0001>

<llo_original>
// kernel: deconv_block_pallas.1
$region0: #{deconv_block_pallas.1}
  #allocation0 [shape = 'u32[]', space=smem, size = 0x4, offset = 0x4, fixed_abs, tag = 'smem constant byte address 0x4 - core index']
  #allocation1 [shape = 'u32[72,128]{1,0:T(1,128)}', space=vmem, size = 0x9000, scoped, tag = 'internal scratch']
  #allocation2 [shape = 'f32[32,128]{1,0:T(8,128)}', space=vmem, size = 0x4000, scoped, tag = 'scratch operand']
  %s0 = inlined_call_operand.vmem [shape: f32[2,4,256], index: 0, kind: input, shape index: {}]
  %s1 = inlined_call_operand.vmem [shape: f32[32,4], index: 1, kind: input, shape index: {}]
  %s2 = inlined_call_operand.hbm [shape: f32[4,128,512], index: 2, kind: input, shape index: {}]
  %s3 = inlined_call_operand.vmem [shape: f32[8,1], index: 3, kind: input, shape index: {}]
  %s4 = inlined_call_operand.vmem [shape: f32[2,8,1024], index: 4, kind: output, shape index: {}]
  %s5 = sld [smem:[#allocation0]]
  $region53: #{deconv_block_pallas.1} parent=0
    _
  %s7 = ssub.s32 1, %s5
  %s8 = scalar_select 0, %s7, %s5
  $region1: #{deconv_block_pallas.1} parent=0
    #allocation3 [shape = 'u8[1048576]{0}', space=vmem, size = 0x100000, scoped, tag = 'input window, operand 2, single buffered']
    #allocation4 [shape = 's32[2]{0}', space=sflag, size = 0x8, scoped, tag = 'scoped memory for deconv_block_pallas.1']
    %9 = vsyncpa [#allocation4], 0
    loop: start=0, step=1, limit=6
    $region2: #{deconv_block_pallas.1} parent=1 // loop_pre_header
      _
    $region3: #{deconv_block_pallas.1} parent=1 // loop_header
      %s11 = sphi 0, %s15
      %p12 = scmp.ge.s32.totalorder %s11, 6
      %s18 = sphi 0, %s30
      %s19 = sphi 0, %s26
      %s20 = sphi 0, %s18
      %s21 = sphi 0, %s19
      %s22 = sphi 0, %s20
      %s23 = sphi 0, %s21
      %s35 = sphi 0, %s37
      %s38 = sphi 0, %s35
      %s39 = sphi 0, %s38
      %s55 = sphi 0, %s39
      %s59 = sphi 0, %s59
      %s61 = sphi 0, %s59
      %s62 = sphi 0, %s61
      %s76 = sphi 0, %s62
      %s80 = sphi 0, %s80
      %s82 = sphi 0, %s80
      %s83 = sphi 0, %s82
      %s97 = sphi 0, %s83
      %s101 = sphi 0, %s101
      %s103 = sphi 0, %s101
      %s104 = sphi 0, %s103
      %s118 = sphi 0, %s104
      %s126 = sphi 0, %s128
      %s129 = sphi 0, %s126
      %s130 = sphi 0, %s129
      %s146 = sphi 0, %s130
    $region4: #{deconv_block_pallas.1} parent=1 // loop_header_branch
      %14 = sbr.rel (%p12) target = $region8
    $region5: #{deconv_block_pallas.1} parent=1 // loop_body
      %s16 = ssub.s32 %s11, 1
      %s17 = ssub.s32 %s11, 2
      %s24 = sadd.s32 1, %s19
      %p25 = scmp.ge.s32.totalorder %s24, 2
      %s26 = scalar_select %p25, 0, %s24
      %s27 = sadd.s32 1, %s18
      %s28 = scalar_select %p25, %s27, %s18
      %p29 = scmp.ge.s32.totalorder %s28, 2
      %s30 = scalar_select %p29, 0, %s28
      %s31 = ssub.s32 %s18, %s30
      %s32 = ssub.s32 %s19, %s26
      %s33 = sor.u32 %s31, %s32
      %p34 = scmp.eq.s32.totalorder %s33, 0
      %s36 = sadd.s32 %s35, 1
      %s37 = scalar_select %p34, %s35, %s36
      %p40 = pneg %p34
      %p41 = scmp.eq.s32.totalorder %s11, 3
      %p42 = por %p40, %p41
      %p43 = scmp.ne.s32.totalorder %s35, %s38
      %p44 = scmp.eq.s32.totalorder %s11, 0
      %p45 = por %p43, %p44
      %p46 = scmp.ne.s32.totalorder %s35, %s38
      %p47 = scmp.eq.s32.totalorder %s16, 3
      %p48 = por %p46, %p47
      %p49 = scmp.ne.s32.totalorder %s38, %s39
      %p50 = scmp.eq.s32.totalorder %s16, 0
      %p51 = por %p49, %p50
      %p52 = scmp.ne.s32.totalorder %s38, %s39
      %p53 = scmp.eq.s32.totalorder %s17, 3
      %p54 = por %p52, %p53
      %p56 = scmp.ne.s32.totalorder %s39, %s55
      %p57 = scmp.eq.s32.totalorder %s17, 0
      %p58 = por %p56, %p57
      %s60 = sadd.s32 %s59, 1
      %p63 = scmp.eq.s32.totalorder %s11, 3
      %p64 = scmp.ne.s32.totalorder %s59, %s61
      %p65 = scmp.eq.s32.totalorder %s11, 0
      %p66 = por %p64, %p65
      %p67 = scmp.ne.s32.totalorder %s59, %s61
      %p68 = scmp.eq.s32.totalorder %s16, 3
      %p69 = por %p67, %p68
      %p70 = scmp.ne.s32.totalorder %s61, %s62
      %p71 = scmp.eq.s32.totalorder %s16, 0
      %p72 = por %p70, %p71
      %p73 = scmp.ne.s32.totalorder %s61, %s62
      %p74 = scmp.eq.s32.totalorder %s17, 3
      %p75 = por %p73, %p74
      %p77 = scmp.ne.s32.totalorder %s62, %s76
      %p78 = scmp.eq.s32.totalorder %s17, 0
      %p79 = por %p77, %p78
      %s81 = sadd.s32 %s80, 1
      %p84 = scmp.eq.s32.totalorder %s11, 3
      %p85 = scmp.ne.s32.totalorder %s80, %s82
      %p86 = scmp.eq.s32.totalorder %s11, 0
      %p87 = por %p85, %p86
      %p88 = scmp.ne.s32.totalorder %s80, %s82
      %p89 = scmp.eq.s32.totalorder %s16, 3
      %p90 = por %p88, %p89
      %p91 = scmp.ne.s32.totalorder %s82, %s83
      %p92 = scmp.eq.s32.totalorder %s16, 0
      %p93 = por %p91, %p92
      %p94 = scmp.ne.s32.totalorder %s82, %s83
      %p95 = scmp.eq.s32.totalorder %s17, 3
      %p96 = por %p94, %p95
      %p98 = scmp.ne.s32.totalorder %s83, %s97
      %p99 = scmp.eq.s32.totalorder %s17, 0
      %p100 = por %p98, %p99
      %s102 = sadd.s32 %s101, 1
      %p105 = scmp.eq.s32.totalorder %s11, 3
      %p106 = scmp.ne.s32.totalorder %s101, %s103
      %p107 = scmp.eq.s32.totalorder %s11, 0
      %p108 = por %p106, %p107
      %p109 = scmp.ne.s32.totalorder %s101, %s103
      %p110 = scmp.eq.s32.totalorder %s16, 3
      %p111 = por %p109, %p110
      %p112 = scmp.ne.s32.totalorder %s103, %s104
      %p113 = scmp.eq.s32.totalorder %s16, 0
      %p114 = por %p112, %p113
      %p115 = scmp.ne.s32.totalorder %s103, %s104
      %p116 = scmp.eq.s32.totalorder %s17, 3
      %p117 = por %p115, %p116
      %p119 = scmp.ne.s32.totalorder %s104, %s118
      %p120 = scmp.eq.s32.totalorder %s17, 0
      %p121 = por %p119, %p120
      %s122 = ssub.s32 %s18, %s30
      %s123 = ssub.s32 %s19, %s26
      %s124 = sor.u32 %s122, %s123
      %p125 = scmp.eq.s32.totalorder %s124, 0
      %s127 = sadd.s32 %s126, 1
      %s128 = scalar_select %p125, %s126, %s127
      %p131 = pneg %p125
      %p132 = scmp.eq.s32.totalorder %s11, 3
      %p133 = por %p131, %p132
      %p134 = scmp.ne.s32.totalorder %s126, %s129
      %p135 = scmp.eq.s32.totalorder %s11, 0
      %p136 = por %p134, %p135
      %p137 = scmp.ne.s32.totalorder %s126, %s129
      %p138 = scmp.eq.s32.totalorder %s16, 3
      %p139 = por %p137, %p138
      %p140 = scmp.ne.s32.totalorder %s129, %s130
      %p141 = scmp.eq.s32.totalorder %s16, 0
      %p142 = por %p140, %p141
      %p143 = scmp.ne.s32.totalorder %s129, %s130
      %p144 = scmp.eq.s32.totalorder %s17, 3
      %p145 = por %p143, %p144
      %p147 = scmp.ne.s32.totalorder %s130, %s146
      %p148 = scmp.eq.s32.totalorder %s17, 0
      %p149 = por %p147, %p148
      %p150 = scmp.le.s32.totalorder 1, %s11
      %p151 = scmp.lt.s32.totalorder %s11, 5
      %p152 = pnand %p150, %p151
      %p153 = pneg %p152
      // Predicated region
      $region9: #{deconv_block_pallas.1} parent=5 // pred_check
        _
      $region10: #{deconv_block_pallas.1} parent=5 // pred_check_branch
        %155 = sbr.rel (%p152) target = $region12
      $region11: #{deconv_block_pallas.1} parent=5 // pred_region
        %s156 = ssub.s32 %s11, 1
        // Predicated region
        $region13: #{deconv_block_pallas.1} parent=11 // pred_check
          %p157 = pneg %p72
        $region14: #{deconv_block_pallas.1} parent=11 // pred_check_branch
          %159 = sbr.rel (%p157) target = $region16
        $region15: #{deconv_block_pallas.1} parent=11 // pred_region
          _
        $region16: #{deconv_block_pallas.1} parent=11 // pred_fallthru
          _
        // Predicated region
        $region17: #{deconv_block_pallas.1} parent=11 // pred_check
          %p160 = pneg %p93
        $region18: #{deconv_block_pallas.1} parent=11 // pred_check_branch
          %162 = sbr.rel (%p160) target = $region20
        $region19: #{deconv_block_pallas.1} parent=11 // pred_region
          %164 = vsyncadd [#allocation4], 0
          %s165 = sshll.u32 %s2, 4
          %s166 = int_to_ptr.hbm [resolvable:$true] %s165
          %s167 = sshll.u32 [#allocation3], 4
          %s168 = int_to_ptr.vmem [resolvable:$true] %s167
          %173 = dma.hbm_to_vmem [thread:$0]  %s166, 32768, %s168, [#allocation4], 512, 512, 32
        $region20: #{deconv_block_pallas.1} parent=11 // pred_fallthru
          _
        // Predicated region
        $region21: #{deconv_block_pallas.1} parent=11 // pred_check
          %p174 = pneg %p114
        $region22: #{deconv_block_pallas.1} parent=11 // pred_check_branch
          %176 = sbr.rel (%p174) target = $region24
        $region23: #{deconv_block_pallas.1} parent=11 // pred_region
          _
        $region24: #{deconv_block_pallas.1} parent=11 // pred_fallthru
          _
      $region12: #{deconv_block_pallas.1} parent=5 // pred_fallthru
        _
      %p177 = scmp.lt.s32.totalorder %s11, 4
      // Predicated region
      $region25: #{deconv_block_pallas.1} parent=5 // pred_check
        %p178 = pneg %p177
      $region26: #{deconv_block_pallas.1} parent=5 // pred_check_branch
        %180 = sbr.rel (%p178) target = $region28
      $region27: #{deconv_block_pallas.1} parent=5 // pred_region
        // Predicated region
        $region29: #{deconv_block_pallas.1} parent=27 // pred_check
          %p181 = pneg %p45
        $region30: #{deconv_block_pallas.1} parent=27 // pred_check_branch
          %183 = sbr.rel (%p181) target = $region32
        $region31: #{deconv_block_pallas.1} parent=27 // pred_region
          %p184 = scmp.lt.s32.totalorder %s18, 1
          %s185 = scalar_select %p184, %s18, 1
          %p186 = scmp.lt.s32.totalorder %s19, 1
          %s187 = scalar_select %p186, %s19, 1
          %s188 = smul.addr %s185, 2
          %s189 = sadd.s32 %s187, %s188
          %s190 = smul.addr %s189, 4
          %s191 = scalar_lea.vmem %s0, %s190
        $region32: #{deconv_block_pallas.1} parent=27 // pred_fallthru
          _
      $region28: #{deconv_block_pallas.1} parent=5 // pred_fallthru
        _
      %p192 = scmp.le.s32.totalorder 1, %s11
      %p193 = scmp.lt.s32.totalorder %s11, 5
      %p194 = pnand %p192, %p193
      %p195 = pneg %p194
      // Predicated region
      $region33: #{deconv_block_pallas.1} parent=5 // pred_check
        _
      $region34: #{deconv_block_pallas.1} parent=5 // pred_check_branch
        %197 = sbr.rel (%p194) target = $region36
      $region35: #{deconv_block_pallas.1} parent=5 // pred_region
        %s198 = ssub.s32 %s11, 1
        // Predicated region
        $region37: #{deconv_block_pallas.1} parent=35 // pred_check
          %p199 = pneg %p93
        $region38: #{deconv_block_pallas.1} parent=35 // pred_check_branch
          %201 = sbr.rel (%p199) target = $region40
        $region39: #{deconv_block_pallas.1} parent=35 // pred_region
          %203 = dma.done [#allocation4], 32768
        $region40: #{deconv_block_pallas.1} parent=35 // pred_fallthru
          _
        %p204 = scmp.lt.s32.totalorder %s20, 1
        %s205 = scalar_select %p204, %s20, 1
        %p206 = scmp.lt.s32.totalorder %s21, 1
        %s207 = scalar_select %p206, %s21, 1
        %s208 = smul.addr %s205, 2
        %s209 = sadd.s32 %s207, %s208
        %s210 = smul.addr %s209, 4
        %s211 = scalar_lea.vmem %s0, %s210
        %p212 = pneg %p51
        %p213 = pneg %p48
        %p214 = pneg %p72
        %p215 = pneg %p69
        %p216 = pneg %p93
        %p217 = pneg %p90
        %p218 = pneg %p114
        %p219 = pneg %p111
        %p220 = pneg %p142
        %p221 = pneg %p139
        %s222 = smul.u32 4, %s21
        %p223 = scmp.lt.s32.totalorder %s20, 1
        %s224 = scalar_select %p223, %s20, 1
        %p225 = scmp.lt.s32.totalorder %s222, 7
        %s226 = scalar_select %p225, %s222, 7
        %s227 = smul.addr %s224, 8
        %s228 = sadd.s32 %s226, %s227
        %s229 = smul.addr %s228, 8
        %s230 = scalar_lea.vmem %s4, %s229
        %p231 = scmp.lt.s32.totalorder %s20, 1
        %s232 = scalar_select %p231, %s20, 1
        %p233 = scmp.lt.s32.totalorder %s21, 1
        %s234 = scalar_select %p233, %s21, 1
        %s235 = smul.addr %s232, 2
        %s236 = sadd.s32 %s234, %s235
        %s237 = smul.addr %s236, 4
        %s238 = scalar_lea.vmem %s0, %s237
        %s239 = smul.u32 4, %s21
        %p240 = scmp.lt.s32.totalorder %s20, 1
        %s241 = scalar_select %p240, %s20, 1
        %p242 = scmp.lt.s32.totalorder %s239, 7
        %s243 = scalar_select %p242, %s239, 7
        %s244 = smul.addr %s241, 8
        %s245 = sadd.s32 %s243, %s244
        %s246 = smul.addr %s245, 8
        %s247 = scalar_lea.vmem %s4, %s246
        %s248 = smul.u32 4, %s21
        %v249 = vld [vmem:[%s1] sm:$0xff]
        %v250 = vld [vmem:[%s1 + $0x8] sm:$0xff]
        %v251 = vld [vmem:[%s1 + $0x10] sm:$0xff]
        %v252 = vld [vmem:[%s1 + $0x18] sm:$0xff]
        %v253 = vld [vmem:[%s238] sm:$0xf]
        %vm254 = vcmask 31744
        %v256 = vsel %vm254, %v249, 0
        %v259 = vsel %vm254, %v250, 0
        %v262 = vsel %vm254, %v251, 0
        %v265 = vsel %vm254, %v252, 0
        %vm267 = vcmask 1043456
        %v269 = vsel %vm267, %v253, 0
        %271 = vmatpush.msra.mxu0 0.0
        %272 = vmatpush.msra.mxu0 0.0
        %273 = vmatpush.msra.mxu0 0.0
        %274 = vmatpush.msra.mxu0 0.0
        %275 = vmatpush.msra.mxu0 0.0
        %276 = vmatpush.msra.mxu0 0.0
        %277 = vmatpush.msra.mxu0 0.0
        %278 = vmatpush.msra.mxu0 0.0
        %279 = vmatpush.msra.mxu0 0.0
        %280 = vmatpush.msra.mxu0 0.0
        %281 = vmatpush.msra.mxu0 0.0
        %282 = vmatpush.msra.mxu0 0.0
        %283 = vmatpush.msra.mxu0 0.0
        %284 = vmatpush.msra.mxu0 0.0
        %285 = vmatpush.msra.mxu0 0.0
        %v286 = vand.u32 %v269, 4294901760
        %287 = vmatpush.msra.mxu0 %v286
        %v288 = vand.u32 %v256, 4294901760
        %v289 = vsub.f32 %v256, %v288
        %v290 = vand.u32 %v289, 4294901760
        %v291 = vsub.f32 %v289, %v290
        %v292 = vand.u32 %v291, 4294901760
        %293 = vmatmul.f32.gmra.mxu0 %v292
        %v294 = vpop.f32.mrf.mxu0
        %v295 = vadd.f32 0.0, %v294
        %v296 = vand.u32 %v259, 4294901760
        %v297 = vsub.f32 %v259, %v296
        %v298 = vand.u32 %v297, 4294901760
        %v299 = vsub.f32 %v297, %v298
        %v300 = vand.u32 %v299, 4294901760
        %301 = vmatmul.f32.gmra.mxu0 %v300
        %v302 = vpop.f32.mrf.mxu0
        %v303 = vadd.f32 0.0, %v302
        %v304 = vand.u32 %v262, 4294901760
        %v305 = vsub.f32 %v262, %v304
        %v306 = vand.u32 %v305, 4294901760
        %v307 = vsub.f32 %v305, %v306
        %v308 = vand.u32 %v307, 4294901760
        %309 = vmatmul.f32.gmra.mxu0 %v308
        %v310 = vpop.f32.mrf.mxu0
        %v311 = vadd.f32 0.0, %v310
        %v312 = vand.u32 %v265, 4294901760
        %v313 = vsub.f32 %v265, %v312
        %v314 = vand.u32 %v313, 4294901760
        %v315 = vsub.f32 %v313, %v314
        %v316 = vand.u32 %v315, 4294901760
        %317 = vmatmul.f32.gmra.mxu0 %v316
        %v318 = vpop.f32.mrf.mxu0
        %v319 = vadd.f32 0.0, %v318
        %320 = vdwg.mxu0
        %321 = vmatpush.msra.mxu0 0.0
        %322 = vmatpush.msra.mxu0 0.0
        %323 = vmatpush.msra.mxu0 0.0
        %324 = vmatpush.msra.mxu0 0.0
        %325 = vmatpush.msra.mxu0 0.0
        %326 = vmatpush.msra.mxu0 0.0
        %327 = vmatpush.msra.mxu0 0.0
        %328 = vmatpush.msra.mxu0 0.0
        %329 = vmatpush.msra.mxu0 0.0
        %330 = vmatpush.msra.mxu0 0.0
        %331 = vmatpush.msra.mxu0 0.0
        %332 = vmatpush.msra.mxu0 0.0
        %333 = vmatpush.msra.mxu0 0.0
        %334 = vmatpush.msra.mxu0 0.0
        %335 = vmatpush.msra.mxu0 0.0
        %v336 = vand.u32 %v269, 4294901760
        %v337 = vsub.f32 %v269, %v336
        %v338 = vand.u32 %v337, 4294901760
        %v339 = vsub.f32 %v337, %v338
        %v340 = vand.u32 %v339, 4294901760
        %341 = vmatpush.msra.mxu0 %v340
        %v342 = vand.u32 %v256, 4294901760
        %343 = vmatmul.f32.gmra.mxu0 %v342
        %v344 = vpop.f32.mrf.mxu0
        %v345 = vadd.f32 %v295, %v344
        %v346 = vand.u32 %v259, 4294901760
        %347 = vmatmul.f32.gmra.mxu0 %v346
        %v348 = vpop.f32.mrf.mxu0
        %v349 = vadd.f32 %v303, %v348
        %v350 = vand.u32 %v262, 4294901760
        %351 = vmatmul.f32.gmra.mxu0 %v350
        %v352 = vpop.f32.mrf.mxu0
        %v353 = vadd.f32 %v311, %v352
        %v354 = vand.u32 %v265, 4294901760
        %355 = vmatmul.f32.gmra.mxu0 %v354
        %v356 = vpop.f32.mrf.mxu0
        %v357 = vadd.f32 %v319, %v356
        %358 = vdwg.mxu0
        %359 = vmatpush.msra.mxu0 0.0
        %360 = vmatpush.msra.mxu0 0.0
        %361 = vmatpush.msra.mxu0 0.0
        %362 = vmatpush.msra.mxu0 0.0
        %363 = vmatpush.msra.mxu0 0.0
        %364 = vmatpush.msra.mxu0 0.0
        %365 = vmatpush.msra.mxu0 0.0
        %366 = vmatpush.msra.mxu0 0.0
        %367 = vmatpush.msra.mxu0 0.0
        %368 = vmatpush.msra.mxu0 0.0
        %369 = vmatpush.msra.mxu0 0.0
        %370 = vmatpush.msra.mxu0 0.0
        %371 = vmatpush.msra.mxu0 0.0
        %372 = vmatpush.msra.mxu0 0.0
        %373 = vmatpush.msra.mxu0 0.0
        %v374 = vand.u32 %v269, 4294901760
        %v375 = vsub.f32 %v269, %v374
        %376 = vmatpush.msra.mxu0 %v375
        %v377 = vand.u32 %v256, 4294901760
        %v378 = vsub.f32 %v256, %v377
        %379 = vmatmul.f32.gmra.mxu0 %v378
        %v380 = vpop.f32.mrf.mxu0
        %v381 = vadd.f32 %v345, %v380
        %v382 = vand.u32 %v259, 4294901760
        %v383 = vsub.f32 %v259, %v382
        %384 = vmatmul.f32.gmra.mxu0 %v383
        %v385 = vpop.f32.mrf.mxu0
        %v386 = vadd.f32 %v349, %v385
        %v387 = vand.u32 %v262, 4294901760
        %v388 = vsub.f32 %v262, %v387
        %389 = vmatmul.f32.gmra.mxu0 %v388
        %v390 = vpop.f32.mrf.mxu0
        %v391 = vadd.f32 %v353, %v390
        %v392 = vand.u32 %v265, 4294901760
        %v393 = vsub.f32 %v265, %v392
        %394 = vmatmul.f32.gmra.mxu0 %v393
        %v395 = vpop.f32.mrf.mxu0
        %v396 = vadd.f32 %v357, %v395
        %397 = vdwg.mxu0
        %398 = vmatpush.msra.mxu0 0.0
        %399 = vmatpush.msra.mxu0 0.0
        %400 = vmatpush.msra.mxu0 0.0
        %401 = vmatpush.msra.mxu0 0.0
        %402 = vmatpush.msra.mxu0 0.0
        %403 = vmatpush.msra.mxu0 0.0
        %404 = vmatpush.msra.mxu0 0.0
        %405 = vmatpush.msra.mxu0 0.0
        %406 = vmatpush.msra.mxu0 0.0
        %407 = vmatpush.msra.mxu0 0.0
        %408 = vmatpush.msra.mxu0 0.0
        %409 = vmatpush.msra.mxu0 0.0
        %410 = vmatpush.msra.mxu0 0.0
        %411 = vmatpush.msra.mxu0 0.0
        %412 = vmatpush.msra.mxu0 0.0
        %v413 = vand.u32 %v269, 4294901760
        %414 = vmatpush.msra.mxu0 %v413
        %v415 = vand.u32 %v256, 4294901760
        %v416 = vsub.f32 %v256, %v415
        %v417 = vand.u32 %v416, 4294901760
        %418 = vmatmul.f32.gmra.mxu0 %v417
        %v419 = vpop.f32.mrf.mxu0
        %v420 = vadd.f32 %v381, %v419
        %v421 = vand.u32 %v259, 4294901760
        %v422 = vsub.f32 %v259, %v421
        %v423 = vand.u32 %v422, 4294901760
        %424 = vmatmul.f32.gmra.mxu0 %v423
        %v425 = vpop.f32.mrf.mxu0
        %v426 = vadd.f32 %v386, %v425
        %v427 = vand.u32 %v262, 4294901760
        %v428 = vsub.f32 %v262, %v427
        %v429 = vand.u32 %v428, 4294901760
        %430 = vmatmul.f32.gmra.mxu0 %v429
        %v431 = vpop.f32.mrf.mxu0
        %v432 = vadd.f32 %v391, %v431
        %v433 = vand.u32 %v265, 4294901760
        %v434 = vsub.f32 %v265, %v433
        %v435 = vand.u32 %v434, 4294901760
        %436 = vmatmul.f32.gmra.mxu0 %v435
        %v437 = vpop.f32.mrf.mxu0
        %v438 = vadd.f32 %v396, %v437
        %439 = vdwg.mxu0
        %440 = vmatpush.msra.mxu0 0.0
        %441 = vmatpush.msra.mxu0 0.0
        %442 = vmatpush.msra.mxu0 0.0
        %443 = vmatpush.msra.mxu0 0.0
        %444 = vmatpush.msra.mxu0 0.0
        %445 = vmatpush.msra.mxu0 0.0
        %446 = vmatpush.msra.mxu0 0.0
        %447 = vmatpush.msra.mxu0 0.0
        %448 = vmatpush.msra.mxu0 0.0
        %449 = vmatpush.msra.mxu0 0.0
        %450 = vmatpush.msra.mxu0 0.0
        %451 = vmatpush.msra.mxu0 0.0
        %452 = vmatpush.msra.mxu0 0.0
        %453 = vmatpush.msra.mxu0 0.0
        %454 = vmatpush.msra.mxu0 0.0
        %v455 = vand.u32 %v269, 4294901760
        %v456 = vsub.f32 %v269, %v455
        %v457 = vand.u32 %v456, 4294901760
        %458 = vmatpush.msra.mxu0 %v457
        %v459 = vand.u32 %v256, 4294901760
        %460 = vmatmul.f32.gmra.mxu0 %v459
        %v461 = vpop.f32.mrf.mxu0
        %v462 = vadd.f32 %v420, %v461
        %v463 = vand.u32 %v259, 4294901760
        %464 = vmatmul.f32.gmra.mxu0 %v463
        %v465 = vpop.f32.mrf.mxu0
        %v466 = vadd.f32 %v426, %v465
        %v467 = vand.u32 %v262, 4294901760
        %468 = vmatmul.f32.gmra.mxu0 %v467
        %v469 = vpop.f32.mrf.mxu0
        %v470 = vadd.f32 %v432, %v469
        %v471 = vand.u32 %v265, 4294901760
        %472 = vmatmul.f32.gmra.mxu0 %v471
        %v473 = vpop.f32.mrf.mxu0
        %v474 = vadd.f32 %v438, %v473
        %475 = vdwg.mxu0
        %476 = vmatpush.msra.mxu0 0.0
        %477 = vmatpush.msra.mxu0 0.0
        %478 = vmatpush.msra.mxu0 0.0
        %479 = vmatpush.msra.mxu0 0.0
        %480 = vmatpush.msra.mxu0 0.0
        %481 = vmatpush.msra.mxu0 0.0
        %482 = vmatpush.msra.mxu0 0.0
        %483 = vmatpush.msra.mxu0 0.0
        %484 = vmatpush.msra.mxu0 0.0
        %485 = vmatpush.msra.mxu0 0.0
        %486 = vmatpush.msra.mxu0 0.0
        %487 = vmatpush.msra.mxu0 0.0
        %488 = vmatpush.msra.mxu0 0.0
        %489 = vmatpush.msra.mxu0 0.0
        %490 = vmatpush.msra.mxu0 0.0
        %v491 = vand.u32 %v269, 4294901760
        %492 = vmatpush.msra.mxu0 %v491
        %v493 = vand.u32 %v256, 4294901760
        %494 = vmatmul.f32.gmra.mxu0 %v493
        %v495 = vpop.f32.mrf.mxu0
        %v496 = vadd.f32 %v462, %v495
        %v497 = vand.u32 %v259, 4294901760
        %498 = vmatmul.f32.gmra.mxu0 %v497
        %v499 = vpop.f32.mrf.mxu0
        %v500 = vadd.f32 %v466, %v499
        %v501 = vand.u32 %v262, 4294901760
        %502 = vmatmul.f32.gmra.mxu0 %v501
        %v503 = vpop.f32.mrf.mxu0
        %v504 = vadd.f32 %v470, %v503
        %v505 = vand.u32 %v265, 4294901760
        %506 = vmatmul.f32.gmra.mxu0 %v505
        %v507 = vpop.f32.mrf.mxu0
        %v508 = vadd.f32 %v474, %v507
        %509 = vdwg.mxu0
        %510 = vst [vmem:[#allocation2] sm:$0xff] %v496
        %511 = vst [vmem:[#allocation2 + $0x8] sm:$0xff] %v500
        %512 = vst [vmem:[#allocation2 + $0x10] sm:$0xff] %v504
        %513 = vst [vmem:[#allocation2 + $0x18] sm:$0xff] %v508
        %v514 = vld [vmem:[%s3] sm:$0xff]
        %516 = vset.pattern.permute.xlu0 0
        %517 = vperm.xlu0 %516, %v514
        %v518 = vpop.permute.xlu0 %517
        %v520 = vld [vmem:[#allocation2] sm:$0xff]
        %v521 = vld [vmem:[#allocation3] sm:$0xff]
        %v522 = vld [vmem:[#allocation3 + $0x8] sm:$0xff]
        %v523 = vld [vmem:[#allocation3 + $0x10] sm:$0xff]
        %v524 = vld [vmem:[#allocation3 + $0x18] sm:$0xff]
        %v525 = vld [vmem:[#allocation3 + $0x20] sm:$0xff]
        %v526 = vld [vmem:[#allocation3 + $0x28] sm:$0xff]
        %v527 = vld [vmem:[#allocation3 + $0x30] sm:$0xff]
        %v528 = vld [vmem:[#allocation3 + $0x38] sm:$0xff]
        %v529 = vld [vmem:[#allocation3 + $0x40] sm:$0xff]
        %v530 = vld [vmem:[#allocation3 + $0x48] sm:$0xff]
        %v531 = vld [vmem:[#allocation3 + $0x50] sm:$0xff]
        %v532 = vld [vmem:[#allocation3 + $0x58] sm:$0xff]
        %v533 = vld [vmem:[#allocation3 + $0x60] sm:$0xff]
        %v534 = vld [vmem:[#allocation3 + $0x68] sm:$0xff]
        %v535 = vld [vmem:[#allocation3 + $0x70] sm:$0xff]
        %v536 = vld [vmem:[#allocation3 + $0x78] sm:$0xff]
        %v537 = vld [vmem:[#allocation3 + $0x80] sm:$0xff]
        %v538 = vld [vmem:[#allocation3 + $0x88] sm:$0xff]
        %v539 = vld [vmem:[#allocation3 + $0x90] sm:$0xff]
        %v540 = vld [vmem:[#allocation3 + $0x98] sm:$0xff]
        %v541 = vld [vmem:[#allocation3 + $0xa0] sm:$0xff]
        %v542 = vld [vmem:[#allocation3 + $0xa8] sm:$0xff]
        %v543 = vld [vmem:[#allocation3 + $0xb0] sm:$0xff]
        %v544 = vld [vmem:[#allocation3 + $0xb8] sm:$0xff]
        %v545 = vld [vmem:[#allocation3 + $0xc0] sm:$0xff]
        %v546 = vld [vmem:[#allocation3 + $0xc8] sm:$0xff]
        %v547 = vld [vmem:[#allocation3 + $0xd0] sm:$0xff]
        %v548 = vld [vmem:[#allocation3 + $0xd8] sm:$0xff]
        %v549 = vld [vmem:[#allocation3 + $0xe0] sm:$0xff]
        %v550 = vld [vmem:[#allocation3 + $0xe8] sm:$0xff]
        %v551 = vld [vmem:[#allocation3 + $0xf0] sm:$0xff]
        %v552 = vld [vmem:[#allocation3 + $0xf8] sm:$0xff]
        %v553 = vld [vmem:[#allocation3 + $0x100] sm:$0xff]
        %v554 = vld [vmem:[#allocation3 + $0x108] sm:$0xff]
        %v555 = vld [vmem:[#allocation3 + $0x110] sm:$0xff]
        %v556 = vld [vmem:[#allocation3 + $0x118] sm:$0xff]
        %v557 = vld [vmem:[#allocation3 + $0x120] sm:$0xff]
        %v558 = vld [vmem:[#allocation3 + $0x128] sm:$0xff]
        %v559 = vld [vmem:[#allocation3 + $0x130] sm:$0xff]
        %v560 = vld [vmem:[#allocation3 + $0x138] sm:$0xff]
        %v561 = vld [vmem:[#allocation3 + $0x140] sm:$0xff]
        %v562 = vld [vmem:[#allocation3 + $0x148] sm:$0xff]
        %v563 = vld [vmem:[#allocation3 + $0x150] sm:$0xff]
        %v564 = vld [vmem:[#allocation3 + $0x158] sm:$0xff]
        %v565 = vld [vmem:[#allocation3 + $0x160] sm:$0xff]
        %v566 = vld [vmem:[#allocation3 + $0x168] sm:$0xff]
        %v567 = vld [vmem:[#allocation3 + $0x170] sm:$0xff]
        %v568 = vld [vmem:[#allocation3 + $0x178] sm:$0xff]
        %v569 = vld [vmem:[#allocation3 + $0x180] sm:$0xff]
        %v570 = vld [vmem:[#allocation3 + $0x188] sm:$0xff]
        %v571 = vld [vmem:[#allocation3 + $0x190] sm:$0xff]
        %v572 = vld [vmem:[#allocation3 + $0x198] sm:$0xff]
        %v573 = vld [vmem:[#allocation3 + $0x1a0] sm:$0xff]
        %v574 = vld [vmem:[#allocation3 + $0x1a8] sm:$0xff]
        %v575 = vld [vmem:[#allocation3 + $0x1b0] sm:$0xff]
        %v576 = vld [vmem:[#allocation3 + $0x1b8] sm:$0xff]
        %v577 = vld [vmem:[#allocation3 + $0x1c0] sm:$0xff]
        %v578 = vld [vmem:[#allocation3 + $0x1c8] sm:$0xff]
        %v579 = vld [vmem:[#allocation3 + $0x1d0] sm:$0xff]
        %v580 = vld [vmem:[#allocation3 + $0x1d8] sm:$0xff]
        %v581 = vld [vmem:[#allocation3 + $0x1e0] sm:$0xff]
        %v582 = vld [vmem:[#allocation3 + $0x1e8] sm:$0xff]
        %v583 = vld [vmem:[#allocation3 + $0x1f0] sm:$0xff]
        %v584 = vld [vmem:[#allocation3 + $0x1f8] sm:$0xff]
        %v585 = vand.u32 %v581, 4294901760
        %586 = vmatpush.msra.mxu0 %v585
        %v587 = vand.u32 %v577, 4294901760
        %588 = vmatpush.msra.mxu0 %v587
        %v589 = vand.u32 %v573, 4294901760
        %590 = vmatpush.msra.mxu0 %v589
        %v591 = vand.u32 %v569, 4294901760
        %592 = vmatpush.msra.mxu0 %v591
        %v593 = vand.u32 %v565, 4294901760
        %594 = vmatpush.msra.mxu0 %v593
        %v595 = vand.u32 %v561, 4294901760
        %596 = vmatpush.msra.mxu0 %v595
        %v597 = vand.u32 %v557, 4294901760
        %598 = vmatpush.msra.mxu0 %v597
        %v599 = vand.u32 %v553, 4294901760
        %600 = vmatpush.msra.mxu0 %v599
        %v601 = vand.u32 %v549, 4294901760
        %602 = vmatpush.msra.mxu0 %v601
        %v603 = vand.u32 %v545, 4294901760
        %604 = vmatpush.msra.mxu0 %v603
        %v605 = vand.u32 %v541, 4294901760
        %606 = vmatpush.msra.mxu0 %v605
        %v607 = vand.u32 %v537, 4294901760
        %608 = vmatpush.msra.mxu0 %v607
        %v609 = vand.u32 %v533, 4294901760
        %610 = vmatpush.msra.mxu0 %v609
        %v611 = vand.u32 %v529, 4294901760
        %612 = vmatpush.msra.mxu0 %v611
        %v613 = vand.u32 %v525, 4294901760
        %614 = vmatpush.msra.mxu0 %v613
        %v615 = vand.u32 %v521, 4294901760
        %616 = vmatpush.msra.mxu0 %v615
        %v617 = vand.u32 %v520, 4294901760
        %v618 = vsub.f32 %v520, %v617
        %v619 = vand.u32 %v618, 4294901760
        %v620 = vsub.f32 %v618, %v619
        %v621 = vand.u32 %v620, 4294901760
        %622 = vmatmul.f32.gmra.mxu0 %v621
        %v623 = vpop.f32.mrf.mxu0
        %v624 = vadd.f32 0.0, %v623
        %625 = vdwg.mxu0
        %v626 = vand.u32 %v581, 4294901760
        %v627 = vsub.f32 %v581, %v626
        %v628 = vand.u32 %v627, 4294901760
        %v629 = vsub.f32 %v627, %v628
        %v630 = vand.u32 %v629, 4294901760
        %631 = vmatpush.msra.mxu0 %v630
        %v632 = vand.u32 %v577, 4294901760
        %v633 = vsub.f32 %v577, %v632
        %v634 = vand.u32 %v633, 4294901760
        %v635 = vsub.f32 %v633, %v634
        %v636 = vand.u32 %v635, 4294901760
        %637 = vmatpush.msra.mxu0 %v636
        %v638 = vand.u32 %v573, 4294901760
        %v639 = vsub.f32 %v573, %v638
        %v640 = vand.u32 %v639, 4294901760
        %v641 = vsub.f32 %v639, %v640
        %v642 = vand.u32 %v641, 4294901760
        %643 = vmatpush.msra.mxu0 %v642
        %v644 = vand.u32 %v569, 4294901760
        %v645 = vsub.f32 %v569, %v644
        %v646 = vand.u32 %v645, 4294901760
        %v647 = vsub.f32 %v645, %v646
        %v648 = vand.u32 %v647, 4294901760
        %649 = vmatpush.msra.mxu0 %v648
        %v650 = vand.u32 %v565, 4294901760
        %v651 = vsub.f32 %v565, %v650
        %v652 = vand.u32 %v651, 4294901760
        %v653 = vsub.f32 %v651, %v652
        %v654 = vand.u32 %v653, 4294901760
        %655 = vmatpush.msra.mxu0 %v654
        %v656 = vand.u32 %v561, 4294901760
        %v657 = vsub.f32 %v561, %v656
        %v658 = vand.u32 %v657, 4294901760
        %v659 = vsub.f32 %v657, %v658
        %v660 = vand.u32 %v659, 4294901760
        %661 = vmatpush.msra.mxu0 %v660
        %v662 = vand.u32 %v557, 4294901760
        %v663 = vsub.f32 %v557, %v662
        %v664 = vand.u32 %v663, 4294901760
        %v665 = vsub.f32 %v663, %v664
        %v666 = vand.u32 %v665, 4294901760
        %667 = vmatpush.msra.mxu0 %v666
        %v668 = vand.u32 %v553, 4294901760
        %v669 = vsub.f32 %v553, %v668
        %v670 = vand.u32 %v669, 4294901760
        %v671 = vsub.f32 %v669, %v670
        %v672 = vand.u32 %v671, 4294901760
        %673 = vmatpush.msra.mxu0 %v672
        %v674 = vand.u32 %v549, 4294901760
        %v675 = vsub.f32 %v549, %v674
        %v676 = vand.u32 %v675, 4294901760
        %v677 = vsub.f32 %v675, %v676
        %v678 = vand.u32 %v677, 4294901760
        %679 = vmatpush.msra.mxu0 %v678
        %v680 = vand.u32 %v545, 4294901760
        %v681 = vsub.f32 %v545, %v680
        %v682 = vand.u32 %v681, 4294901760
        %v683 = vsub.f32 %v681, %v682
        %v684 = vand.u32 %v683, 4294901760
        %685 = vmatpush.msra.mxu0 %v684
        %v686 = vand.u32 %v541, 4294901760
        %v687 = vsub.f32 %v541, %v686
        %v688 = vand.u32 %v687, 4294901760
        %v689 = vsub.f32 %v687, %v688
        %v690 = vand.u32 %v689, 4294901760
        %691 = vmatpush.msra.mxu0 %v690
        %v692 = vand.u32 %v537, 4294901760
        %v693 = vsub.f32 %v537, %v692
        %v694 = vand.u32 %v693, 4294901760
        %v695 = vsub.f32 %v693, %v694
        %v696 = vand.u32 %v695, 4294901760
        %697 = vmatpush.msra.mxu0 %v696
        %v698 = vand.u32 %v533, 4294901760
        %v699 = vsub.f32 %v533, %v698
        %v700 = vand.u32 %v699, 4294901760
        %v701 = vsub.f32 %v699, %v700
        %v702 = vand.u32 %v701, 4294901760
        %703 = vmatpush.msra.mxu0 %v702
        %v704 = vand.u32 %v529, 4294901760
        %v705 = vsub.f32 %v529, %v704
        %v706 = vand.u32 %v705, 4294901760
        %v707 = vsub.f32 %v705, %v706
        %v708 = vand.u32 %v707, 4294901760
        %709 = vmatpush.msra.mxu0 %v708
        %v710 = vand.u32 %v525, 4294901760
        %v711 = vsub.f32 %v525, %v710
        %v712 = vand.u32 %v711, 4294901760
        %v713 = vsub.f32 %v711, %v712
        %v714 = vand.u32 %v713, 4294901760
        %715 = vmatpush.msra.mxu0 %v714
        %v716 = vand.u32 %v521, 4294901760
        %v717 = vsub.f32 %v521, %v716
        %v718 = vand.u32 %v717, 4294901760
        %v719 = vsub.f32 %v717, %v718
        %v720 = vand.u32 %v719, 4294901760
        %721 = vmatpush.msra.mxu0 %v720
        %v722 = vand.u32 %v520, 4294901760
        %723 = vmatmul.f32.gmra.mxu0 %v722
        %v724 = vpop.f32.mrf.mxu0
        %v725 = vadd.f32 %v624, %v724
        %726 = vdwg.mxu0
        %v727 = vand.u32 %v581, 4294901760
        %v728 = vsub.f32 %v581, %v727
        %729 = vmatpush.msra.mxu0 %v728
        %v730 = vand.u32 %v577, 4294901760
        %v731 = vsub.f32 %v577, %v730
        %732 = vmatpush.msra.mxu0 %v731
        %v733 = vand.u32 %v573, 4294901760
        %v734 = vsub.f32 %v573, %v733
        %735 = vmatpush.msra.mxu0 %v734
        %v736 = vand.u32 %v569, 4294901760
        %v737 = vsub.f32 %v569, %v736
        %738 = vmatpush.msra.mxu0 %v737
        %v739 = vand.u32 %v565, 4294901760
        %v740 = vsub.f32 %v565, %v739
        %741 = vmatpush.msra.mxu0 %v740
        %v742 = vand.u32 %v561, 4294901760
        %v743 = vsub.f32 %v561, %v742
        %744 = vmatpush.msra.mxu0 %v743
        %v745 = vand.u32 %v557, 4294901760
        %v746 = vsub.f32 %v557, %v745
        %747 = vmatpush.msra.mxu0 %v746
        %v748 = vand.u32 %v553, 4294901760
        %v749 = vsub.f32 %v553, %v748
        %750 = vmatpush.msra.mxu0 %v749
        %v751 = vand.u32 %v549, 4294901760
        %v752 = vsub.f32 %v549, %v751
        %753 = vmatpush.msra.mxu0 %v752
        %v754 = vand.u32 %v545, 4294901760
        %v755 = vsub.f32 %v545, %v754
        %756 = vmatpush.msra.mxu0 %v755
        %v757 = vand.u32 %v541, 4294901760
        %v758 = vsub.f32 %v541, %v757
        %759 = vmatpush.msra.mxu0 %v758
        %v760 = vand.u32 %v537, 4294901760
        %v761 = vsub.f32 %v537, %v760
        %762 = vmatpush.msra.mxu0 %v761
        %v763 = vand.u32 %v533, 4294901760
        %v764 = vsub.f32 %v533, %v763
        %765 = vmatpush.msra.mxu0 %v764
        %v766 = vand.u32 %v529, 4294901760
        %v767 = vsub.f32 %v529, %v766
        %768 = vmatpush.msra.mxu0 %v767
        %v769 = vand.u32 %v525, 4294901760
        %v770 = vsub.f32 %v525, %v769
        %771 = vmatpush.msra.mxu0 %v770
        %v772 = vand.u32 %v521, 4294901760
        %v773 = vsub.f32 %v521, %v772
        %774 = vmatpush.msra.mxu0 %v773
        %v775 = vand.u32 %v520, 4294901760
        %v776 = vsub.f32 %v520, %v775
        %777 = vmatmul.f32.gmra.mxu0 %v776
        %v778 = vpop.f32.mrf.mxu0
        %v779 = vadd.f32 %v725, %v778
        %780 = vdwg.mxu0
        %v781 = vand.u32 %v581, 4294901760
        %782 = vmatpush.msra.mxu0 %v781
        %v783 = vand.u32 %v577, 4294901760
        %784 = vmatpush.msra.mxu0 %v783
        %v785 = vand.u32 %v573, 4294901760
        %786 = vmatpush.msra.mxu0 %v785
        %v787 = vand.u32 %v569, 4294901760
        %788 = vmatpush.msra.mxu0 %v787
        %v789 = vand.u32 %v565, 4294901760
        %790 = vmatpush.msra.mxu0 %v789
        %v791 = vand.u32 %v561, 4294901760
        %792 = vmatpush.msra.mxu0 %v791
        %v793 = vand.u32 %v557, 4294901760
        %794 = vmatpush.msra.mxu0 %v793
        %v795 = vand.u32 %v553, 4294901760
        %796 = vmatpush.msra.mxu0 %v795
        %v797 = vand.u32 %v549, 4294901760
        %798 = vmatpush.msra.mxu0 %v797
        %v799 = vand.u32 %v545, 4294901760
        %800 = vmatpush.msra.mxu0 %v799
        %v801 = vand.u32 %v541, 4294901760
        %802 = vmatpush.msra.mxu0 %v801
        %v803 = vand.u32 %v537, 4294901760
        %804 = vmatpush.msra.mxu0 %v803
        %v805 = vand.u32 %v533, 4294901760
        %806 = vmatpush.msra.mxu0 %v805
        %v807 = vand.u32 %v529, 4294901760
        %808 = vmatpush.msra.mxu0 %v807
        %v809 = vand.u32 %v525, 4294901760
        %810 = vmatpush.msra.mxu0 %v809
        %v811 = vand.u32 %v521, 4294901760
        %812 = vmatpush.msra.mxu0 %v811
        %v813 = vand.u32 %v520, 4294901760
        %v814 = vsub.f32 %v520, %v813
        %v815 = vand.u32 %v814, 4294901760
        %816 = vmatmul.f32.gmra.mxu0 %v815
        %v817 = vpop.f32.mrf.mxu0
        %v818 = vadd.f32 %v779, %v817
        %819 = vdwg.mxu0
        %v820 = vand.u32 %v581, 4294901760
        %v821 = vsub.f32 %v581, %v820
        %v822 = vand.u32 %v821, 4294901760
        %823 = vmatpush.msra.mxu0 %v822
        %v824 = vand.u32 %v577, 4294901760
        %v825 = vsub.f32 %v577, %v824
        %v826 = vand.u32 %v825, 4294901760
        %827 = vmatpush.msra.mxu0 %v826
        %v828 = vand.u32 %v573, 4294901760
        %v829 = vsub.f32 %v573, %v828
        %v830 = vand.u32 %v829, 4294901760
        %831 = vmatpush.msra.mxu0 %v830
        %v832 = vand.u32 %v569, 4294901760
        %v833 = vsub.f32 %v569, %v832
        %v834 = vand.u32 %v833, 4294901760
        %835 = vmatpush.msra.mxu0 %v834
        %v836 = vand.u32 %v565, 4294901760
        %v837 = vsub.f32 %v565, %v836
        %v838 = vand.u32 %v837, 4294901760
        %839 = vmatpush.msra.mxu0 %v838
        %v840 = vand.u32 %v561, 4294901760
        %v841 = vsub.f32 %v561, %v840
        %v842 = vand.u32 %v841, 4294901760
        %843 = vmatpush.msra.mxu0 %v842
        %v844 = vand.u32 %v557, 4294901760
        %v845 = vsub.f32 %v557, %v844
        %v846 = vand.u32 %v845, 4294901760
        %847 = vmatpush.msra.mxu0 %v846
        %v848 = vand.u32 %v553, 4294901760
        %v849 = vsub.f32 %v553, %v848
        %v850 = vand.u32 %v849, 4294901760
        %851 = vmatpush.msra.mxu0 %v850
        %v852 = vand.u32 %v549, 4294901760
        %v853 = vsub.f32 %v549, %v852
        %v854 = vand.u32 %v853, 4294901760
        %855 = vmatpush.msra.mxu0 %v854
        %v856 = vand.u32 %v545, 4294901760
        %v857 = vsub.f32 %v545, %v856
        %v858 = vand.u32 %v857, 4294901760
        %859 = vmatpush.msra.mxu0 %v858
        %v860 = vand.u32 %v541, 4294901760
        %v861 = vsub.f32 %v541, %v860
        %v862 = vand.u32 %v861, 4294901760
        %863 = vmatpush.msra.mxu0 %v862
        %v864 = vand.u32 %v537, 4294901760
        %v865 = vsub.f32 %v537, %v864
        %v866 = vand.u32 %v865, 4294901760
        %867 = vmatpush.msra.mxu0 %v866
        %v868 = vand.u32 %v533, 4294901760
        %v869 = vsub.f32 %v533, %v868
        %v870 = vand.u32 %v869, 4294901760
        %871 = vmatpush.msra.mxu0 %v870
        %v872 = vand.u32 %v529, 4294901760
        %v873 = vsub.f32 %v529, %v872
        %v874 = vand.u32 %v873, 4294901760
        %875 = vmatpush.msra.mxu0 %v874
        %v876 = vand.u32 %v525, 4294901760
        %v877 = vsub.f32 %v525, %v876
        %v878 = vand.u32 %v877, 4294901760
        %879 = vmatpush.msra.mxu0 %v878
        %v880 = vand.u32 %v521, 4294901760
        %v881 = vsub.f32 %v521, %v880
        %v882 = vand.u32 %v881, 4294901760
        %883 = vmatpush.msra.mxu0 %v882
        %v884 = vand.u32 %v520, 4294901760
        %885 = vmatmul.f32.gmra.mxu0 %v884
        %v886 = vpop.f32.mrf.mxu0
        %v887 = vadd.f32 %v818, %v886
        %888 = vdwg.mxu0
        %v889 = vand.u32 %v581, 4294901760
        %890 = vmatpush.msra.mxu0 %v889
        %v891 = vand.u32 %v577, 4294901760
        %892 = vmatpush.msra.mxu0 %v891
        %v893 = vand.u32 %v573, 4294901760
        %894 = vmatpush.msra.mxu0 %v893
        %v895 = vand.u32 %v569, 4294901760
        %896 = vmatpush.msra.mxu0 %v895
        %v897 = vand.u32 %v565, 4294901760
        %898 = vmatpush.msra.mxu0 %v897
        %v899 = vand.u32 %v561, 4294901760
        %900 = vmatpush.msra.mxu0 %v899
        %v901 = vand.u32 %v557, 4294901760
        %902 = vmatpush.msra.mxu0 %v901
        %v903 = vand.u32 %v553, 4294901760
        %904 = vmatpush.msra.mxu0 %v903
        %v905 = vand.u32 %v549, 4294901760
        %906 = vmatpush.msra.mxu0 %v905
        %v907 = vand.u32 %v545, 4294901760
        %908 = vmatpush.msra.mxu0 %v907
        %v909 = vand.u32 %v541, 4294901760
        %910 = vmatpush.msra.mxu0 %v909
        %v911 = vand.u32 %v537, 4294901760
        %912 = vmatpush.msra.mxu0 %v911
        %v913 = vand.u32 %v533, 4294901760
        %914 = vmatpush.msra.mxu0 %v913
        %v915 = vand.u32 %v529, 4294901760
        %916 = vmatpush.msra.mxu0 %v915
        %v917 = vand.u32 %v525, 4294901760
        %918 = vmatpush.msra.mxu0 %v917
        %v919 = vand.u32 %v521, 4294901760
        %920 = vmatpush.msra.mxu0 %v919
        %v921 = vand.u32 %v520, 4294901760
        %922 = vmatmul.f32.gmra.mxu0 %v921
        %v923 = vpop.f32.mrf.mxu0
        %v924 = vadd.f32 %v887, %v923
        %925 = vdwg.mxu0
        %v926 = vand.u32 %v582, 4294901760
        %927 = vmatpush.msra.mxu0 %v926
        %v928 = vand.u32 %v578, 4294901760
        %929 = vmatpush.msra.mxu0 %v928
        %v930 = vand.u32 %v574, 4294901760
        %931 = vmatpush.msra.mxu0 %v930
        %v932 = vand.u32 %v570, 4294901760
        %933 = vmatpush.msra.mxu0 %v932
        %v934 = vand.u32 %v566, 4294901760
        %935 = vmatpush.msra.mxu0 %v934
        %v936 = vand.u32 %v562, 4294901760
        %937 = vmatpush.msra.mxu0 %v936
        %v938 = vand.u32 %v558, 4294901760
        %939 = vmatpush.msra.mxu0 %v938
        %v940 = vand.u32 %v554, 4294901760
        %941 = vmatpush.msra.mxu0 %v940
        %v942 = vand.u32 %v550, 4294901760
        %943 = vmatpush.msra.mxu0 %v942
        %v944 = vand.u32 %v546, 4294901760
        %945 = vmatpush.msra.mxu0 %v944
        %v946 = vand.u32 %v542, 4294901760
        %947 = vmatpush.msra.mxu0 %v946
        %v948 = vand.u32 %v538, 4294901760
        %949 = vmatpush.msra.mxu0 %v948
        %v950 = vand.u32 %v534, 4294901760
        %951 = vmatpush.msra.mxu0 %v950
        %v952 = vand.u32 %v530, 4294901760
        %953 = vmatpush.msra.mxu0 %v952
        %v954 = vand.u32 %v526, 4294901760
        %955 = vmatpush.msra.mxu0 %v954
        %v956 = vand.u32 %v522, 4294901760
        %957 = vmatpush.msra.mxu0 %v956
        %v958 = vand.u32 %v520, 4294901760
        %v959 = vsub.f32 %v520, %v958
        %v960 = vand.u32 %v959, 4294901760
        %v961 = vsub.f32 %v959, %v960
        %v962 = vand.u32 %v961, 4294901760
        %963 = vmatmul.f32.gmra.mxu0 %v962
        %v964 = vpop.f32.mrf.mxu0
        %v965 = vadd.f32 0.0, %v964
        %966 = vdwg.mxu0
        %v967 = vand.u32 %v582, 4294901760
        %v968 = vsub.f32 %v582, %v967
        %v969 = vand.u32 %v968, 4294901760
        %v970 = vsub.f32 %v968, %v969
        %v971 = vand.u32 %v970, 4294901760
        %972 = vmatpush.msra.mxu0 %v971
        %v973 = vand.u32 %v578, 4294901760
        %v974 = vsub.f32 %v578, %v973
        %v975 = vand.u32 %v974, 4294901760
        %v976 = vsub.f32 %v974, %v975
        %v977 = vand.u32 %v976, 4294901760
        %978 = vmatpush.msra.mxu0 %v977
        %v979 = vand.u32 %v574, 4294901760
        %v980 = vsub.f32 %v574, %v979
        %v981 = vand.u32 %v980, 4294901760
        %v982 = vsub.f32 %v980, %v981
        %v983 = vand.u32 %v982, 4294901760
        %984 = vmatpush.msra.mxu0 %v983
        %v985 = vand.u32 %v570, 4294901760
        %v986 = vsub.f32 %v570, %v985
        %v987 = vand.u32 %v986, 4294901760
        %v988 = vsub.f32 %v986, %v987
        %v989 = vand.u32 %v988, 4294901760
        %990 = vmatpush.msra.mxu0 %v989
        %v991 = vand.u32 %v566, 4294901760
        %v992 = vsub.f32 %v566, %v991
        %v993 = vand.u32 %v992, 4294901760
        %v994 = vsub.f32 %v992, %v993
        %v995 = vand.u32 %v994, 4294901760
        %996 = vmatpush.msra.mxu0 %v995
        %v997 = vand.u32 %v562, 4294901760
        %v998 = vsub.f32 %v562, %v997
        %v999 = vand.u32 %v998, 4294901760
        %v1000 = vsub.f32 %v998, %v999
        %v1001 = vand.u32 %v1000, 4294901760
        %1002 = vmatpush.msra.mxu0 %v1001
        %v1003 = vand.u32 %v558, 4294901760
        %v1004 = vsub.f32 %v558, %v1003
        %v1005 = vand.u32 %v1004, 4294901760
        %v1006 = vsub.f32 %v1004, %v1005
        %v1007 = vand.u32 %v1006, 4294901760
        %1008 = vmatpush.msra.mxu0 %v1007
        %v1009 = vand.u32 %v554, 4294901760
        %v1010 = vsub.f32 %v554, %v1009
        %v1011 = vand.u32 %v1010, 4294901760
        %v1012 = vsub.f32 %v1010, %v1011
        %v1013 = vand.u32 %v1012, 4294901760
        %1014 = vmatpush.msra.mxu0 %v1013
        %v1015 = vand.u32 %v550, 4294901760
        %v1016 = vsub.f32 %v550, %v1015
        %v1017 = vand.u32 %v1016, 4294901760
        %v1018 = vsub.f32 %v1016, %v1017
        %v1019 = vand.u32 %v1018, 4294901760
        %1020 = vmatpush.msra.mxu0 %v1019
        %v1021 = vand.u32 %v546, 4294901760
        %v1022 = vsub.f32 %v546, %v1021
        %v1023 = vand.u32 %v1022, 4294901760
        %v1024 = vsub.f32 %v1022, %v1023
        %v1025 = vand.u32 %v1024, 4294901760
        %1026 = vmatpush.msra.mxu0 %v1025
        %v1027 = vand.u32 %v542, 4294901760
        %v1028 = vsub.f32 %v542, %v1027
        %v1029 = vand.u32 %v1028, 4294901760
        %v1030 = vsub.f32 %v1028, %v1029
        %v1031 = vand.u32 %v1030, 4294901760
        %1032 = vmatpush.msra.mxu0 %v1031
        %v1033 = vand.u32 %v538, 4294901760
        %v1034 = vsub.f32 %v538, %v1033
        %v1035 = vand.u32 %v1034, 4294901760
        %v1036 = vsub.f32 %v1034, %v1035
        %v1037 = vand.u32 %v1036, 4294901760
        %1038 = vmatpush.msra.mxu0 %v1037
        %v1039 = vand.u32 %v534, 4294901760
        %v1040 = vsub.f32 %v534, %v1039
        %v1041 = vand.u32 %v1040, 4294901760
        %v1042 = vsub.f32 %v1040, %v1041
        %v1043 = vand.u32 %v1042, 4294901760
        %1044 = vmatpush.msra.mxu0 %v1043
        %v1045 = vand.u32 %v530, 4294901760
        %v1046 = vsub.f32 %v530, %v1045
        %v1047 = vand.u32 %v1046, 4294901760
        %v1048 = vsub.f32 %v1046, %v1047
        %v1049 = vand.u32 %v1048, 4294901760
        %1050 = vmatpush.msra.mxu0 %v1049
        %v1051 = vand.u32 %v526, 4294901760
        %v1052 = vsub.f32 %v526, %v1051
        %v1053 = vand.u32 %v1052, 4294901760
        %v1054 = vsub.f32 %v1052, %v1053
        %v1055 = vand.u32 %v1054, 4294901760
        %1056 = vmatpush.msra.mxu0 %v1055
        %v1057 = vand.u32 %v522, 4294901760
        %v1058 = vsub.f32 %v522, %v1057
        %v1059 = vand.u32 %v1058, 4294901760
        %v1060 = vsub.f32 %v1058, %v1059
        %v1061 = vand.u32 %v1060, 4294901760
        %1062 = vmatpush.msra.mxu0 %v1061
        %v1063 = vand.u32 %v520, 4294901760
        %1064 = vmatmul.f32.gmra.mxu0 %v1063
        %v1065 = vpop.f32.mrf.mxu0
        %v1066 = vadd.f32 %v965, %v1065
        %1067 = vdwg.mxu0
        %v1068 = vand.u32 %v582, 4294901760
        %v1069 = vsub.f32 %v582, %v1068
        %1070 = vmatpush.msra.mxu0 %v1069
        %v1071 = vand.u32 %v578, 4294901760
        %v1072 = vsub.f32 %v578, %v1071
        %1073 = vmatpush.msra.mxu0 %v1072
        %v1074 = vand.u32 %v574, 4294901760
        %v1075 = vsub.f32 %v574, %v1074
        %1076 = vmatpush.msra.mxu0 %v1075
        %v1077 = vand.u32 %v570, 4294901760
        %v1078 = vsub.f32 %v570, %v1077
        %1079 = vmatpush.msra.mxu0 %v1078
        %v1080 = vand.u32 %v566, 4294901760
        %v1081 = vsub.f32 %v566, %v1080
        %1082 = vmatpush.msra.mxu0 %v1081
        %v1083 = vand.u32 %v562, 4294901760
        %v1084 = vsub.f32 %v562, %v1083
        %1085 = vmatpush.msra.mxu0 %v1084
        %v1086 = vand.u32 %v558, 4294901760
        %v1087 = vsub.f32 %v558, %v1086
        %1088 = vmatpush.msra.mxu0 %v1087
        %v1089 = vand.u32 %v554, 4294901760
        %v1090 = vsub.f32 %v554, %v1089
        %1091 = vmatpush.msra.mxu0 %v1090
        %v1092 = vand.u32 %v550, 4294901760
        %v1093 = vsub.f32 %v550, %v1092
        %1094 = vmatpush.msra.mxu0 %v1093
        %v1095 = vand.u32 %v546, 4294901760
        %v1096 = vsub.f32 %v546, %v1095
        %1097 = vmatpush.msra.mxu0 %v1096
        %v1098 = vand.u32 %v542, 4294901760
        %v1099 = vsub.f32 %v542, %v1098
        %1100 = vmatpush.msra.mxu0 %v1099
        %v1101 = vand.u32 %v538, 4294901760
        %v1102 = vsub.f32 %v538, %v1101
        %1103 = vmatpush.msra.mxu0 %v1102
        %v1104 = vand.u32 %v534, 4294901760
        %v1105 = vsub.f32 %v534, %v1104
        %1106 = vmatpush.msra.mxu0 %v1105
        %v1107 = vand.u32 %v530, 4294901760
        %v1108 = vsub.f32 %v530, %v1107
        %1109 = vmatpush.msra.mxu0 %v1108
        %v1110 = vand.u32 %v526, 4294901760
        %v1111 = vsub.f32 %v526, %v1110
        %1112 = vmatpush.msra.mxu0 %v1111
        %v1113 = vand.u32 %v522, 4294901760
        %v1114 = vsub.f32 %v522, %v1113
        %1115 = vmatpush.msra.mxu0 %v1114
        %v1116 = vand.u32 %v520, 4294901760
        %v1117 = vsub.f32 %v520, %v1116
        %1118 = vmatmul.f32.gmra.mxu0 %v1117
        %v1119 = vpop.f32.mrf.mxu0
        %v1120 = vadd.f32 %v1066, %v1119
        %1121 = vdwg.mxu0
        %v1122 = vand.u32 %v582, 4294901760
        %1123 = vmatpush.msra.mxu0 %v1122
        %v1124 = vand.u32 %v578, 4294901760
        %1125 = vmatpush.msra.mxu0 %v1124
        %v1126 = vand.u32 %v574, 4294901760
        %1127 = vmatpush.msra.mxu0 %v1126
        %v1128 = vand.u32 %v570, 4294901760
        %1129 = vmatpush.msra.mxu0 %v1128
        %v1130 = vand.u32 %v566, 4294901760
        %1131 = vmatpush.msra.mxu0 %v1130
        %v1132 = vand.u32 %v562, 4294901760
        %1133 = vmatpush.msra.mxu0 %v1132
        %v1134 = vand.u32 %v558, 4294901760
        %1135 = vmatpush.msra.mxu0 %v1134
        %v1136 = vand.u32 %v554, 4294901760
        %1137 = vmatpush.msra.mxu0 %v1136
        %v1138 = vand.u32 %v550, 4294901760
        %1139 = vmatpush.msra.mxu0 %v1138
        %v1140 = vand.u32 %v546, 4294901760
        %1141 = vmatpush.msra.mxu0 %v1140
        %v1142 = vand.u32 %v542, 4294901760
        %1143 = vmatpush.msra.mxu0 %v1142
        %v1144 = vand.u32 %v538, 4294901760
        %1145 = vmatpush.msra.mxu0 %v1144
        %v1146 = vand.u32 %v534, 4294901760
        %1147 = vmatpush.msra.mxu0 %v1146
        %v1148 = vand.u32 %v530, 4294901760
        %1149 = vmatpush.msra.mxu0 %v1148
        %v1150 = vand.u32 %v526, 4294901760
        %1151 = vmatpush.msra.mxu0 %v1150
        %v1152 = vand.u32 %v522, 4294901760
        %1153 = vmatpush.msra.mxu0 %v1152
        %v1154 = vand.u32 %v520, 4294901760
        %v1155 = vsub.f32 %v520, %v1154
        %v1156 = vand.u32 %v1155, 4294901760
        %1157 = vmatmul.f32.gmra.mxu0 %v1156
        %v1158 = vpop.f32.mrf.mxu0
        %v1159 = vadd.f32 %v1120, %v1158
        %1160 = vdwg.mxu0
        %v1161 = vand.u32 %v582, 4294901760
        %v1162 = vsub.f32 %v582, %v1161
        %v1163 = vand.u32 %v1162, 4294901760
        %1164 = vmatpush.msra.mxu0 %v1163
        %v1165 = vand.u32 %v578, 4294901760
        %v1166 = vsub.f32 %v578, %v1165
        %v1167 = vand.u32 %v1166, 4294901760
        %1168 = vmatpush.msra.mxu0 %v1167
        %v1169 = vand.u32 %v574, 4294901760
        %v1170 = vsub.f32 %v574, %v1169
        %v1171 = vand.u32 %v1170, 4294901760
        %1172 = vmatpush.msra.mxu0 %v1171
        %v1173 = vand.u32 %v570, 4294901760
        %v1174 = vsub.f32 %v570, %v1173
        %v1175 = vand.u32 %v1174, 4294901760
        %1176 = vmatpush.msra.mxu0 %v1175
        %v1177 = vand.u32 %v566, 4294901760
        %v1178 = vsub.f32 %v566, %v1177
        %v1179 = vand.u32 %v1178, 4294901760
        %1180 = vmatpush.msra.mxu0 %v1179
        %v1181 = vand.u32 %v562, 4294901760
        %v1182 = vsub.f32 %v562, %v1181
        %v1183 = vand.u32 %v1182, 4294901760
        %1184 = vmatpush.msra.mxu0 %v1183
        %v1185 = vand.u32 %v558, 4294901760
        %v1186 = vsub.f32 %v558, %v1185
        %v1187 = vand.u32 %v1186, 4294901760
        %1188 = vmatpush.msra.mxu0 %v1187
        %v1189 = vand.u32 %v554, 4294901760
        %v1190 = vsub.f32 %v554, %v1189
        %v1191 = vand.u32 %v1190, 4294901760
        %1192 = vmatpush.msra.mxu0 %v1191
        %v1193 = vand.u32 %v550, 4294901760
        %v1194 = vsub.f32 %v550, %v1193
        %v1195 = vand.u32 %v1194, 4294901760
        %1196 = vmatpush.msra.mxu0 %v1195
        %v1197 = vand.u32 %v546, 4294901760
        %v1198 = vsub.f32 %v546, %v1197
        %v1199 = vand.u32 %v1198, 4294901760
        %1200 = vmatpush.msra.mxu0 %v1199
        %v1201 = vand.u32 %v542, 4294901760
        %v1202 = vsub.f32 %v542, %v1201
        %v1203 = vand.u32 %v1202, 4294901760
        %1204 = vmatpush.msra.mxu0 %v1203
        %v1205 = vand.u32 %v538, 4294901760
        %v1206 = vsub.f32 %v538, %v1205
        %v1207 = vand.u32 %v1206, 4294901760
        %1208 = vmatpush.msra.mxu0 %v1207
        %v1209 = vand.u32 %v534, 4294901760
        %v1210 = vsub.f32 %v534, %v1209
        %v1211 = vand.u32 %v1210, 4294901760
        %1212 = vmatpush.msra.mxu0 %v1211
        %v1213 = vand.u32 %v530, 4294901760
        %v1214 = vsub.f32 %v530, %v1213
        %v1215 = vand.u32 %v1214, 4294901760
        %1216 = vmatpush.msra.mxu0 %v1215
        %v1217 = vand.u32 %v526, 4294901760
        %v1218 = vsub.f32 %v526, %v1217
        %v1219 = vand.u32 %v1218, 4294901760
        %1220 = vmatpush.msra.mxu0 %v1219
        %v1221 = vand.u32 %v522, 4294901760
        %v1222 = vsub.f32 %v522, %v1221
        %v1223 = vand.u32 %v1222, 4294901760
        %1224 = vmatpush.msra.mxu0 %v1223
        %v1225 = vand.u32 %v520, 4294901760
        %1226 = vmatmul.f32.gmra.mxu0 %v1225
        %v1227 = vpop.f32.mrf.mxu0
        %v1228 = vadd.f32 %v1159, %v1227
        %1229 = vdwg.mxu0
        %v1230 = vand.u32 %v582, 4294901760
        %1231 = vmatpush.msra.mxu0 %v1230
        %v1232 = vand.u32 %v578, 4294901760
        %1233 = vmatpush.msra.mxu0 %v1232
        %v1234 = vand.u32 %v574, 4294901760
        %1235 = vmatpush.msra.mxu0 %v1234
        %v1236 = vand.u32 %v570, 4294901760
        %1237 = vmatpush.msra.mxu0 %v1236
        %v1238 = vand.u32 %v566, 4294901760
        %1239 = vmatpush.msra.mxu0 %v1238
        %v1240 = vand.u32 %v562, 4294901760
        %1241 = vmatpush.msra.mxu0 %v1240
        %v1242 = vand.u32 %v558, 4294901760
        %1243 = vmatpush.msra.mxu0 %v1242
        %v1244 = vand.u32 %v554, 4294901760
        %1245 = vmatpush.msra.mxu0 %v1244
        %v1246 = vand.u32 %v550, 4294901760
        %1247 = vmatpush.msra.mxu0 %v1246
        %v1248 = vand.u32 %v546, 4294901760
        %1249 = vmatpush.msra.mxu0 %v1248
        %v1250 = vand.u32 %v542, 4294901760
        %1251 = vmatpush.msra.mxu0 %v1250
        %v1252 = vand.u32 %v538, 4294901760
        %1253 = vmatpush.msra.mxu0 %v1252
        %v1254 = vand.u32 %v534, 4294901760
        %1255 = vmatpush.msra.mxu0 %v1254
        %v1256 = vand.u32 %v530, 4294901760
        %1257 = vmatpush.msra.mxu0 %v1256
        %v1258 = vand.u32 %v526, 4294901760
        %1259 = vmatpush.msra.mxu0 %v1258
        %v1260 = vand.u32 %v522, 4294901760
        %1261 = vmatpush.msra.mxu0 %v1260
        %v1262 = vand.u32 %v520, 4294901760
        %1263 = vmatmul.f32.gmra.mxu0 %v1262
        %v1264 = vpop.f32.mrf.mxu0
        %v1265 = vadd.f32 %v1228, %v1264
        %1266 = vdwg.mxu0
        %v1267 = vand.u32 %v583, 4294901760
        %1268 = vmatpush.msra.mxu0 %v1267
        %v1269 = vand.u32 %v579, 4294901760
        %1270 = vmatpush.msra.mxu0 %v1269
        %v1271 = vand.u32 %v575, 4294901760
        %1272 = vmatpush.msra.mxu0 %v1271
        %v1273 = vand.u32 %v571, 4294901760
        %1274 = vmatpush.msra.mxu0 %v1273
        %v1275 = vand.u32 %v567, 4294901760
        %1276 = vmatpush.msra.mxu0 %v1275
        %v1277 = vand.u32 %v563, 4294901760
        %1278 = vmatpush.msra.mxu0 %v1277
        %v1279 = vand.u32 %v559, 4294901760
        %1280 = vmatpush.msra.mxu0 %v1279
        %v1281 = vand.u32 %v555, 4294901760
        %1282 = vmatpush.msra.mxu0 %v1281
        %v1283 = vand.u32 %v551, 4294901760
        %1284 = vmatpush.msra.mxu0 %v1283
        %v1285 = vand.u32 %v547, 4294901760
        %1286 = vmatpush.msra.mxu0 %v1285
        %v1287 = vand.u32 %v543, 4294901760
        %1288 = vmatpush.msra.mxu0 %v1287
        %v1289 = vand.u32 %v539, 4294901760
        %1290 = vmatpush.msra.mxu0 %v1289
        %v1291 = vand.u32 %v535, 4294901760
        %1292 = vmatpush.msra.mxu0 %v1291
        %v1293 = vand.u32 %v531, 4294901760
        %1294 = vmatpush.msra.mxu0 %v1293
        %v1295 = vand.u32 %v527, 4294901760
        %1296 = vmatpush.msra.mxu0 %v1295
        %v1297 = vand.u32 %v523, 4294901760
        %1298 = vmatpush.msra.mxu0 %v1297
        %v1299 = vand.u32 %v520, 4294901760
        %v1300 = vsub.f32 %v520, %v1299
        %v1301 = vand.u32 %v1300, 4294901760
        %v1302 = vsub.f32 %v1300, %v1301
        %v1303 = vand.u32 %v1302, 4294901760
        %1304 = vmatmul.f32.gmra.mxu0 %v1303
        %v1305 = vpop.f32.mrf.mxu0
        %v1306 = vadd.f32 0.0, %v1305
        %1307 = vdwg.mxu0
        %v1308 = vand.u32 %v583, 4294901760
        %v1309 = vsub.f32 %v583, %v1308
        %v1310 = vand.u32 %v1309, 4294901760
        %v1311 = vsub.f32 %v1309, %v1310
        %v1312 = vand.u32 %v1311, 4294901760
        %1313 = vmatpush.msra.mxu0 %v1312
        %v1314 = vand.u32 %v579, 4294901760
        %v1315 = vsub.f32 %v579, %v1314
        %v1316 = vand.u32 %v1315, 4294901760
        %v1317 = vsub.f32 %v1315, %v1316
        %v1318 = vand.u32 %v1317, 4294901760
        %1319 = vmatpush.msra.mxu0 %v1318
        %v1320 = vand.u32 %v575, 4294901760
        %v1321 = vsub.f32 %v575, %v1320
        %v1322 = vand.u32 %v1321, 4294901760
        %v1323 = vsub.f32 %v1321, %v1322
        %v1324 = vand.u32 %v1323, 4294901760
        %1325 = vmatpush.msra.mxu0 %v1324
        %v1326 = vand.u32 %v571, 4294901760
        %v1327 = vsub.f32 %v571, %v1326
        %v1328 = vand.u32 %v1327, 4294901760
        %v1329 = vsub.f32 %v1327, %v1328
        %v1330 = vand.u32 %v1329, 4294901760
        %1331 = vmatpush.msra.mxu0 %v1330
        %v1332 = vand.u32 %v567, 4294901760
        %v1333 = vsub.f32 %v567, %v1332
        %v1334 = vand.u32 %v1333, 4294901760
        %v1335 = vsub.f32 %v1333, %v1334
        %v1336 = vand.u32 %v1335, 4294901760
        %1337 = vmatpush.msra.mxu0 %v1336
        %v1338 = vand.u32 %v563, 4294901760
        %v1339 = vsub.f32 %v563, %v1338
        %v1340 = vand.u32 %v1339, 4294901760
        %v1341 = vsub.f32 %v1339, %v1340
        %v1342 = vand.u32 %v1341, 4294901760
        %1343 = vmatpush.msra.mxu0 %v1342
        %v1344 = vand.u32 %v559, 4294901760
        %v1345 = vsub.f32 %v559, %v1344
        %v1346 = vand.u32 %v1345, 4294901760
        %v1347 = vsub.f32 %v1345, %v1346
        %v1348 = vand.u32 %v1347, 4294901760
        %1349 = vmatpush.msra.mxu0 %v1348
        %v1350 = vand.u32 %v555, 4294901760
        %v1351 = vsub.f32 %v555, %v1350
        %v1352 = vand.u32 %v1351, 4294901760
        %v1353 = vsub.f32 %v1351, %v1352
        %v1354 = vand.u32 %v1353, 4294901760
        %1355 = vmatpush.msra.mxu0 %v1354
        %v1356 = vand.u32 %v551, 4294901760
        %v1357 = vsub.f32 %v551, %v1356
        %v1358 = vand.u32 %v1357, 4294901760
        %v1359 = vsub.f32 %v1357, %v1358
        %v1360 = vand.u32 %v1359, 4294901760
        %1361 = vmatpush.msra.mxu0 %v1360
        %v1362 = vand.u32 %v547, 4294901760
        %v1363 = vsub.f32 %v547, %v1362
        %v1364 = vand.u32 %v1363, 4294901760
        %v1365 = vsub.f32 %v1363, %v1364
        %v1366 = vand.u32 %v1365, 4294901760
        %1367 = vmatpush.msra.mxu0 %v1366
        %v1368 = vand.u32 %v543, 4294901760
        %v1369 = vsub.f32 %v543, %v1368
        %v1370 = vand.u32 %v1369, 4294901760
        %v1371 = vsub.f32 %v1369, %v1370
        %v1372 = vand.u32 %v1371, 4294901760
        %1373 = vmatpush.msra.mxu0 %v1372
        %v1374 = vand.u32 %v539, 4294901760
        %v1375 = vsub.f32 %v539, %v1374
        %v1376 = vand.u32 %v1375, 4294901760
        %v1377 = vsub.f32 %v1375, %v1376
        %v1378 = vand.u32 %v1377, 4294901760
        %1379 = vmatpush.msra.mxu0 %v1378
        %v1380 = vand.u32 %v535, 4294901760
        %v1381 = vsub.f32 %v535, %v1380
        %v1382 = vand.u32 %v1381, 4294901760
        %v1383 = vsub.f32 %v1381, %v1382
        %v1384 = vand.u32 %v1383, 4294901760
        %1385 = vmatpush.msra.mxu0 %v1384
        %v1386 = vand.u32 %v531, 4294901760
        %v1387 = vsub.f32 %v531, %v1386
        %v1388 = vand.u32 %v1387, 4294901760
        %v1389 = vsub.f32 %v1387, %v1388
        %v1390 = vand.u32 %v1389, 4294901760
        %1391 = vmatpush.msra.mxu0 %v1390
        %v1392 = vand.u32 %v527, 4294901760
        %v1393 = vsub.f32 %v527, %v1392
        %v1394 = vand.u32 %v1393, 4294901760
        %v1395 = vsub.f32 %v1393, %v1394
        %v1396 = vand.u32 %v1395, 4294901760
        %1397 = vmatpush.msra.mxu0 %v1396
        %v1398 = vand.u32 %v523, 4294901760
        %v1399 = vsub.f32 %v523, %v1398
        %v1400 = vand.u32 %v1399, 4294901760
        %v1401 = vsub.f32 %v1399, %v1400
        %v1402 = vand.u32 %v1401, 4294901760
        %1403 = vmatpush.msra.mxu0 %v1402
        %v1404 = vand.u32 %v520, 4294901760
        %1405 = vmatmul.f32.gmra.mxu0 %v1404
        %v1406 = vpop.f32.mrf.mxu0
        %v1407 = vadd.f32 %v1306, %v1406
        %1408 = vdwg.mxu0
        %v1409 = vand.u32 %v583, 4294901760
        %v1410 = vsub.f32 %v583, %v1409
        %1411 = vmatpush.msra.mxu0 %v1410
        %v1412 = vand.u32 %v579, 4294901760
        %v1413 = vsub.f32 %v579, %v1412
        %1414 = vmatpush.msra.mxu0 %v1413
        %v1415 = vand.u32 %v575, 4294901760
        %v1416 = vsub.f32 %v575, %v1415
        %1417 = vmatpush.msra.mxu0 %v1416
        %v1418 = vand.u32 %v571, 4294901760
        %v1419 = vsub.f32 %v571, %v1418
        %1420 = vmatpush.msra.mxu0 %v1419
        %v1421 = vand.u32 %v567, 4294901760
        %v1422 = vsub.f32 %v567, %v1421
        %1423 = vmatpush.msra.mxu0 %v1422
        %v1424 = vand.u32 %v563, 4294901760
        %v1425 = vsub.f32 %v563, %v1424
        %1426 = vmatpush.msra.mxu0 %v1425
        %v1427 = vand.u32 %v559, 4294901760
        %v1428 = vsub.f32 %v559, %v1427
        %1429 = vmatpush.msra.mxu0 %v1428
        %v1430 = vand.u32 %v555, 4294901760
        %v1431 = vsub.f32 %v555, %v1430
        %1432 = vmatpush.msra.mxu0 %v1431
        %v1433 = vand.u32 %v551, 4294901760
        %v1434 = vsub.f32 %v551, %v1433
        %1435 = vmatpush.msra.mxu0 %v1434
        %v1436 = vand.u32 %v547, 4294901760
        %v1437 = vsub.f32 %v547, %v1436
        %1438 = vmatpush.msra.mxu0 %v1437
        %v1439 = vand.u32 %v543, 4294901760
        %v1440 = vsub.f32 %v543, %v1439
        %1441 = vmatpush.msra.mxu0 %v1440
        %v1442 = vand.u32 %v539, 4294901760
        %v1443 = vsub.f32 %v539, %v1442
        %1444 = vmatpush.msra.mxu0 %v1443
        %v1445 = vand.u32 %v535, 4294901760
        %v1446 = vsub.f32 %v535, %v1445
        %1447 = vmatpush.msra.mxu0 %v1446
        %v1448 = vand.u32 %v531, 4294901760
        %v1449 = vsub.f32 %v531, %v1448
        %1450 = vmatpush.msra.mxu0 %v1449
        %v1451 = vand.u32 %v527, 4294901760
        %v1452 = vsub.f32 %v527, %v1451
        %1453 = vmatpush.msra.mxu0 %v1452
        %v1454 = vand.u32 %v523, 4294901760
        %v1455 = vsub.f32 %v523, %v1454
        %1456 = vmatpush.msra.mxu0 %v1455
        %v1457 = vand.u32 %v520, 4294901760
        %v1458 = vsub.f32 %v520, %v1457
        %1459 = vmatmul.f32.gmra.mxu0 %v1458
        %v1460 = vpop.f32.mrf.mxu0
        %v1461 = vadd.f32 %v1407, %v1460
        %1462 = vdwg.mxu0
        %v1463 = vand.u32 %v583, 4294901760
        %1464 = vmatpush.msra.mxu0 %v1463
        %v1465 = vand.u32 %v579, 4294901760
        %1466 = vmatpush.msra.mxu0 %v1465
        %v1467 = vand.u32 %v575, 4294901760
        %1468 = vmatpush.msra.mxu0 %v1467
        %v1469 = vand.u32 %v571, 4294901760
        %1470 = vmatpush.msra.mxu0 %v1469
        %v1471 = vand.u32 %v567, 4294901760
        %1472 = vmatpush.msra.mxu0 %v1471
        %v1473 = vand.u32 %v563, 4294901760
        %1474 = vmatpush.msra.mxu0 %v1473
        %v1475 = vand.u32 %v559, 4294901760
        %1476 = vmatpush.msra.mxu0 %v1475
        %v1477 = vand.u32 %v555, 4294901760
        %1478 = vmatpush.msra.mxu0 %v1477
        %v1479 = vand.u32 %v551, 4294901760
        %1480 = vmatpush.msra.mxu0 %v1479
        %v1481 = vand.u32 %v547, 4294901760
        %1482 = vmatpush.msra.mxu0 %v1481
        %v1483 = vand.u32 %v543, 4294901760
        %1484 = vmatpush.msra.mxu0 %v1483
        %v1485 = vand.u32 %v539, 4294901760
        %1486 = vmatpush.msra.mxu0 %v1485
        %v1487 = vand.u32 %v535, 4294901760
        %1488 = vmatpush.msra.mxu0 %v1487
        %v1489 = vand.u32 %v531, 4294901760
        %1490 = vmatpush.msra.mxu0 %v1489
        %v1491 = vand.u32 %v527, 4294901760
        %1492 = vmatpush.msra.mxu0 %v1491
        %v1493 = vand.u32 %v523, 4294901760
        %1494 = vmatpush.msra.mxu0 %v1493
        %v1495 = vand.u32 %v520, 4294901760
        %v1496 = vsub.f32 %v520, %v1495
        %v1497 = vand.u32 %v1496, 4294901760
        %1498 = vmatmul.f32.gmra.mxu0 %v1497
        %v1499 = vpop.f32.mrf.mxu0
        %v1500 = vadd.f32 %v1461, %v1499
        %1501 = vdwg.mxu0
        %v1502 = vand.u32 %v583, 4294901760
        %v1503 = vsub.f32 %v583, %v1502
        %v1504 = vand.u32 %v1503, 4294901760
        %1505 = vmatpush.msra.mxu0 %v1504
        %v1506 = vand.u32 %v579, 4294901760
        %v1507 = vsub.f32 %v579, %v1506
        %v1508 = vand.u32 %v1507, 4294901760
        %1509 = vmatpush.msra.mxu0 %v1508
        %v1510 = vand.u32 %v575, 4294901760
        %v1511 = vsub.f32 %v575, %v1510
        %v1512 = vand.u32 %v1511, 4294901760
        %1513 = vmatpush.msra.mxu0 %v1512
        %v1514 = vand.u32 %v571, 4294901760
        %v1515 = vsub.f32 %v571, %v1514
        %v1516 = vand.u32 %v1515, 4294901760
        %1517 = vmatpush.msra.mxu0 %v1516
        %v1518 = vand.u32 %v567, 4294901760
        %v1519 = vsub.f32 %v567, %v1518
        %v1520 = vand.u32 %v1519, 4294901760
        %1521 = vmatpush.msra.mxu0 %v1520
        %v1522 = vand.u32 %v563, 4294901760
        %v1523 = vsub.f32 %v563, %v1522
        %v1524 = vand.u32 %v1523, 4294901760
        %1525 = vmatpush.msra.mxu0 %v1524
        %v1526 = vand.u32 %v559, 4294901760
        %v1527 = vsub.f32 %v559, %v1526
        %v1528 = vand.u32 %v1527, 4294901760
        %1529 = vmatpush.msra.mxu0 %v1528
        %v1530 = vand.u32 %v555, 4294901760
        %v1531 = vsub.f32 %v555, %v1530
        %v1532 = vand.u32 %v1531, 4294901760
        %1533 = vmatpush.msra.mxu0 %v1532
        %v1534 = vand.u32 %v551, 4294901760
        %v1535 = vsub.f32 %v551, %v1534
        %v1536 = vand.u32 %v1535, 4294901760
        %1537 = vmatpush.msra.mxu0 %v1536
        %v1538 = vand.u32 %v547, 4294901760
        %v1539 = vsub.f32 %v547, %v1538
        %v1540 = vand.u32 %v1539, 4294901760
        %1541 = vmatpush.msra.mxu0 %v1540
        %v1542 = vand.u32 %v543, 4294901760
        %v1543 = vsub.f32 %v543, %v1542
        %v1544 = vand.u32 %v1543, 4294901760
        %1545 = vmatpush.msra.mxu0 %v1544
        %v1546 = vand.u32 %v539, 4294901760
        %v1547 = vsub.f32 %v539, %v1546
        %v1548 = vand.u32 %v1547, 4294901760
        %1549 = vmatpush.msra.mxu0 %v1548
        %v1550 = vand.u32 %v535, 4294901760
        %v1551 = vsub.f32 %v535, %v1550
        %v1552 = vand.u32 %v1551, 4294901760
        %1553 = vmatpush.msra.mxu0 %v1552
        %v1554 = vand.u32 %v531, 4294901760
        %v1555 = vsub.f32 %v531, %v1554
        %v1556 = vand.u32 %v1555, 4294901760
        %1557 = vmatpush.msra.mxu0 %v1556
        %v1558 = vand.u32 %v527, 4294901760
        %v1559 = vsub.f32 %v527, %v1558
        %v1560 = vand.u32 %v1559, 4294901760
        %1561 = vmatpush.msra.mxu0 %v1560
        %v1562 = vand.u32 %v523, 4294901760
        %v1563 = vsub.f32 %v523, %v1562
        %v1564 = vand.u32 %v1563, 4294901760
        %1565 = vmatpush.msra.mxu0 %v1564
        %v1566 = vand.u32 %v520, 4294901760
        %1567 = vmatmul.f32.gmra.mxu0 %v1566
        %v1568 = vpop.f32.mrf.mxu0
        %v1569 = vadd.f32 %v1500, %v1568
        %1570 = vdwg.mxu0
        %v1571 = vand.u32 %v583, 4294901760
        %1572 = vmatpush.msra.mxu0 %v1571
        %v1573 = vand.u32 %v579, 4294901760
        %1574 = vmatpush.msra.mxu0 %v1573
        %v1575 = vand.u32 %v575, 4294901760
        %1576 = vmatpush.msra.mxu0 %v1575
        %v1577 = vand.u32 %v571, 4294901760
        %1578 = vmatpush.msra.mxu0 %v1577
        %v1579 = vand.u32 %v567, 4294901760
        %1580 = vmatpush.msra.mxu0 %v1579
        %v1581 = vand.u32 %v563, 4294901760
        %1582 = vmatpush.msra.mxu0 %v1581
        %v1583 = vand.u32 %v559, 4294901760
        %1584 = vmatpush.msra.mxu0 %v1583
        %v1585 = vand.u32 %v555, 4294901760
        %1586 = vmatpush.msra.mxu0 %v1585
        %v1587 = vand.u32 %v551, 4294901760
        %1588 = vmatpush.msra.mxu0 %v1587
        %v1589 = vand.u32 %v547, 4294901760
        %1590 = vmatpush.msra.mxu0 %v1589
        %v1591 = vand.u32 %v543, 4294901760
        %1592 = vmatpush.msra.mxu0 %v1591
        %v1593 = vand.u32 %v539, 4294901760
        %1594 = vmatpush.msra.mxu0 %v1593
        %v1595 = vand.u32 %v535, 4294901760
        %1596 = vmatpush.msra.mxu0 %v1595
        %v1597 = vand.u32 %v531, 4294901760
        %1598 = vmatpush.msra.mxu0 %v1597
        %v1599 = vand.u32 %v527, 4294901760
        %1600 = vmatpush.msra.mxu0 %v1599
        %v1601 = vand.u32 %v523, 4294901760
        %1602 = vmatpush.msra.mxu0 %v1601
        %v1603 = vand.u32 %v520, 4294901760
        %1604 = vmatmul.f32.gmra.mxu0 %v1603
        %v1605 = vpop.f32.mrf.mxu0
        %v1606 = vadd.f32 %v1569, %v1605
        %1607 = vdwg.mxu0
        %v1608 = vand.u32 %v584, 4294901760
        %1609 = vmatpush.msra.mxu0 %v1608
        %v1610 = vand.u32 %v580, 4294901760
        %1611 = vmatpush.msra.mxu0 %v1610
        %v1612 = vand.u32 %v576, 4294901760
        %1613 = vmatpush.msra.mxu0 %v1612
        %v1614 = vand.u32 %v572, 4294901760
        %1615 = vmatpush.msra.mxu0 %v1614
        %v1616 = vand.u32 %v568, 4294901760
        %1617 = vmatpush.msra.mxu0 %v1616
        %v1618 = vand.u32 %v564, 4294901760
        %1619 = vmatpush.msra.mxu0 %v1618
        %v1620 = vand.u32 %v560, 4294901760
        %1621 = vmatpush.msra.mxu0 %v1620
        %v1622 = vand.u32 %v556, 4294901760
        %1623 = vmatpush.msra.mxu0 %v1622
        %v1624 = vand.u32 %v552, 4294901760
        %1625 = vmatpush.msra.mxu0 %v1624
        %v1626 = vand.u32 %v548, 4294901760
        %1627 = vmatpush.msra.mxu0 %v1626
        %v1628 = vand.u32 %v544, 4294901760
        %1629 = vmatpush.msra.mxu0 %v1628
        %v1630 = vand.u32 %v540, 4294901760
        %1631 = vmatpush.msra.mxu0 %v1630
        %v1632 = vand.u32 %v536, 4294901760
        %1633 = vmatpush.msra.mxu0 %v1632
        %v1634 = vand.u32 %v532, 4294901760
        %1635 = vmatpush.msra.mxu0 %v1634
        %v1636 = vand.u32 %v528, 4294901760
        %1637 = vmatpush.msra.mxu0 %v1636
        %v1638 = vand.u32 %v524, 4294901760
        %1639 = vmatpush.msra.mxu0 %v1638
        %v1640 = vand.u32 %v520, 4294901760
        %v1641 = vsub.f32 %v520, %v1640
        %v1642 = vand.u32 %v1641, 4294901760
        %v1643 = vsub.f32 %v1641, %v1642
        %v1644 = vand.u32 %v1643, 4294901760
        %1645 = vmatmul.f32.gmra.mxu0 %v1644
        %v1646 = vpop.f32.mrf.mxu0
        %v1647 = vadd.f32 0.0, %v1646
        %1648 = vdwg.mxu0
        %v1649 = vand.u32 %v584, 4294901760
        %v1650 = vsub.f32 %v584, %v1649
        %v1651 = vand.u32 %v1650, 4294901760
        %v1652 = vsub.f32 %v1650, %v1651
        %v1653 = vand.u32 %v1652, 4294901760
        %1654 = vmatpush.msra.mxu0 %v1653
        %v1655 = vand.u32 %v580, 4294901760
        %v1656 = vsub.f32 %v580, %v1655
        %v1657 = vand.u32 %v1656, 4294901760
        %v1658 = vsub.f32 %v1656, %v1657
        %v1659 = vand.u32 %v1658, 4294901760
        %1660 = vmatpush.msra.mxu0 %v1659
        %v1661 = vand.u32 %v576, 4294901760
        %v1662 = vsub.f32 %v576, %v1661
        %v1663 = vand.u32 %v1662, 4294901760
        %v1664 = vsub.f32 %v1662, %v1663
        %v1665 = vand.u32 %v1664, 4294901760
        %1666 = vmatpush.msra.mxu0 %v1665
        %v1667 = vand.u32 %v572, 4294901760
        %v1668 = vsub.f32 %v572, %v1667
        %v1669 = vand.u32 %v1668, 4294901760
        %v1670 = vsub.f32 %v1668, %v1669
        %v1671 = vand.u32 %v1670, 4294901760
        %1672 = vmatpush.msra.mxu0 %v1671
        %v1673 = vand.u32 %v568, 4294901760
        %v1674 = vsub.f32 %v568, %v1673
        %v1675 = vand.u32 %v1674, 4294901760
        %v1676 = vsub.f32 %v1674, %v1675
        %v1677 = vand.u32 %v1676, 4294901760
        %1678 = vmatpush.msra.mxu0 %v1677
        %v1679 = vand.u32 %v564, 4294901760
        %v1680 = vsub.f32 %v564, %v1679
        %v1681 = vand.u32 %v1680, 4294901760
        %v1682 = vsub.f32 %v1680, %v1681
        %v1683 = vand.u32 %v1682, 4294901760
        %1684 = vmatpush.msra.mxu0 %v1683
        %v1685 = vand.u32 %v560, 4294901760
        %v1686 = vsub.f32 %v560, %v1685
        %v1687 = vand.u32 %v1686, 4294901760
        %v1688 = vsub.f32 %v1686, %v1687
        %v1689 = vand.u32 %v1688, 4294901760
        %1690 = vmatpush.msra.mxu0 %v1689
        %v1691 = vand.u32 %v556, 4294901760
        %v1692 = vsub.f32 %v556, %v1691
        %v1693 = vand.u32 %v1692, 4294901760
        %v1694 = vsub.f32 %v1692, %v1693
        %v1695 = vand.u32 %v1694, 4294901760
        %1696 = vmatpush.msra.mxu0 %v1695
        %v1697 = vand.u32 %v552, 4294901760
        %v1698 = vsub.f32 %v552, %v1697
        %v1699 = vand.u32 %v1698, 4294901760
        %v1700 = vsub.f32 %v1698, %v1699
        %v1701 = vand.u32 %v1700, 4294901760
        %1702 = vmatpush.msra.mxu0 %v1701
        %v1703 = vand.u32 %v548, 4294901760
        %v1704 = vsub.f32 %v548, %v1703
        %v1705 = vand.u32 %v1704, 4294901760
        %v1706 = vsub.f32 %v1704, %v1705
        %v1707 = vand.u32 %v1706, 4294901760
        %1708 = vmatpush.msra.mxu0 %v1707
        %v1709 = vand.u32 %v544, 4294901760
        %v1710 = vsub.f32 %v544, %v1709
        %v1711 = vand.u32 %v1710, 4294901760
        %v1712 = vsub.f32 %v1710, %v1711
        %v1713 = vand.u32 %v1712, 4294901760
        %1714 = vmatpush.msra.mxu0 %v1713
        %v1715 = vand.u32 %v540, 4294901760
        %v1716 = vsub.f32 %v540, %v1715
        %v1717 = vand.u32 %v1716, 4294901760
        %v1718 = vsub.f32 %v1716, %v1717
        %v1719 = vand.u32 %v1718, 4294901760
        %1720 = vmatpush.msra.mxu0 %v1719
        %v1721 = vand.u32 %v536, 4294901760
        %v1722 = vsub.f32 %v536, %v1721
        %v1723 = vand.u32 %v1722, 4294901760
        %v1724 = vsub.f32 %v1722, %v1723
        %v1725 = vand.u32 %v1724, 4294901760
        %1726 = vmatpush.msra.mxu0 %v1725
        %v1727 = vand.u32 %v532, 4294901760
        %v1728 = vsub.f32 %v532, %v1727
        %v1729 = vand.u32 %v1728, 4294901760
        %v1730 = vsub.f32 %v1728, %v1729
        %v1731 = vand.u32 %v1730, 4294901760
        %1732 = vmatpush.msra.mxu0 %v1731
        %v1733 = vand.u32 %v528, 4294901760
        %v1734 = vsub.f32 %v528, %v1733
        %v1735 = vand.u32 %v1734, 4294901760
        %v1736 = vsub.f32 %v1734, %v1735
        %v1737 = vand.u32 %v1736, 4294901760
        %1738 = vmatpush.msra.mxu0 %v1737
        %v1739 = vand.u32 %v524, 4294901760
        %v1740 = vsub.f32 %v524, %v1739
        %v1741 = vand.u32 %v1740, 4294901760
        %v1742 = vsub.f32 %v1740, %v1741
        %v1743 = vand.u32 %v1742, 4294901760
        %1744 = vmatpush.msra.mxu0 %v1743
        %v1745 = vand.u32 %v520, 4294901760
        %1746 = vmatmul.f32.gmra.mxu0 %v1745
        %v1747 = vpop.f32.mrf.mxu0
        %v1748 = vadd.f32 %v1647, %v1747
        %1749 = vdwg.mxu0
        %v1750 = vand.u32 %v584, 4294901760
        %v1751 = vsub.f32 %v584, %v1750
        %1752 = vmatpush.msra.mxu0 %v1751
        %v1753 = vand.u32 %v580, 4294901760
        %v1754 = vsub.f32 %v580, %v1753
        %1755 = vmatpush.msra.mxu0 %v1754
        %v1756 = vand.u32 %v576, 4294901760
        %v1757 = vsub.f32 %v576, %v1756
        %1758 = vmatpush.msra.mxu0 %v1757
        %v1759 = vand.u32 %v572, 4294901760
        %v1760 = vsub.f32 %v572, %v1759
        %1761 = vmatpush.msra.mxu0 %v1760
        %v1762 = vand.u32 %v568, 4294901760
        %v1763 = vsub.f32 %v568, %v1762
        %1764 = vmatpush.msra.mxu0 %v1763
        %v1765 = vand.u32 %v564, 4294901760
        %v1766 = vsub.f32 %v564, %v1765
        %1767 = vmatpush.msra.mxu0 %v1766
        %v1768 = vand.u32 %v560, 4294901760
        %v1769 = vsub.f32 %v560, %v1768
        %1770 = vmatpush.msra.mxu0 %v1769
        %v1771 = vand.u32 %v556, 4294901760
        %v1772 = vsub.f32 %v556, %v1771
        %1773 = vmatpush.msra.mxu0 %v1772
        %v1774 = vand.u32 %v552, 4294901760
        %v1775 = vsub.f32 %v552, %v1774
        %1776 = vmatpush.msra.mxu0 %v1775
        %v1777 = vand.u32 %v548, 4294901760
        %v1778 = vsub.f32 %v548, %v1777
        %1779 = vmatpush.msra.mxu0 %v1778
        %v1780 = vand.u32 %v544, 4294901760
        %v1781 = vsub.f32 %v544, %v1780
        %1782 = vmatpush.msra.mxu0 %v1781
        %v1783 = vand.u32 %v540, 4294901760
        %v1784 = vsub.f32 %v540, %v1783
        %1785 = vmatpush.msra.mxu0 %v1784
        %v1786 = vand.u32 %v536, 4294901760
        %v1787 = vsub.f32 %v536, %v1786
        %1788 = vmatpush.msra.mxu0 %v1787
        %v1789 = vand.u32 %v532, 4294901760
        %v1790 = vsub.f32 %v532, %v1789
        %1791 = vmatpush.msra.mxu0 %v1790
        %v1792 = vand.u32 %v528, 4294901760
        %v1793 = vsub.f32 %v528, %v1792
        %1794 = vmatpush.msra.mxu0 %v1793
        %v1795 = vand.u32 %v524, 4294901760
        %v1796 = vsub.f32 %v524, %v1795
        %1797 = vmatpush.msra.mxu0 %v1796
        %v1798 = vand.u32 %v520, 4294901760
        %v1799 = vsub.f32 %v520, %v1798
        %1800 = vmatmul.f32.gmra.mxu0 %v1799
        %v1801 = vpop.f32.mrf.mxu0
        %v1802 = vadd.f32 %v1748, %v1801
        %1803 = vdwg.mxu0
        %v1804 = vand.u32 %v584, 4294901760
        %1805 = vmatpush.msra.mxu0 %v1804
        %v1806 = vand.u32 %v580, 4294901760
        %1807 = vmatpush.msra.mxu0 %v1806
        %v1808 = vand.u32 %v576, 4294901760
        %1809 = vmatpush.msra.mxu0 %v1808
        %v1810 = vand.u32 %v572, 4294901760
        %1811 = vmatpush.msra.mxu0 %v1810
        %v1812 = vand.u32 %v568, 4294901760
        %1813 = vmatpush.msra.mxu0 %v1812
        %v1814 = vand.u32 %v564, 4294901760
        %1815 = vmatpush.msra.mxu0 %v1814
        %v1816 = vand.u32 %v560, 4294901760
        %1817 = vmatpush.msra.mxu0 %v1816
        %v1818 = vand.u32 %v556, 4294901760
        %1819 = vmatpush.msra.mxu0 %v1818
        %v1820 = vand.u32 %v552, 4294901760
        %1821 = vmatpush.msra.mxu0 %v1820
        %v1822 = vand.u32 %v548, 4294901760
        %1823 = vmatpush.msra.mxu0 %v1822
        %v1824 = vand.u32 %v544, 4294901760
        %1825 = vmatpush.msra.mxu0 %v1824
        %v1826 = vand.u32 %v540, 4294901760
        %1827 = vmatpush.msra.mxu0 %v1826
        %v1828 = vand.u32 %v536, 4294901760
        %1829 = vmatpush.msra.mxu0 %v1828
        %v1830 = vand.u32 %v532, 4294901760
        %1831 = vmatpush.msra.mxu0 %v1830
        %v1832 = vand.u32 %v528, 4294901760
        %1833 = vmatpush.msra.mxu0 %v1832
        %v1834 = vand.u32 %v524, 4294901760
        %1835 = vmatpush.msra.mxu0 %v1834
        %v1836 = vand.u32 %v520, 4294901760
        %v1837 = vsub.f32 %v520, %v1836
        %v1838 = vand.u32 %v1837, 4294901760
        %1839 = vmatmul.f32.gmra.mxu0 %v1838
        %v1840 = vpop.f32.mrf.mxu0
        %v1841 = vadd.f32 %v1802, %v1840
        %1842 = vdwg.mxu0
        %v1843 = vand.u32 %v584, 4294901760
        %v1844 = vsub.f32 %v584, %v1843
        %v1845 = vand.u32 %v1844, 4294901760
        %1846 = vmatpush.msra.mxu0 %v1845
        %v1847 = vand.u32 %v580, 4294901760
        %v1848 = vsub.f32 %v580, %v1847
        %v1849 = vand.u32 %v1848, 4294901760
        %1850 = vmatpush.msra.mxu0 %v1849
        %v1851 = vand.u32 %v576, 4294901760
        %v1852 = vsub.f32 %v576, %v1851
        %v1853 = vand.u32 %v1852, 4294901760
        %1854 = vmatpush.msra.mxu0 %v1853
        %v1855 = vand.u32 %v572, 4294901760
        %v1856 = vsub.f32 %v572, %v1855
        %v1857 = vand.u32 %v1856, 4294901760
        %1858 = vmatpush.msra.mxu0 %v1857
        %v1859 = vand.u32 %v568, 4294901760
        %v1860 = vsub.f32 %v568, %v1859
        %v1861 = vand.u32 %v1860, 4294901760
        %1862 = vmatpush.msra.mxu0 %v1861
        %v1863 = vand.u32 %v564, 4294901760
        %v1864 = vsub.f32 %v564, %v1863
        %v1865 = vand.u32 %v1864, 4294901760
        %1866 = vmatpush.msra.mxu0 %v1865
        %v1867 = vand.u32 %v560, 4294901760
        %v1868 = vsub.f32 %v560, %v1867
        %v1869 = vand.u32 %v1868, 4294901760
        %1870 = vmatpush.msra.mxu0 %v1869
        %v1871 = vand.u32 %v556, 4294901760
        %v1872 = vsub.f32 %v556, %v1871
        %v1873 = vand.u32 %v1872, 4294901760
        %1874 = vmatpush.msra.mxu0 %v1873
        %v1875 = vand.u32 %v552, 4294901760
        %v1876 = vsub.f32 %v552, %v1875
        %v1877 = vand.u32 %v1876, 4294901760
        %1878 = vmatpush.msra.mxu0 %v1877
        %v1879 = vand.u32 %v548, 4294901760
        %v1880 = vsub.f32 %v548, %v1879
        %v1881 = vand.u32 %v1880, 4294901760
        %1882 = vmatpush.msra.mxu0 %v1881
        %v1883 = vand.u32 %v544, 4294901760
        %v1884 = vsub.f32 %v544, %v1883
        %v1885 = vand.u32 %v1884, 4294901760
        %1886 = vmatpush.msra.mxu0 %v1885
        %v1887 = vand.u32 %v540, 4294901760
        %v1888 = vsub.f32 %v540, %v1887
        %v1889 = vand.u32 %v1888, 4294901760
        %1890 = vmatpush.msra.mxu0 %v1889
        %v1891 = vand.u32 %v536, 4294901760
        %v1892 = vsub.f32 %v536, %v1891
        %v1893 = vand.u32 %v1892, 4294901760
        %1894 = vmatpush.msra.mxu0 %v1893
        %v1895 = vand.u32 %v532, 4294901760
        %v1896 = vsub.f32 %v532, %v1895
        %v1897 = vand.u32 %v1896, 4294901760
        %1898 = vmatpush.msra.mxu0 %v1897
        %v1899 = vand.u32 %v528, 4294901760
        %v1900 = vsub.f32 %v528, %v1899
        %v1901 = vand.u32 %v1900, 4294901760
        %1902 = vmatpush.msra.mxu0 %v1901
        %v1903 = vand.u32 %v524, 4294901760
        %v1904 = vsub.f32 %v524, %v1903
        %v1905 = vand.u32 %v1904, 4294901760
        %1906 = vmatpush.msra.mxu0 %v1905
        %v1907 = vand.u32 %v520, 4294901760
        %1908 = vmatmul.f32.gmra.mxu0 %v1907
        %v1909 = vpop.f32.mrf.mxu0
        %v1910 = vadd.f32 %v1841, %v1909
        %1911 = vdwg.mxu0
        %v1912 = vand.u32 %v584, 4294901760
        %1913 = vmatpush.msra.mxu0 %v1912
        %v1914 = vand.u32 %v580, 4294901760
        %1915 = vmatpush.msra.mxu0 %v1914
        %v1916 = vand.u32 %v576, 4294901760
        %1917 = vmatpush.msra.mxu0 %v1916
        %v1918 = vand.u32 %v572, 4294901760
        %1919 = vmatpush.msra.mxu0 %v1918
        %v1920 = vand.u32 %v568, 4294901760
        %1921 = vmatpush.msra.mxu0 %v1920
        %v1922 = vand.u32 %v564, 4294901760
        %1923 = vmatpush.msra.mxu0 %v1922
        %v1924 = vand.u32 %v560, 4294901760
        %1925 = vmatpush.msra.mxu0 %v1924
        %v1926 = vand.u32 %v556, 4294901760
        %1927 = vmatpush.msra.mxu0 %v1926
        %v1928 = vand.u32 %v552, 4294901760
        %1929 = vmatpush.msra.mxu0 %v1928
        %v1930 = vand.u32 %v548, 4294901760
        %1931 = vmatpush.msra.mxu0 %v1930
        %v1932 = vand.u32 %v544, 4294901760
        %1933 = vmatpush.msra.mxu0 %v1932
        %v1934 = vand.u32 %v540, 4294901760
        %1935 = vmatpush.msra.mxu0 %v1934
        %v1936 = vand.u32 %v536, 4294901760
        %1937 = vmatpush.msra.mxu0 %v1936
        %v1938 = vand.u32 %v532, 4294901760
        %1939 = vmatpush.msra.mxu0 %v1938
        %v1940 = vand.u32 %v528, 4294901760
        %1941 = vmatpush.msra.mxu0 %v1940
        %v1942 = vand.u32 %v524, 4294901760
        %1943 = vmatpush.msra.mxu0 %v1942
        %v1944 = vand.u32 %v520, 4294901760
        %1945 = vmatmul.f32.gmra.mxu0 %v1944
        %v1946 = vpop.f32.mrf.mxu0
        %v1947 = vadd.f32 %v1910, %v1946
        %1948 = vdwg.mxu0
        %v1949 = vadd.f32 %v518, %v924
        %v1950 = vadd.f32 %v518, %v1265
        %v1951 = vadd.f32 %v518, %v1606
        %v1952 = vadd.f32 %v518, %v1947
        %v1953 = vld [vmem:[#allocation2 + $0x8] sm:$0xff]
        %s1954 = scalar_lea.vmem [#allocation3], 512
        %v1955 = vld [vmem:[%s1954] sm:$0xff]
        %v1956 = vld [vmem:[%s1954 + $0x8] sm:$0xff]
        %v1957 = vld [vmem:[%s1954 + $0x10] sm:$0xff]
        %v1958 = vld [vmem:[%s1954 + $0x18] sm:$0xff]
        %v1959 = vld [vmem:[%s1954 + $0x20] sm:$0xff]
        %v1960 = vld [vmem:[%s1954 + $0x28] sm:$0xff]
        %v1961 = vld [vmem:[%s1954 + $0x30] sm:$0xff]
        %v1962 = vld [vmem:[%s1954 + $0x38] sm:$0xff]
        %v1963 = vld [vmem:[%s1954 + $0x40] sm:$0xff]
        %v1964 = vld [vmem:[%s1954 + $0x48] sm:$0xff]
        %v1965 = vld [vmem:[%s1954 + $0x50] sm:$0xff]
        %v1966 = vld [vmem:[%s1954 + $0x58] sm:$0xff]
        %v1967 = vld [vmem:[%s1954 + $0x60] sm:$0xff]
        %v1968 = vld [vmem:[%s1954 + $0x68] sm:$0xff]
        %v1969 = vld [vmem:[%s1954 + $0x70] sm:$0xff]
        %v1970 = vld [vmem:[%s1954 + $0x78] sm:$0xff]
        %v1971 = vld [vmem:[%s1954 + $0x80] sm:$0xff]
        %v1972 = vld [vmem:[%s1954 + $0x88] sm:$0xff]
        %v1973 = vld [vmem:[%s1954 + $0x90] sm:$0xff]
        %v1974 = vld [vmem:[%s1954 + $0x98] sm:$0xff]
        %v1975 = vld [vmem:[%s1954 + $0xa0] sm:$0xff]
        %v1976 = vld [vmem:[%s1954 + $0xa8] sm:$0xff]
        %v1977 = vld [vmem:[%s1954 + $0xb0] sm:$0xff]
        %v1978 = vld [vmem:[%s1954 + $0xb8] sm:$0xff]
        %v1979 = vld [vmem:[%s1954 + $0xc0] sm:$0xff]
        %v1980 = vld [vmem:[%s1954 + $0xc8] sm:$0xff]
        %v1981 = vld [vmem:[%s1954 + $0xd0] sm:$0xff]
        %v1982 = vld [vmem:[%s1954 + $0xd8] sm:$0xff]
        %v1983 = vld [vmem:[%s1954 + $0xe0] sm:$0xff]
        %v1984 = vld [vmem:[%s1954 + $0xe8] sm:$0xff]
        %v1985 = vld [vmem:[%s1954 + $0xf0] sm:$0xff]
        %v1986 = vld [vmem:[%s1954 + $0xf8] sm:$0xff]
        %v1987 = vld [vmem:[%s1954 + $0x100] sm:$0xff]
        %v1988 = vld [vmem:[%s1954 + $0x108] sm:$0xff]
        %v1989 = vld [vmem:[%s1954 + $0x110] sm:$0xff]
        %v1990 = vld [vmem:[%s1954 + $0x118] sm:$0xff]
        %v1991 = vld [vmem:[%s1954 + $0x120] sm:$0xff]
        %v1992 = vld [vmem:[%s1954 + $0x128] sm:$0xff]
        %v1993 = vld [vmem:[%s1954 + $0x130] sm:$0xff]
        %v1994 = vld [vmem:[%s1954 + $0x138] sm:$0xff]
        %v1995 = vld [vmem:[%s1954 + $0x140] sm:$0xff]
        %v1996 = vld [vmem:[%s1954 + $0x148] sm:$0xff]
        %v1997 = vld [vmem:[%s1954 + $0x150] sm:$0xff]
        %v1998 = vld [vmem:[%s1954 + $0x158] sm:$0xff]
        %v1999 = vld [vmem:[%s1954 + $0x160] sm:$0xff]
        %v2000 = vld [vmem:[%s1954 + $0x168] sm:$0xff]
        %v2001 = vld [vmem:[%s1954 + $0x170] sm:$0xff]
        %v2002 = vld [vmem:[%s1954 + $0x178] sm:$0xff]
        %v2003 = vld [vmem:[%s1954 + $0x180] sm:$0xff]
        %v2004 = vld [vmem:[%s1954 + $0x188] sm:$0xff]
        %v2005 = vld [vmem:[%s1954 + $0x190] sm:$0xff]
        %v2006 = vld [vmem:[%s1954 + $0x198] sm:$0xff]
        %v2007 = vld [vmem:[%s1954 + $0x1a0] sm:$0xff]
        %v2008 = vld [vmem:[%s1954 + $0x1a8] sm:$0xff]
        %v2009 = vld [vmem:[%s1954 + $0x1b0] sm:$0xff]
        %v2010 = vld [vmem:[%s1954 + $0x1b8] sm:$0xff]
        %v2011 = vld [vmem:[%s1954 + $0x1c0] sm:$0xff]
        %v2012 = vld [vmem:[%s1954 + $0x1c8] sm:$0xff]
        %v2013 = vld [vmem:[%s1954 + $0x1d0] sm:$0xff]
        %v2014 = vld [vmem:[%s1954 + $0x1d8] sm:$0xff]
        %v2015 = vld [vmem:[%s1954 + $0x1e0] sm:$0xff]
        %v2016 = vld [vmem:[%s1954 + $0x1e8] sm:$0xff]
        %v2017 = vld [vmem:[%s1954 + $0x1f0] sm:$0xff]
        %v2018 = vld [vmem:[%s1954 + $0x1f8] sm:$0xff]
        %v2019 = vand.u32 %v2015, 4294901760
        %2020 = vmatpush.msra.mxu0 %v2019
        %v2021 = vand.u32 %v2011, 4294901760
        %2022 = vmatpush.msra.mxu0 %v2021
        %v2023 = vand.u32 %v2007, 4294901760
        %2024 = vmatpush.msra.mxu0 %v2023
        %v2025 = vand.u32 %v2003, 4294901760
        %2026 = vmatpush.msra.mxu0 %v2025
        %v2027 = vand.u32 %v1999, 4294901760
        %2028 = vmatpush.msra.mxu0 %v2027
        %v2029 = vand.u32 %v1995, 4294901760
        %2030 = vmatpush.msra.mxu0 %v2029
        %v2031 = vand.u32 %v1991, 4294901760
        %2032 = vmatpush.msra.mxu0 %v2031
        %v2033 = vand.u32 %v1987, 4294901760
        %2034 = vmatpush.msra.mxu0 %v2033
        %v2035 = vand.u32 %v1983, 4294901760
        %2036 = vmatpush.msra.mxu0 %v2035
        %v2037 = vand.u32 %v1979, 4294901760
        %2038 = vmatpush.msra.mxu0 %v2037
        %v2039 = vand.u32 %v1975, 4294901760
        %2040 = vmatpush.msra.mxu0 %v2039
        %v2041 = vand.u32 %v1971, 4294901760
        %2042 = vmatpush.msra.mxu0 %v2041
        %v2043 = vand.u32 %v1967, 4294901760
        %2044 = vmatpush.msra.mxu0 %v2043
        %v2045 = vand.u32 %v1963, 4294901760
        %2046 = vmatpush.msra.mxu0 %v2045
        %v2047 = vand.u32 %v1959, 4294901760
        %2048 = vmatpush.msra.mxu0 %v2047
        %v2049 = vand.u32 %v1955, 4294901760
        %2050 = vmatpush.msra.mxu0 %v2049
        %v2051 = vand.u32 %v1953, 4294901760
        %v2052 = vsub.f32 %v1953, %v2051
        %v2053 = vand.u32 %v2052, 4294901760
        %v2054 = vsub.f32 %v2052, %v2053
        %v2055 = vand.u32 %v2054, 4294901760
        %2056 = vmatmul.f32.gmra.mxu0 %v2055
        %v2057 = vpop.f32.mrf.mxu0
        %v2058 = vadd.f32 0.0, %v2057
        %2059 = vdwg.mxu0
        %v2060 = vand.u32 %v2015, 4294901760
        %v2061 = vsub.f32 %v2015, %v2060
        %v2062 = vand.u32 %v2061, 4294901760
        %v2063 = vsub.f32 %v2061, %v2062
        %v2064 = vand.u32 %v2063, 4294901760
        %2065 = vmatpush.msra.mxu0 %v2064
        %v2066 = vand.u32 %v2011, 4294901760
        %v2067 = vsub.f32 %v2011, %v2066
        %v2068 = vand.u32 %v2067, 4294901760
        %v2069 = vsub.f32 %v2067, %v2068
        %v2070 = vand.u32 %v2069, 4294901760
        %2071 = vmatpush.msra.mxu0 %v2070
        %v2072 = vand.u32 %v2007, 4294901760
        %v2073 = vsub.f32 %v2007, %v2072
        %v2074 = vand.u32 %v2073, 4294901760
        %v2075 = vsub.f32 %v2073, %v2074
        %v2076 = vand.u32 %v2075, 4294901760
        %2077 = vmatpush.msra.mxu0 %v2076
        %v2078 = vand.u32 %v2003, 4294901760
        %v2079 = vsub.f32 %v2003, %v2078
        %v2080 = vand.u32 %v2079, 4294901760
        %v2081 = vsub.f32 %v2079, %v2080
        %v2082 = vand.u32 %v2081, 4294901760
        %2083 = vmatpush.msra.mxu0 %v2082
        %v2084 = vand.u32 %v1999, 4294901760
        %v2085 = vsub.f32 %v1999, %v2084
        %v2086 = vand.u32 %v2085, 4294901760
        %v2087 = vsub.f32 %v2085, %v2086
        %v2088 = vand.u32 %v2087, 4294901760
        %2089 = vmatpush.msra.mxu0 %v2088
        %v2090 = vand.u32 %v1995, 4294901760
        %v2091 = vsub.f32 %v1995, %v2090
        %v2092 = vand.u32 %v2091, 4294901760
        %v2093 = vsub.f32 %v2091, %v2092
        %v2094 = vand.u32 %v2093, 4294901760
        %2095 = vmatpush.msra.mxu0 %v2094
        %v2096 = vand.u32 %v1991, 4294901760
        %v2097 = vsub.f32 %v1991, %v2096
        %v2098 = vand.u32 %v2097, 4294901760
        %v2099 = vsub.f32 %v2097, %v2098
        %v2100 = vand.u32 %v2099, 4294901760
        %2101 = vmatpush.msra.mxu0 %v2100
        %v2102 = vand.u32 %v1987, 4294901760
        %v2103 = vsub.f32 %v1987, %v2102
        %v2104 = vand.u32 %v2103, 4294901760
        %v2105 = vsub.f32 %v2103, %v2104
        %v2106 = vand.u32 %v2105, 4294901760
        %2107 = vmatpush.msra.mxu0 %v2106
        %v2108 = vand.u32 %v1983, 4294901760
        %v2109 = vsub.f32 %v1983, %v2108
        %v2110 = vand.u32 %v2109, 4294901760
        %v2111 = vsub.f32 %v2109, %v2110
        %v2112 = vand.u32 %v2111, 4294901760
        %2113 = vmatpush.msra.mxu0 %v2112
        %v2114 = vand.u32 %v1979, 4294901760
        %v2115 = vsub.f32 %v1979, %v2114
        %v2116 = vand.u32 %v2115, 4294901760
        %v2117 = vsub.f32 %v2115, %v2116
        %v2118 = vand.u32 %v2117, 4294901760
        %2119 = vmatpush.msra.mxu0 %v2118
        %v2120 = vand.u32 %v1975, 4294901760
        %v2121 = vsub.f32 %v1975, %v2120
        %v2122 = vand.u32 %v2121, 4294901760
        %v2123 = vsub.f32 %v2121, %v2122
        %v2124 = vand.u32 %v2123, 4294901760
        %2125 = vmatpush.msra.mxu0 %v2124
        %v2126 = vand.u32 %v1971, 4294901760
        %v2127 = vsub.f32 %v1971, %v2126
        %v2128 = vand.u32 %v2127, 4294901760
        %v2129 = vsub.f32 %v2127, %v2128
        %v2130 = vand.u32 %v2129, 4294901760
        %2131 = vmatpush.msra.mxu0 %v2130
        %v2132 = vand.u32 %v1967, 4294901760
        %v2133 = vsub.f32 %v1967, %v2132
        %v2134 = vand.u32 %v2133, 4294901760
        %v2135 = vsub.f32 %v2133, %v2134
        %v2136 = vand.u32 %v2135, 4294901760
        %2137 = vmatpush.msra.mxu0 %v2136
        %v2138 = vand.u32 %v1963, 4294901760
        %v2139 = vsub.f32 %v1963, %v2138
        %v2140 = vand.u32 %v2139, 4294901760
        %v2141 = vsub.f32 %v2139, %v2140
        %v2142 = vand.u32 %v2141, 4294901760
        %2143 = vmatpush.msra.mxu0 %v2142
        %v2144 = vand.u32 %v1959, 4294901760
        %v2145 = vsub.f32 %v1959, %v2144
        %v2146 = vand.u32 %v2145, 4294901760
        %v2147 = vsub.f32 %v2145, %v2146
        %v2148 = vand.u32 %v2147, 4294901760
        %2149 = vmatpush.msra.mxu0 %v2148
        %v2150 = vand.u32 %v1955, 4294901760
        %v2151 = vsub.f32 %v1955, %v2150
        %v2152 = vand.u32 %v2151, 4294901760
        %v2153 = vsub.f32 %v2151, %v2152
        %v2154 = vand.u32 %v2153, 4294901760
        %2155 = vmatpush.msra.mxu0 %v2154
        %v2156 = vand.u32 %v1953, 4294901760
        %2157 = vmatmul.f32.gmra.mxu0 %v2156
        %v2158 = vpop.f32.mrf.mxu0
        %v2159 = vadd.f32 %v2058, %v2158
        %2160 = vdwg.mxu0
        %v2161 = vand.u32 %v2015, 4294901760
        %v2162 = vsub.f32 %v2015, %v2161
        %2163 = vmatpush.msra.mxu0 %v2162
        %v2164 = vand.u32 %v2011, 4294901760
        %v2165 = vsub.f32 %v2011, %v2164
        %2166 = vmatpush.msra.mxu0 %v2165
        %v2167 = vand.u32 %v2007, 4294901760
        %v2168 = vsub.f32 %v2007, %v2167
        %2169 = vmatpush.msra.mxu0 %v2168
        %v2170 = vand.u32 %v2003, 4294901760
        %v2171 = vsub.f32 %v2003, %v2170
        %2172 = vmatpush.msra.mxu0 %v2171
        %v2173 = vand.u32 %v1999, 4294901760
        %v2174 = vsub.f32 %v1999, %v2173
        %2175 = vmatpush.msra.mxu0 %v2174
        %v2176 = vand.u32 %v1995, 4294901760
        %v2177 = vsub.f32 %v1995, %v2176
        %2178 = vmatpush.msra.mxu0 %v2177
        %v2179 = vand.u32 %v1991, 4294901760
        %v2180 = vsub.f32 %v1991, %v2179
        %2181 = vmatpush.msra.mxu0 %v2180
        %v2182 = vand.u32 %v1987, 4294901760
        %v2183 = vsub.f32 %v1987, %v2182
        %2184 = vmatpush.msra.mxu0 %v2183
        %v2185 = vand.u32 %v1983, 4294901760
        %v2186 = vsub.f32 %v1983, %v2185
        %2187 = vmatpush.msra.mxu0 %v2186
        %v2188 = vand.u32 %v1979, 4294901760
        %v2189 = vsub.f32 %v1979, %v2188
        %2190 = vmatpush.msra.mxu0 %v2189
        %v2191 = vand.u32 %v1975, 4294901760
        %v2192 = vsub.f32 %v1975, %v2191
        %2193 = vmatpush.msra.mxu0 %v2192
        %v2194 = vand.u32 %v1971, 4294901760
        %v2195 = vsub.f32 %v1971, %v2194
        %2196 = vmatpush.msra.mxu0 %v2195
        %v2197 = vand.u32 %v1967, 4294901760
        %v2198 = vsub.f32 %v1967, %v2197
        %2199 = vmatpush.msra.mxu0 %v2198
        %v2200 = vand.u32 %v1963, 4294901760
        %v2201 = vsub.f32 %v1963, %v2200
        %2202 = vmatpush.msra.mxu0 %v2201
        %v2203 = vand.u32 %v1959, 4294901760
        %v2204 = vsub.f32 %v1959, %v2203
        %2205 = vmatpush.msra.mxu0 %v2204
        %v2206 = vand.u32 %v1955, 4294901760
        %v2207 = vsub.f32 %v1955, %v2206
        %2208 = vmatpush.msra.mxu0 %v2207
        %v2209 = vand.u32 %v1953, 4294901760
        %v2210 = vsub.f32 %v1953, %v2209
        %2211 = vmatmul.f32.gmra.mxu0 %v2210
        %v2212 = vpop.f32.mrf.mxu0
        %v2213 = vadd.f32 %v2159, %v2212
        %2214 = vdwg.mxu0
        %v2215 = vand.u32 %v2015, 4294901760
        %2216 = vmatpush.msra.mxu0 %v2215
        %v2217 = vand.u32 %v2011, 4294901760
        %2218 = vmatpush.msra.mxu0 %v2217
        %v2219 = vand.u32 %v2007, 4294901760
        %2220 = vmatpush.msra.mxu0 %v2219
        %v2221 = vand.u32 %v2003, 4294901760
        %2222 = vmatpush.msra.mxu0 %v2221
        %v2223 = vand.u32 %v1999, 4294901760
        %2224 = vmatpush.msra.mxu0 %v2223
        %v2225 = vand.u32 %v1995, 4294901760
        %2226 = vmatpush.msra.mxu0 %v2225
        %v2227 = vand.u32 %v1991, 4294901760
        %2228 = vmatpush.msra.mxu0 %v2227
        %v2229 = vand.u32 %v1987, 4294901760
        %2230 = vmatpush.msra.mxu0 %v2229
        %v2231 = vand.u32 %v1983, 4294901760
        %2232 = vmatpush.msra.mxu0 %v2231
        %v2233 = vand.u32 %v1979, 4294901760
        %2234 = vmatpush.msra.mxu0 %v2233
        %v2235 = vand.u32 %v1975, 4294901760
        %2236 = vmatpush.msra.mxu0 %v2235
        %v2237 = vand.u32 %v1971, 4294901760
        %2238 = vmatpush.msra.mxu0 %v2237
        %v2239 = vand.u32 %v1967, 4294901760
        %2240 = vmatpush.msra.mxu0 %v2239
        %v2241 = vand.u32 %v1963, 4294901760
        %2242 = vmatpush.msra.mxu0 %v2241
        %v2243 = vand.u32 %v1959, 4294901760
        %2244 = vmatpush.msra.mxu0 %v2243
        %v2245 = vand.u32 %v1955, 4294901760
        %2246 = vmatpush.msra.mxu0 %v2245
        %v2247 = vand.u32 %v1953, 4294901760
        %v2248 = vsub.f32 %v1953, %v2247
        %v2249 = vand.u32 %v2248, 4294901760
        %2250 = vmatmul.f32.gmra.mxu0 %v2249
        %v2251 = vpop.f32.mrf.mxu0
        %v2252 = vadd.f32 %v2213, %v2251
        %2253 = vdwg.mxu0
        %v2254 = vand.u32 %v2015, 4294901760
        %v2255 = vsub.f32 %v2015, %v2254
        %v2256 = vand.u32 %v2255, 4294901760
        %2257 = vmatpush.msra.mxu0 %v2256
        %v2258 = vand.u32 %v2011, 4294901760
        %v2259 = vsub.f32 %v2011, %v2258
        %v2260 = vand.u32 %v2259, 4294901760
        %2261 = vmatpush.msra.mxu0 %v2260
        %v2262 = vand.u32 %v2007, 4294901760
        %v2263 = vsub.f32 %v2007, %v2262
        %v2264 = vand.u32 %v2263, 4294901760
        %2265 = vmatpush.msra.mxu0 %v2264
        %v2266 = vand.u32 %v2003, 4294901760
        %v2267 = vsub.f32 %v2003, %v2266
        %v2268 = vand.u32 %v2267, 4294901760
        %2269 = vmatpush.msra.mxu0 %v2268
        %v2270 = vand.u32 %v1999, 4294901760
        %v2271 = vsub.f32 %v1999, %v2270
        %v2272 = vand.u32 %v2271, 4294901760
        %2273 = vmatpush.msra.mxu0 %v2272
        %v2274 = vand.u32 %v1995, 4294901760
        %v2275 = vsub.f32 %v1995, %v2274
        %v2276 = vand.u32 %v2275, 4294901760
        %2277 = vmatpush.msra.mxu0 %v2276
        %v2278 = vand.u32 %v1991, 4294901760
        %v2279 = vsub.f32 %v1991, %v2278
        %v2280 = vand.u32 %v2279, 4294901760
        %2281 = vmatpush.msra.mxu0 %v2280
        %v2282 = vand.u32 %v1987, 4294901760
        %v2283 = vsub.f32 %v1987, %v2282
        %v2284 = vand.u32 %v2283, 4294901760
        %2285 = vmatpush.msra.mxu0 %v2284
        %v2286 = vand.u32 %v1983, 4294901760
        %v2287 = vsub.f32 %v1983, %v2286
        %v2288 = vand.u32 %v2287, 4294901760
        %2289 = vmatpush.msra.mxu0 %v2288
        %v2290 = vand.u32 %v1979, 4294901760
        %v2291 = vsub.f32 %v1979, %v2290
        %v2292 = vand.u32 %v2291, 4294901760
        %2293 = vmatpush.msra.mxu0 %v2292
        %v2294 = vand.u32 %v1975, 4294901760
        %v2295 = vsub.f32 %v1975, %v2294
        %v2296 = vand.u32 %v2295, 4294901760
        %2297 = vmatpush.msra.mxu0 %v2296
        %v2298 = vand.u32 %v1971, 4294901760
        %v2299 = vsub.f32 %v1971, %v2298
        %v2300 = vand.u32 %v2299, 4294901760
        %2301 = vmatpush.msra.mxu0 %v2300
        %v2302 = vand.u32 %v1967, 4294901760
        %v2303 = vsub.f32 %v1967, %v2302
        %v2304 = vand.u32 %v2303, 4294901760
        %2305 = vmatpush.msra.mxu0 %v2304
        %v2306 = vand.u32 %v1963, 4294901760
        %v2307 = vsub.f32 %v1963, %v2306
        %v2308 = vand.u32 %v2307, 4294901760
        %2309 = vmatpush.msra.mxu0 %v2308
        %v2310 = vand.u32 %v1959, 4294901760
        %v2311 = vsub.f32 %v1959, %v2310
        %v2312 = vand.u32 %v2311, 4294901760
        %2313 = vmatpush.msra.mxu0 %v2312
        %v2314 = vand.u32 %v1955, 4294901760
        %v2315 = vsub.f32 %v1955, %v2314
        %v2316 = vand.u32 %v2315, 4294901760
        %2317 = vmatpush.msra.mxu0 %v2316
        %v2318 = vand.u32 %v1953, 4294901760
        %2319 = vmatmul.f32.gmra.mxu0 %v2318
        %v2320 = vpop.f32.mrf.mxu0
        %v2321 = vadd.f32 %v2252, %v2320
        %2322 = vdwg.mxu0
        %v2323 = vand.u32 %v2015, 4294901760
        %2324 = vmatpush.msra.mxu0 %v2323
        %v2325 = vand.u32 %v2011, 4294901760
        %2326 = vmatpush.msra.mxu0 %v2325
        %v2327 = vand.u32 %v2007, 4294901760
        %2328 = vmatpush.msra.mxu0 %v2327
        %v2329 = vand.u32 %v2003, 4294901760
        %2330 = vmatpush.msra.mxu0 %v2329
        %v2331 = vand.u32 %v1999, 4294901760
        %2332 = vmatpush.msra.mxu0 %v2331
        %v2333 = vand.u32 %v1995, 4294901760
        %2334 = vmatpush.msra.mxu0 %v2333
        %v2335 = vand.u32 %v1991, 4294901760
        %2336 = vmatpush.msra.mxu0 %v2335
        %v2337 = vand.u32 %v1987, 4294901760
        %2338 = vmatpush.msra.mxu0 %v2337
        %v2339 = vand.u32 %v1983, 4294901760
        %2340 = vmatpush.msra.mxu0 %v2339
        %v2341 = vand.u32 %v1979, 4294901760
        %2342 = vmatpush.msra.mxu0 %v2341
        %v2343 = vand.u32 %v1975, 4294901760
        %2344 = vmatpush.msra.mxu0 %v2343
        %v2345 = vand.u32 %v1971, 4294901760
        %2346 = vmatpush.msra.mxu0 %v2345
        %v2347 = vand.u32 %v1967, 4294901760
        %2348 = vmatpush.msra.mxu0 %v2347
        %v2349 = vand.u32 %v1963, 4294901760
        %2350 = vmatpush.msra.mxu0 %v2349
        %v2351 = vand.u32 %v1959, 4294901760
        %2352 = vmatpush.msra.mxu0 %v2351
        %v2353 = vand.u32 %v1955, 4294901760
        %2354 = vmatpush.msra.mxu0 %v2353
        %v2355 = vand.u32 %v1953, 4294901760
        %2356 = vmatmul.f32.gmra.mxu0 %v2355
        %v2357 = vpop.f32.mrf.mxu0
        %v2358 = vadd.f32 %v2321, %v2357
        %2359 = vdwg.mxu0
        %v2360 = vand.u32 %v2016, 4294901760
        %2361 = vmatpush.msra.mxu0 %v2360
        %v2362 = vand.u32 %v2012, 4294901760
        %2363 = vmatpush.msra.mxu0 %v2362
        %v2364 = vand.u32 %v2008, 4294901760
        %2365 = vmatpush.msra.mxu0 %v2364
        %v2366 = vand.u32 %v2004, 4294901760
        %2367 = vmatpush.msra.mxu0 %v2366
        %v2368 = vand.u32 %v2000, 4294901760
        %2369 = vmatpush.msra.mxu0 %v2368
        %v2370 = vand.u32 %v1996, 4294901760
        %2371 = vmatpush.msra.mxu0 %v2370
        %v2372 = vand.u32 %v1992, 4294901760
        %2373 = vmatpush.msra.mxu0 %v2372
        %v2374 = vand.u32 %v1988, 4294901760
        %2375 = vmatpush.msra.mxu0 %v2374
        %v2376 = vand.u32 %v1984, 4294901760
        %2377 = vmatpush.msra.mxu0 %v2376
        %v2378 = vand.u32 %v1980, 4294901760
        %2379 = vmatpush.msra.mxu0 %v2378
        %v2380 = vand.u32 %v1976, 4294901760
        %2381 = vmatpush.msra.mxu0 %v2380
        %v2382 = vand.u32 %v1972, 4294901760
        %2383 = vmatpush.msra.mxu0 %v2382
        %v2384 = vand.u32 %v1968, 4294901760
        %2385 = vmatpush.msra.mxu0 %v2384
        %v2386 = vand.u32 %v1964, 4294901760
        %2387 = vmatpush.msra.mxu0 %v2386
        %v2388 = vand.u32 %v1960, 4294901760
        %2389 = vmatpush.msra.mxu0 %v2388
        %v2390 = vand.u32 %v1956, 4294901760
        %2391 = vmatpush.msra.mxu0 %v2390
        %v2392 = vand.u32 %v1953, 4294901760
        %v2393 = vsub.f32 %v1953, %v2392
        %v2394 = vand.u32 %v2393, 4294901760
        %v2395 = vsub.f32 %v2393, %v2394
        %v2396 = vand.u32 %v2395, 4294901760
        %2397 = vmatmul.f32.gmra.mxu0 %v2396
        %v2398 = vpop.f32.mrf.mxu0
        %v2399 = vadd.f32 0.0, %v2398
        %2400 = vdwg.mxu0
        %v2401 = vand.u32 %v2016, 4294901760
        %v2402 = vsub.f32 %v2016, %v2401
        %v2403 = vand.u32 %v2402, 4294901760
        %v2404 = vsub.f32 %v2402, %v2403
        %v2405 = vand.u32 %v2404, 4294901760
        %2406 = vmatpush.msra.mxu0 %v2405
        %v2407 = vand.u32 %v2012, 4294901760
        %v2408 = vsub.f32 %v2012, %v2407
        %v2409 = vand.u32 %v2408, 4294901760
        %v2410 = vsub.f32 %v2408, %v2409
        %v2411 = vand.u32 %v2410, 4294901760
        %2412 = vmatpush.msra.mxu0 %v2411
        %v2413 = vand.u32 %v2008, 4294901760
        %v2414 = vsub.f32 %v2008, %v2413
        %v2415 = vand.u32 %v2414, 4294901760
        %v2416 = vsub.f32 %v2414, %v2415
        %v2417 = vand.u32 %v2416, 4294901760
        %2418 = vmatpush.msra.mxu0 %v2417
        %v2419 = vand.u32 %v2004, 4294901760
        %v2420 = vsub.f32 %v2004, %v2419
        %v2421 = vand.u32 %v2420, 4294901760
        %v2422 = vsub.f32 %v2420, %v2421
        %v2423 = vand.u32 %v2422, 4294901760
        %2424 = vmatpush.msra.mxu0 %v2423
        %v2425 = vand.u32 %v2000, 4294901760
        %v2426 = vsub.f32 %v2000, %v2425
        %v2427 = vand.u32 %v2426, 4294901760
        %v2428 = vsub.f32 %v2426, %v2427
        %v2429 = vand.u32 %v2428, 4294901760
        %2430 = vmatpush.msra.mxu0 %v2429
        %v2431 = vand.u32 %v1996, 4294901760
        %v2432 = vsub.f32 %v1996, %v2431
        %v2433 = vand.u32 %v2432, 4294901760
        %v2434 = vsub.f32 %v2432, %v2433
        %v2435 = vand.u32 %v2434, 4294901760
        %2436 = vmatpush.msra.mxu0 %v2435
        %v2437 = vand.u32 %v1992, 4294901760
        %v2438 = vsub.f32 %v1992, %v2437
        %v2439 = vand.u32 %v2438, 4294901760
        %v2440 = vsub.f32 %v2438, %v2439
        %v2441 = vand.u32 %v2440, 4294901760
        %2442 = vmatpush.msra.mxu0 %v2441
        %v2443 = vand.u32 %v1988, 4294901760
        %v2444 = vsub.f32 %v1988, %v2443
        %v2445 = vand.u32 %v2444, 4294901760
        %v2446 = vsub.f32 %v2444, %v2445
        %v2447 = vand.u32 %v2446, 4294901760
        %2448 = vmatpush.msra.mxu0 %v2447
        %v2449 = vand.u32 %v1984, 4294901760
        %v2450 = vsub.f32 %v1984, %v2449
        %v2451 = vand.u32 %v2450, 4294901760
        %v2452 = vsub.f32 %v2450, %v2451
        %v2453 = vand.u32 %v2452, 4294901760
        %2454 = vmatpush.msra.mxu0 %v2453
        %v2455 = vand.u32 %v1980, 4294901760
        %v2456 = vsub.f32 %v1980, %v2455
        %v2457 = vand.u32 %v2456, 4294901760
        %v2458 = vsub.f32 %v2456, %v2457
        %v2459 = vand.u32 %v2458, 4294901760
        %2460 = vmatpush.msra.mxu0 %v2459
        %v2461 = vand.u32 %v1976, 4294901760
        %v2462 = vsub.f32 %v1976, %v2461
        %v2463 = vand.u32 %v2462, 4294901760
        %v2464 = vsub.f32 %v2462, %v2463
        %v2465 = vand.u32 %v2464, 4294901760
        %2466 = vmatpush.msra.mxu0 %v2465
        %v2467 = vand.u32 %v1972, 4294901760
        %v2468 = vsub.f32 %v1972, %v2467
        %v2469 = vand.u32 %v2468, 4294901760
        %v2470 = vsub.f32 %v2468, %v2469
        %v2471 = vand.u32 %v2470, 4294901760
        %2472 = vmatpush.msra.mxu0 %v2471
        %v2473 = vand.u32 %v1968, 4294901760
        %v2474 = vsub.f32 %v1968, %v2473
        %v2475 = vand.u32 %v2474, 4294901760
        %v2476 = vsub.f32 %v2474, %v2475
        %v2477 = vand.u32 %v2476, 4294901760
        %2478 = vmatpush.msra.mxu0 %v2477
        %v2479 = vand.u32 %v1964, 4294901760
        %v2480 = vsub.f32 %v1964, %v2479
        %v2481 = vand.u32 %v2480, 4294901760
        %v2482 = vsub.f32 %v2480, %v2481
        %v2483 = vand.u32 %v2482, 4294901760
        %2484 = vmatpush.msra.mxu0 %v2483
        %v2485 = vand.u32 %v1960, 4294901760
        %v2486 = vsub.f32 %v1960, %v2485
        %v2487 = vand.u32 %v2486, 4294901760
        %v2488 = vsub.f32 %v2486, %v2487
        %v2489 = vand.u32 %v2488, 4294901760
        %2490 = vmatpush.msra.mxu0 %v2489
        %v2491 = vand.u32 %v1956, 4294901760
        %v2492 = vsub.f32 %v1956, %v2491
        %v2493 = vand.u32 %v2492, 4294901760
        %v2494 = vsub.f32 %v2492, %v2493
        %v2495 = vand.u32 %v2494, 4294901760
        %2496 = vmatpush.msra.mxu0 %v2495
        %v2497 = vand.u32 %v1953, 4294901760
        %2498 = vmatmul.f32.gmra.mxu0 %v2497
        %v2499 = vpop.f32.mrf.mxu0
        %v2500 = vadd.f32 %v2399, %v2499
        %2501 = vdwg.mxu0
        %v2502 = vand.u32 %v2016, 4294901760
        %v2503 = vsub.f32 %v2016, %v2502
        %2504 = vmatpush.msra.mxu0 %v2503
        %v2505 = vand.u32 %v2012, 4294901760
        %v2506 = vsub.f32 %v2012, %v2505
        %2507 = vmatpush.msra.mxu0 %v2506
        %v2508 = vand.u32 %v2008, 4294901760
        %v2509 = vsub.f32 %v2008, %v2508
        %2510 = vmatpush.msra.mxu0 %v2509
        %v2511 = vand.u32 %v2004, 4294901760
        %v2512 = vsub.f32 %v2004, %v2511
        %2513 = vmatpush.msra.mxu0 %v2512
        %v2514 = vand.u32 %v2000, 4294901760
        %v2515 = vsub.f32 %v2000, %v2514
        %2516 = vmatpush.msra.mxu0 %v2515
        %v2517 = vand.u32 %v1996, 4294901760
        %v2518 = vsub.f32 %v1996, %v2517
        %2519 = vmatpush.msra.mxu0 %v2518
        %v2520 = vand.u32 %v1992, 4294901760
        %v2521 = vsub.f32 %v1992, %v2520
        %2522 = vmatpush.msra.mxu0 %v2521
        %v2523 = vand.u32 %v1988, 4294901760
        %v2524 = vsub.f32 %v1988, %v2523
        %2525 = vmatpush.msra.mxu0 %v2524
        %v2526 = vand.u32 %v1984, 4294901760
        %v2527 = vsub.f32 %v1984, %v2526
        %2528 = vmatpush.msra.mxu0 %v2527
        %v2529 = vand.u32 %v1980, 4294901760
        %v2530 = vsub.f32 %v1980, %v2529
        %2531 = vmatpush.msra.mxu0 %v2530
        %v2532 = vand.u32 %v1976, 4294901760
        %v2533 = vsub.f32 %v1976, %v2532
        %2534 = vmatpush.msra.mxu0 %v2533
        %v2535 = vand.u32 %v1972, 4294901760
        %v2536 = vsub.f32 %v1972, %v2535
        %2537 = vmatpush.msra.mxu0 %v2536
        %v2538 = vand.u32 %v1968, 4294901760
        %v2539 = vsub.f32 %v1968, %v2538
        %2540 = vmatpush.msra.mxu0 %v2539
        %v2541 = vand.u32 %v1964, 4294901760
        %v2542 = vsub.f32 %v1964, %v2541
        %2543 = vmatpush.msra.mxu0 %v2542
        %v2544 = vand.u32 %v1960, 4294901760
        %v2545 = vsub.f32 %v1960, %v2544
        %2546 = vmatpush.msra.mxu0 %v2545
        %v2547 = vand.u32 %v1956, 4294901760
        %v2548 = vsub.f32 %v1956, %v2547
        %2549 = vmatpush.msra.mxu0 %v2548
        %v2550 = vand.u32 %v1953, 4294901760
        %v2551 = vsub.f32 %v1953, %v2550
        %2552 = vmatmul.f32.gmra.mxu0 %v2551
        %v2553 = vpop.f32.mrf.mxu0
        %v2554 = vadd.f32 %v2500, %v2553
        %2555 = vdwg.mxu0
        %v2556 = vand.u32 %v2016, 4294901760
        %2557 = vmatpush.msra.mxu0 %v2556
        %v2558 = vand.u32 %v2012, 4294901760
        %2559 = vmatpush.msra.mxu0 %v2558
        %v2560 = vand.u32 %v2008, 4294901760
        %2561 = vmatpush.msra.mxu0 %v2560
        %v2562 = vand.u32 %v2004, 4294901760
        %2563 = vmatpush.msra.mxu0 %v2562
        %v2564 = vand.u32 %v2000, 4294901760
        %2565 = vmatpush.msra.mxu0 %v2564
        %v2566 = vand.u32 %v1996, 4294901760
        %2567 = vmatpush.msra.mxu0 %v2566
        %v2568 = vand.u32 %v1992, 4294901760
        %2569 = vmatpush.msra.mxu0 %v2568
        %v2570 = vand.u32 %v1988, 4294901760
        %2571 = vmatpush.msra.mxu0 %v2570
        %v2572 = vand.u32 %v1984, 4294901760
        %2573 = vmatpush.msra.mxu0 %v2572
        %v2574 = vand.u32 %v1980, 4294901760
        %2575 = vmatpush.msra.mxu0 %v2574
        %v2576 = vand.u32 %v1976, 4294901760
        %2577 = vmatpush.msra.mxu0 %v2576
        %v2578 = vand.u32 %v1972, 4294901760
        %2579 = vmatpush.msra.mxu0 %v2578
        %v2580 = vand.u32 %v1968, 4294901760
        %2581 = vmatpush.msra.mxu0 %v2580
        %v2582 = vand.u32 %v1964, 4294901760
        %2583 = vmatpush.msra.mxu0 %v2582
        %v2584 = vand.u32 %v1960, 4294901760
        %2585 = vmatpush.msra.mxu0 %v2584
        %v2586 = vand.u32 %v1956, 4294901760
        %2587 = vmatpush.msra.mxu0 %v2586
        %v2588 = vand.u32 %v1953, 4294901760
        %v2589 = vsub.f32 %v1953, %v2588
        %v2590 = vand.u32 %v2589, 4294901760
        %2591 = vmatmul.f32.gmra.mxu0 %v2590
        %v2592 = vpop.f32.mrf.mxu0
        %v2593 = vadd.f32 %v2554, %v2592
        %2594 = vdwg.mxu0
        %v2595 = vand.u32 %v2016, 4294901760
        %v2596 = vsub.f32 %v2016, %v2595
        %v2597 = vand.u32 %v2596, 4294901760
        %2598 = vmatpush.msra.mxu0 %v2597
        %v2599 = vand.u32 %v2012, 4294901760
        %v2600 = vsub.f32 %v2012, %v2599
        %v2601 = vand.u32 %v2600, 4294901760
        %2602 = vmatpush.msra.mxu0 %v2601
        %v2603 = vand.u32 %v2008, 4294901760
        %v2604 = vsub.f32 %v2008, %v2603
        %v2605 = vand.u32 %v2604, 4294901760
        %2606 = vmatpush.msra.mxu0 %v2605
        %v2607 = vand.u32 %v2004, 4294901760
        %v2608 = vsub.f32 %v2004, %v2607
        %v2609 = vand.u32 %v2608, 4294901760
        %2610 = vmatpush.msra.mxu0 %v2609
        %v2611 = vand.u32 %v2000, 4294901760
        %v2612 = vsub.f32 %v2000, %v2611
        %v2613 = vand.u32 %v2612, 4294901760
        %2614 = vmatpush.msra.mxu0 %v2613
        %v2615 = vand.u32 %v1996, 4294901760
        %v2616 = vsub.f32 %v1996, %v2615
        %v2617 = vand.u32 %v2616, 4294901760
        %2618 = vmatpush.msra.mxu0 %v2617
        %v2619 = vand.u32 %v1992, 4294901760
        %v2620 = vsub.f32 %v1992, %v2619
        %v2621 = vand.u32 %v2620, 4294901760
        %2622 = vmatpush.msra.mxu0 %v2621
        %v2623 = vand.u32 %v1988, 4294901760
        %v2624 = vsub.f32 %v1988, %v2623
        %v2625 = vand.u32 %v2624, 4294901760
        %2626 = vmatpush.msra.mxu0 %v2625
        %v2627 = vand.u32 %v1984, 4294901760
        %v2628 = vsub.f32 %v1984, %v2627
        %v2629 = vand.u32 %v2628, 4294901760
        %2630 = vmatpush.msra.mxu0 %v2629
        %v2631 = vand.u32 %v1980, 4294901760
        %v2632 = vsub.f32 %v1980, %v2631
        %v2633 = vand.u32 %v2632, 4294901760
        %2634 = vmatpush.msra.mxu0 %v2633
        %v2635 = vand.u32 %v1976, 4294901760
        %v2636 = vsub.f32 %v1976, %v2635
        %v2637 = vand.u32 %v2636, 4294901760
        %2638 = vmatpush.msra.mxu0 %v2637
        %v2639 = vand.u32 %v1972, 4294901760
        %v2640 = vsub.f32 %v1972, %v2639
        %v2641 = vand.u32 %v2640, 4294901760
        %2642 = vmatpush.msra.mxu0 %v2641
        %v2643 = vand.u32 %v1968, 4294901760
        %v2644 = vsub.f32 %v1968, %v2643
        %v2645 = vand.u32 %v2644, 4294901760
        %2646 = vmatpush.msra.mxu0 %v2645
        %v2647 = vand.u32 %v1964, 4294901760
        %v2648 = vsub.f32 %v1964, %v2647
        %v2649 = vand.u32 %v2648, 4294901760
        %2650 = vmatpush.msra.mxu0 %v2649
        %v2651 = vand.u32 %v1960, 4294901760
        %v2652 = vsub.f32 %v1960, %v2651
        %v2653 = vand.u32 %v2652, 4294901760
        %2654 = vmatpush.msra.mxu0 %v2653
        %v2655 = vand.u32 %v1956, 4294901760
        %v2656 = vsub.f32 %v1956, %v2655
        %v2657 = vand.u32 %v2656, 4294901760
        %2658 = vmatpush.msra.mxu0 %v2657
        %v2659 = vand.u32 %v1953, 4294901760
        %2660 = vmatmul.f32.gmra.mxu0 %v2659
        %v2661 = vpop.f32.mrf.mxu0
        %v2662 = vadd.f32 %v2593, %v2661
        %2663 = vdwg.mxu0
        %v2664 = vand.u32 %v2016, 4294901760
        %2665 = vmatpush.msra.mxu0 %v2664
        %v2666 = vand.u32 %v2012, 4294901760
        %2667 = vmatpush.msra.mxu0 %v2666
        %v2668 = vand.u32 %v2008, 4294901760
        %2669 = vmatpush.msra.mxu0 %v2668
        %v2670 = vand.u32 %v2004, 4294901760
        %2671 = vmatpush.msra.mxu0 %v2670
        %v2672 = vand.u32 %v2000, 4294901760
        %2673 = vmatpush.msra.mxu0 %v2672
        %v2674 = vand.u32 %v1996, 4294901760
        %2675 = vmatpush.msra.mxu0 %v2674
        %v2676 = vand.u32 %v1992, 4294901760
        %2677 = vmatpush.msra.mxu0 %v2676
        %v2678 = vand.u32 %v1988, 4294901760
        %2679 = vmatpush.msra.mxu0 %v2678
        %v2680 = vand.u32 %v1984, 4294901760
        %2681 = vmatpush.msra.mxu0 %v2680
        %v2682 = vand.u32 %v1980, 4294901760
        %2683 = vmatpush.msra.mxu0 %v2682
        %v2684 = vand.u32 %v1976, 4294901760
        %2685 = vmatpush.msra.mxu0 %v2684
        %v2686 = vand.u32 %v1972, 4294901760
        %2687 = vmatpush.msra.mxu0 %v2686
        %v2688 = vand.u32 %v1968, 4294901760
        %2689 = vmatpush.msra.mxu0 %v2688
        %v2690 = vand.u32 %v1964, 4294901760
        %2691 = vmatpush.msra.mxu0 %v2690
        %v2692 = vand.u32 %v1960, 4294901760
        %2693 = vmatpush.msra.mxu0 %v2692
        %v2694 = vand.u32 %v1956, 4294901760
        %2695 = vmatpush.msra.mxu0 %v2694
        %v2696 = vand.u32 %v1953, 4294901760
        %2697 = vmatmul.f32.gmra.mxu0 %v2696
        %v2698 = vpop.f32.mrf.mxu0
        %v2699 = vadd.f32 %v2662, %v2698
        %2700 = vdwg.mxu0
        %v2701 = vand.u32 %v2017, 4294901760
        %2702 = vmatpush.msra.mxu0 %v2701
        %v2703 = vand.u32 %v2013, 4294901760
        %2704 = vmatpush.msra.mxu0 %v2703
        %v2705 = vand.u32 %v2009, 4294901760
        %2706 = vmatpush.msra.mxu0 %v2705
        %v2707 = vand.u32 %v2005, 4294901760
        %2708 = vmatpush.msra.mxu0 %v2707
        %v2709 = vand.u32 %v2001, 4294901760
        %2710 = vmatpush.msra.mxu0 %v2709
        %v2711 = vand.u32 %v1997, 4294901760
        %2712 = vmatpush.msra.mxu0 %v2711
        %v2713 = vand.u32 %v1993, 4294901760
        %2714 = vmatpush.msra.mxu0 %v2713
        %v2715 = vand.u32 %v1989, 4294901760
        %2716 = vmatpush.msra.mxu0 %v2715
        %v2717 = vand.u32 %v1985, 4294901760
        %2718 = vmatpush.msra.mxu0 %v2717
        %v2719 = vand.u32 %v1981, 4294901760
        %2720 = vmatpush.msra.mxu0 %v2719
        %v2721 = vand.u32 %v1977, 4294901760
        %2722 = vmatpush.msra.mxu0 %v2721
        %v2723 = vand.u32 %v1973, 4294901760
        %2724 = vmatpush.msra.mxu0 %v2723
        %v2725 = vand.u32 %v1969, 4294901760
        %2726 = vmatpush.msra.mxu0 %v2725
        %v2727 = vand.u32 %v1965, 4294901760
        %2728 = vmatpush.msra.mxu0 %v2727
        %v2729 = vand.u32 %v1961, 4294901760
        %2730 = vmatpush.msra.mxu0 %v2729
        %v2731 = vand.u32 %v1957, 4294901760
        %2732 = vmatpush.msra.mxu0 %v2731
        %v2733 = vand.u32 %v1953, 4294901760
        %v2734 = vsub.f32 %v1953, %v2733
        %v2735 = vand.u32 %v2734, 4294901760
        %v2736 = vsub.f32 %v2734, %v2735
        %v2737 = vand.u32 %v2736, 4294901760
        %2738 = vmatmul.f32.gmra.mxu0 %v2737
        %v2739 = vpop.f32.mrf.mxu0
        %v2740 = vadd.f32 0.0, %v2739
        %2741 = vdwg.mxu0
        %v2742 = vand.u32 %v2017, 4294901760
        %v2743 = vsub.f32 %v2017, %v2742
        %v2744 = vand.u32 %v2743, 4294901760
        %v2745 = vsub.f32 %v2743, %v2744
        %v2746 = vand.u32 %v2745, 4294901760
        %2747 = vmatpush.msra.mxu0 %v2746
        %v2748 = vand.u32 %v2013, 4294901760
        %v2749 = vsub.f32 %v2013, %v2748
        %v2750 = vand.u32 %v2749, 4294901760
        %v2751 = vsub.f32 %v2749, %v2750
        %v2752 = vand.u32 %v2751, 4294901760
        %2753 = vmatpush.msra.mxu0 %v2752
        %v2754 = vand.u32 %v2009, 4294901760
        %v2755 = vsub.f32 %v2009, %v2754
        %v2756 = vand.u32 %v2755, 4294901760
        %v2757 = vsub.f32 %v2755, %v2756
        %v2758 = vand.u32 %v2757, 4294901760
        %2759 = vmatpush.msra.mxu0 %v2758
        %v2760 = vand.u32 %v2005, 4294901760
        %v2761 = vsub.f32 %v2005, %v2760
        %v2762 = vand.u32 %v2761, 4294901760
        %v2763 = vsub.f32 %v2761, %v2762
        %v2764 = vand.u32 %v2763, 4294901760
        %2765 = vmatpush.msra.mxu0 %v2764
        %v2766 = vand.u32 %v2001, 4294901760
        %v2767 = vsub.f32 %v2001, %v2766
        %v2768 = vand.u32 %v2767, 4294901760
        %v2769 = vsub.f32 %v2767, %v2768
        %v2770 = vand.u32 %v2769, 4294901760
        %2771 = vmatpush.msra.mxu0 %v2770
        %v2772 = vand.u32 %v1997, 4294901760
        %v2773 = vsub.f32 %v1997, %v2772
        %v2774 = vand.u32 %v2773, 4294901760
        %v2775 = vsub.f32 %v2773, %v2774
        %v2776 = vand.u32 %v2775, 4294901760
        %2777 = vmatpush.msra.mxu0 %v2776
        %v2778 = vand.u32 %v1993, 4294901760
        %v2779 = vsub.f32 %v1993, %v2778
        %v2780 = vand.u32 %v2779, 4294901760
        %v2781 = vsub.f32 %v2779, %v2780
        %v2782 = vand.u32 %v2781, 4294901760
        %2783 = vmatpush.msra.mxu0 %v2782
        %v2784 = vand.u32 %v1989, 4294901760
        %v2785 = vsub.f32 %v1989, %v2784
        %v2786 = vand.u32 %v2785, 4294901760
        %v2787 = vsub.f32 %v2785, %v2786
        %v2788 = vand.u32 %v2787, 4294901760
        %2789 = vmatpush.msra.mxu0 %v2788
        %v2790 = vand.u32 %v1985, 4294901760
        %v2791 = vsub.f32 %v1985, %v2790
        %v2792 = vand.u32 %v2791, 4294901760
        %v2793 = vsub.f32 %v2791, %v2792
        %v2794 = vand.u32 %v2793, 4294901760
        %2795 = vmatpush.msra.mxu0 %v2794
        %v2796 = vand.u32 %v1981, 4294901760
        %v2797 = vsub.f32 %v1981, %v2796
        %v2798 = vand.u32 %v2797, 4294901760
        %v2799 = vsub.f32 %v2797, %v2798
        %v2800 = vand.u32 %v2799, 4294901760
        %2801 = vmatpush.msra.mxu0 %v2800
        %v2802 = vand.u32 %v1977, 4294901760
        %v2803 = vsub.f32 %v1977, %v2802
        %v2804 = vand.u32 %v2803, 4294901760
        %v2805 = vsub.f32 %v2803, %v2804
        %v2806 = vand.u32 %v2805, 4294901760
        %2807 = vmatpush.msra.mxu0 %v2806
        %v2808 = vand.u32 %v1973, 4294901760
        %v2809 = vsub.f32 %v1973, %v2808
        %v2810 = vand.u32 %v2809, 4294901760
        %v2811 = vsub.f32 %v2809, %v2810
        %v2812 = vand.u32 %v2811, 4294901760
        %2813 = vmatpush.msra.mxu0 %v2812
        %v2814 = vand.u32 %v1969, 4294901760
        %v2815 = vsub.f32 %v1969, %v2814
        %v2816 = vand.u32 %v2815, 4294901760
        %v2817 = vsub.f32 %v2815, %v2816
        %v2818 = vand.u32 %v2817, 4294901760
        %2819 = vmatpush.msra.mxu0 %v2818
        %v2820 = vand.u32 %v1965, 4294901760
        %v2821 = vsub.f32 %v1965, %v2820
        %v2822 = vand.u32 %v2821, 4294901760
        %v2823 = vsub.f32 %v2821, %v2822
        %v2824 = vand.u32 %v2823, 4294901760
        %2825 = vmatpush.msra.mxu0 %v2824
        %v2826 = vand.u32 %v1961, 4294901760
        %v2827 = vsub.f32 %v1961, %v2826
        %v2828 = vand.u32 %v2827, 4294901760
        %v2829 = vsub.f32 %v2827, %v2828
        %v2830 = vand.u32 %v2829, 4294901760
        %2831 = vmatpush.msra.mxu0 %v2830
        %v2832 = vand.u32 %v1957, 4294901760
        %v2833 = vsub.f32 %v1957, %v2832
        %v2834 = vand.u32 %v2833, 4294901760
        %v2835 = vsub.f32 %v2833, %v2834
        %v2836 = vand.u32 %v2835, 4294901760
        %2837 = vmatpush.msra.mxu0 %v2836
        %v2838 = vand.u32 %v1953, 4294901760
        %2839 = vmatmul.f32.gmra.mxu0 %v2838
        %v2840 = vpop.f32.mrf.mxu0
        %v2841 = vadd.f32 %v2740, %v2840
        %2842 = vdwg.mxu0
        %v2843 = vand.u32 %v2017, 4294901760
        %v2844 = vsub.f32 %v2017, %v2843
        %2845 = vmatpush.msra.mxu0 %v2844
        %v2846 = vand.u32 %v2013, 4294901760
        %v2847 = vsub.f32 %v2013, %v2846
        %2848 = vmatpush.msra.mxu0 %v2847
        %v2849 = vand.u32 %v2009, 4294901760
        %v2850 = vsub.f32 %v2009, %v2849
        %2851 = vmatpush.msra.mxu0 %v2850
        %v2852 = vand.u32 %v2005, 4294901760
        %v2853 = vsub.f32 %v2005, %v2852
        %2854 = vmatpush.msra.mxu0 %v2853
        %v2855 = vand.u32 %v2001, 4294901760
        %v2856 = vsub.f32 %v2001, %v2855
        %2857 = vmatpush.msra.mxu0 %v2856
        %v2858 = vand.u32 %v1997, 4294901760
        %v2859 = vsub.f32 %v1997, %v2858
        %2860 = vmatpush.msra.mxu0 %v2859
        %v2861 = vand.u32 %v1993, 4294901760
        %v2862 = vsub.f32 %v1993, %v2861
        %2863 = vmatpush.msra.mxu0 %v2862
        %v2864 = vand.u32 %v1989, 4294901760
        %v2865 = vsub.f32 %v1989, %v2864
        %2866 = vmatpush.msra.mxu0 %v2865
        %v2867 = vand.u32 %v1985, 4294901760
        %v2868 = vsub.f32 %v1985, %v2867
        %2869 = vmatpush.msra.mxu0 %v2868
        %v2870 = vand.u32 %v1981, 4294901760
        %v2871 = vsub.f32 %v1981, %v2870
        %2872 = vmatpush.msra.mxu0 %v2871
        %v2873 = vand.u32 %v1977, 4294901760
        %v2874 = vsub.f32 %v1977, %v2873
        %2875 = vmatpush.msra.mxu0 %v2874
        %v2876 = vand.u32 %v1973, 4294901760
        %v2877 = vsub.f32 %v1973, %v2876
        %2878 = vmatpush.msra.mxu0 %v2877
        %v2879 = vand.u32 %v1969, 4294901760
        %v2880 = vsub.f32 %v1969, %v2879
        %2881 = vmatpush.msra.mxu0 %v2880
        %v2882 = vand.u32 %v1965, 4294901760
        %v2883 = vsub.f32 %v1965, %v2882
        %2884 = vmatpush.msra.mxu0 %v2883
        %v2885 = vand.u32 %v1961, 4294901760
        %v2886 = vsub.f32 %v1961, %v2885
        %2887 = vmatpush.msra.mxu0 %v2886
        %v2888 = vand.u32 %v1957, 4294901760
        %v2889 = vsub.f32 %v1957, %v2888
        %2890 = vmatpush.msra.mxu0 %v2889
        %v2891 = vand.u32 %v1953, 4294901760
        %v2892 = vsub.f32 %v1953, %v2891
        %2893 = vmatmul.f32.gmra.mxu0 %v2892
        %v2894 = vpop.f32.mrf.mxu0
        %v2895 = vadd.f32 %v2841, %v2894
        %2896 = vdwg.mxu0
        %v2897 = vand.u32 %v2017, 4294901760
        %2898 = vmatpush.msra.mxu0 %v2897
        %v2899 = vand.u32 %v2013, 4294901760
        %2900 = vmatpush.msra.mxu0 %v2899
        %v2901 = vand.u32 %v2009, 4294901760
        %2902 = vmatpush.msra.mxu0 %v2901
        %v2903 = vand.u32 %v2005, 4294901760
        %2904 = vmatpush.msra.mxu0 %v2903
        %v2905 = vand.u32 %v2001, 4294901760
        %2906 = vmatpush.msra.mxu0 %v2905
        %v2907 = vand.u32 %v1997, 4294901760
        %2908 = vmatpush.msra.mxu0 %v2907
        %v2909 = vand.u32 %v1993, 4294901760
        %2910 = vmatpush.msra.mxu0 %v2909
        %v2911 = vand.u32 %v1989, 4294901760
        %2912 = vmatpush.msra.mxu0 %v2911
        %v2913 = vand.u32 %v1985, 4294901760
        %2914 = vmatpush.msra.mxu0 %v2913
        %v2915 = vand.u32 %v1981, 4294901760
        %2916 = vmatpush.msra.mxu0 %v2915
        %v2917 = vand.u32 %v1977, 4294901760
        %2918 = vmatpush.msra.mxu0 %v2917
        %v2919 = vand.u32 %v1973, 4294901760
        %2920 = vmatpush.msra.mxu0 %v2919
        %v2921 = vand.u32 %v1969, 4294901760
        %2922 = vmatpush.msra.mxu0 %v2921
        %v2923 = vand.u32 %v1965, 4294901760
        %2924 = vmatpush.msra.mxu0 %v2923
        %v2925 = vand.u32 %v1961, 4294901760
        %2926 = vmatpush.msra.mxu0 %v2925
        %v2927 = vand.u32 %v1957, 4294901760
        %2928 = vmatpush.msra.mxu0 %v2927
        %v2929 = vand.u32 %v1953, 4294901760
        %v2930 = vsub.f32 %v1953, %v2929
        %v2931 = vand.u32 %v2930, 4294901760
        %2932 = vmatmul.f32.gmra.mxu0 %v2931
        %v2933 = vpop.f32.mrf.mxu0
        %v2934 = vadd.f32 %v2895, %v2933
        %2935 = vdwg.mxu0
        %v2936 = vand.u32 %v2017, 4294901760
        %v2937 = vsub.f32 %v2017, %v2936
        %v2938 = vand.u32 %v2937, 4294901760
        %2939 = vmatpush.msra.mxu0 %v2938
        %v2940 = vand.u32 %v2013, 4294901760
        %v2941 = vsub.f32 %v2013, %v2940
        %v2942 = vand.u32 %v2941, 4294901760
        %2943 = vmatpush.msra.mxu0 %v2942
        %v2944 = vand.u32 %v2009, 4294901760
        %v2945 = vsub.f32 %v2009, %v2944
        %v2946 = vand.u32 %v2945, 4294901760
        %2947 = vmatpush.msra.mxu0 %v2946
        %v2948 = vand.u32 %v2005, 4294901760
        %v2949 = vsub.f32 %v2005, %v2948
        %v2950 = vand.u32 %v2949, 4294901760
        %2951 = vmatpush.msra.mxu0 %v2950
        %v2952 = vand.u32 %v2001, 4294901760
        %v2953 = vsub.f32 %v2001, %v2952
        %v2954 = vand.u32 %v2953, 4294901760
        %2955 = vmatpush.msra.mxu0 %v2954
        %v2956 = vand.u32 %v1997, 4294901760
        %v2957 = vsub.f32 %v1997, %v2956
        %v2958 = vand.u32 %v2957, 4294901760
        %2959 = vmatpush.msra.mxu0 %v2958
        %v2960 = vand.u32 %v1993, 4294901760
        %v2961 = vsub.f32 %v1993, %v2960
        %v2962 = vand.u32 %v2961, 4294901760
        %2963 = vmatpush.msra.mxu0 %v2962
        %v2964 = vand.u32 %v1989, 4294901760
        %v2965 = vsub.f32 %v1989, %v2964
        %v2966 = vand.u32 %v2965, 4294901760
        %2967 = vmatpush.msra.mxu0 %v2966
        %v2968 = vand.u32 %v1985, 4294901760
        %v2969 = vsub.f32 %v1985, %v2968
        %v2970 = vand.u32 %v2969, 4294901760
        %2971 = vmatpush.msra.mxu0 %v2970
        %v2972 = vand.u32 %v1981, 4294901760
        %v2973 = vsub.f32 %v1981, %v2972
        %v2974 = vand.u32 %v2973, 4294901760
        %2975 = vmatpush.msra.mxu0 %v2974
        %v2976 = vand.u32 %v1977, 4294901760
        %v2977 = vsub.f32 %v1977, %v2976
        %v2978 = vand.u32 %v2977, 4294901760
        %2979 = vmatpush.msra.mxu0 %v2978
        %v2980 = vand.u32 %v1973, 4294901760
        %v2981 = vsub.f32 %v1973, %v2980
        %v2982 = vand.u32 %v2981, 4294901760
        %2983 = vmatpush.msra.mxu0 %v2982
        %v2984 = vand.u32 %v1969, 4294901760
        %v2985 = vsub.f32 %v1969, %v2984
        %v2986 = vand.u32 %v2985, 4294901760
        %2987 = vmatpush.msra.mxu0 %v2986
        %v2988 = vand.u32 %v1965, 4294901760
        %v2989 = vsub.f32 %v1965, %v2988
        %v2990 = vand.u32 %v2989, 4294901760
        %2991 = vmatpush.msra.mxu0 %v2990
        %v2992 = vand.u32 %v1961, 4294901760
        %v2993 = vsub.f32 %v1961, %v2992
        %v2994 = vand.u32 %v2993, 4294901760
        %2995 = vmatpush.msra.mxu0 %v2994
        %v2996 = vand.u32 %v1957, 4294901760
        %v2997 = vsub.f32 %v1957, %v2996
        %v2998 = vand.u32 %v2997, 4294901760
        %2999 = vmatpush.msra.mxu0 %v2998
        %v3000 = vand.u32 %v1953, 4294901760
        %3001 = vmatmul.f32.gmra.mxu0 %v3000
        %v3002 = vpop.f32.mrf.mxu0
        %v3003 = vadd.f32 %v2934, %v3002
        %3004 = vdwg.mxu0
        %v3005 = vand.u32 %v2017, 4294901760
        %3006 = vmatpush.msra.mxu0 %v3005
        %v3007 = vand.u32 %v2013, 4294901760
        %3008 = vmatpush.msra.mxu0 %v3007
        %v3009 = vand.u32 %v2009, 4294901760
        %3010 = vmatpush.msra.mxu0 %v3009
        %v3011 = vand.u32 %v2005, 4294901760
        %3012 = vmatpush.msra.mxu0 %v3011
        %v3013 = vand.u32 %v2001, 4294901760
        %3014 = vmatpush.msra.mxu0 %v3013
        %v3015 = vand.u32 %v1997, 4294901760
        %3016 = vmatpush.msra.mxu0 %v3015
        %v3017 = vand.u32 %v1993, 4294901760
        %3018 = vmatpush.msra.mxu0 %v3017
        %v3019 = vand.u32 %v1989, 4294901760
        %3020 = vmatpush.msra.mxu0 %v3019
        %v3021 = vand.u32 %v1985, 4294901760
        %3022 = vmatpush.msra.mxu0 %v3021
        %v3023 = vand.u32 %v1981, 4294901760
        %3024 = vmatpush.msra.mxu0 %v3023
        %v3025 = vand.u32 %v1977, 4294901760
        %3026 = vmatpush.msra.mxu0 %v3025
        %v3027 = vand.u32 %v1973, 4294901760
        %3028 = vmatpush.msra.mxu0 %v3027
        %v3029 = vand.u32 %v1969, 4294901760
        %3030 = vmatpush.msra.mxu0 %v3029
        %v3031 = vand.u32 %v1965, 4294901760
        %3032 = vmatpush.msra.mxu0 %v3031
        %v3033 = vand.u32 %v1961, 4294901760
        %3034 = vmatpush.msra.mxu0 %v3033
        %v3035 = vand.u32 %v1957, 4294901760
        %3036 = vmatpush.msra.mxu0 %v3035
        %v3037 = vand.u32 %v1953, 4294901760
        %3038 = vmatmul.f32.gmra.mxu0 %v3037
        %v3039 = vpop.f32.mrf.mxu0
        %v3040 = vadd.f32 %v3003, %v3039
        %3041 = vdwg.mxu0
        %v3042 = vand.u32 %v2018, 4294901760
        %3043 = vmatpush.msra.mxu0 %v3042
        %v3044 = vand.u32 %v2014, 4294901760
        %3045 = vmatpush.msra.mxu0 %v3044
        %v3046 = vand.u32 %v2010, 4294901760
        %3047 = vmatpush.msra.mxu0 %v3046
        %v3048 = vand.u32 %v2006, 4294901760
        %3049 = vmatpush.msra.mxu0 %v3048
        %v3050 = vand.u32 %v2002, 4294901760
        %3051 = vmatpush.msra.mxu0 %v3050
        %v3052 = vand.u32 %v1998, 4294901760
        %3053 = vmatpush.msra.mxu0 %v3052
        %v3054 = vand.u32 %v1994, 4294901760
        %3055 = vmatpush.msra.mxu0 %v3054
        %v3056 = vand.u32 %v1990, 4294901760
        %3057 = vmatpush.msra.mxu0 %v3056
        %v3058 = vand.u32 %v1986, 4294901760
        %3059 = vmatpush.msra.mxu0 %v3058
        %v3060 = vand.u32 %v1982, 4294901760
        %3061 = vmatpush.msra.mxu0 %v3060
        %v3062 = vand.u32 %v1978, 4294901760
        %3063 = vmatpush.msra.mxu0 %v3062
        %v3064 = vand.u32 %v1974, 4294901760
        %3065 = vmatpush.msra.mxu0 %v3064
        %v3066 = vand.u32 %v1970, 4294901760
        %3067 = vmatpush.msra.mxu0 %v3066
        %v3068 = vand.u32 %v1966, 4294901760
        %3069 = vmatpush.msra.mxu0 %v3068
        %v3070 = vand.u32 %v1962, 4294901760
        %3071 = vmatpush.msra.mxu0 %v3070
        %v3072 = vand.u32 %v1958, 4294901760
        %3073 = vmatpush.msra.mxu0 %v3072
        %v3074 = vand.u32 %v1953, 4294901760
        %v3075 = vsub.f32 %v1953, %v3074
        %v3076 = vand.u32 %v3075, 4294901760
        %v3077 = vsub.f32 %v3075, %v3076
        %v3078 = vand.u32 %v3077, 4294901760
        %3079 = vmatmul.f32.gmra.mxu0 %v3078
        %v3080 = vpop.f32.mrf.mxu0
        %v3081 = vadd.f32 0.0, %v3080
        %3082 = vdwg.mxu0
        %v3083 = vand.u32 %v2018, 4294901760
        %v3084 = vsub.f32 %v2018, %v3083
        %v3085 = vand.u32 %v3084, 4294901760
        %v3086 = vsub.f32 %v3084, %v3085
        %v3087 = vand.u32 %v3086, 4294901760
        %3088 = vmatpush.msra.mxu0 %v3087
        %v3089 = vand.u32 %v2014, 4294901760
        %v3090 = vsub.f32 %v2014, %v3089
        %v3091 = vand.u32 %v3090, 4294901760
        %v3092 = vsub.f32 %v3090, %v3091
        %v3093 = vand.u32 %v3092, 4294901760
        %3094 = vmatpush.msra.mxu0 %v3093
        %v3095 = vand.u32 %v2010, 4294901760
        %v3096 = vsub.f32 %v2010, %v3095
        %v3097 = vand.u32 %v3096, 4294901760
        %v3098 = vsub.f32 %v3096, %v3097
        %v3099 = vand.u32 %v3098, 4294901760
        %3100 = vmatpush.msra.mxu0 %v3099
        %v3101 = vand.u32 %v2006, 4294901760
        %v3102 = vsub.f32 %v2006, %v3101
        %v3103 = vand.u32 %v3102, 4294901760
        %v3104 = vsub.f32 %v3102, %v3103
        %v3105 = vand.u32 %v3104, 4294901760
        %3106 = vmatpush.msra.mxu0 %v3105
        %v3107 = vand.u32 %v2002, 4294901760
        %v3108 = vsub.f32 %v2002, %v3107
        %v3109 = vand.u32 %v3108, 4294901760
        %v3110 = vsub.f32 %v3108, %v3109
        %v3111 = vand.u32 %v3110, 4294901760
        %3112 = vmatpush.msra.mxu0 %v3111
        %v3113 = vand.u32 %v1998, 4294901760
        %v3114 = vsub.f32 %v1998, %v3113
        %v3115 = vand.u32 %v3114, 4294901760
        %v3116 = vsub.f32 %v3114, %v3115
        %v3117 = vand.u32 %v3116, 4294901760
        %3118 = vmatpush.msra.mxu0 %v3117
        %v3119 = vand.u32 %v1994, 4294901760
        %v3120 = vsub.f32 %v1994, %v3119
        %v3121 = vand.u32 %v3120, 4294901760
        %v3122 = vsub.f32 %v3120, %v3121
        %v3123 = vand.u32 %v3122, 4294901760
        %3124 = vmatpush.msra.mxu0 %v3123
        %v3125 = vand.u32 %v1990, 4294901760
        %v3126 = vsub.f32 %v1990, %v3125
        %v3127 = vand.u32 %v3126, 4294901760
        %v3128 = vsub.f32 %v3126, %v3127
        %v3129 = vand.u32 %v3128, 4294901760
        %3130 = vmatpush.msra.mxu0 %v3129
        %v3131 = vand.u32 %v1986, 4294901760
        %v3132 = vsub.f32 %v1986, %v3131
        %v3133 = vand.u32 %v3132, 4294901760
        %v3134 = vsub.f32 %v3132, %v3133
        %v3135 = vand.u32 %v3134, 4294901760
        %3136 = vmatpush.msra.mxu0 %v3135
        %v3137 = vand.u32 %v1982, 4294901760
        %v3138 = vsub.f32 %v1982, %v3137
        %v3139 = vand.u32 %v3138, 4294901760
        %v3140 = vsub.f32 %v3138, %v3139
        %v3141 = vand.u32 %v3140, 4294901760
        %3142 = vmatpush.msra.mxu0 %v3141
        %v3143 = vand.u32 %v1978, 4294901760
        %v3144 = vsub.f32 %v1978, %v3143
        %v3145 = vand.u32 %v3144, 4294901760
        %v3146 = vsub.f32 %v3144, %v3145
        %v3147 = vand.u32 %v3146, 4294901760
        %3148 = vmatpush.msra.mxu0 %v3147
        %v3149 = vand.u32 %v1974, 4294901760
        %v3150 = vsub.f32 %v1974, %v3149
        %v3151 = vand.u32 %v3150, 4294901760
        %v3152 = vsub.f32 %v3150, %v3151
        %v3153 = vand.u32 %v3152, 4294901760
        %3154 = vmatpush.msra.mxu0 %v3153
        %v3155 = vand.u32 %v1970, 4294901760
        %v3156 = vsub.f32 %v1970, %v3155
        %v3157 = vand.u32 %v3156, 4294901760
        %v3158 = vsub.f32 %v3156, %v3157
        %v3159 = vand.u32 %v3158, 4294901760
        %3160 = vmatpush.msra.mxu0 %v3159
        %v3161 = vand.u32 %v1966, 4294901760
        %v3162 = vsub.f32 %v1966, %v3161
        %v3163 = vand.u32 %v3162, 4294901760
        %v3164 = vsub.f32 %v3162, %v3163
        %v3165 = vand.u32 %v3164, 4294901760
        %3166 = vmatpush.msra.mxu0 %v3165
        %v3167 = vand.u32 %v1962, 4294901760
        %v3168 = vsub.f32 %v1962, %v3167
        %v3169 = vand.u32 %v3168, 4294901760
        %v3170 = vsub.f32 %v3168, %v3169
        %v3171 = vand.u32 %v3170, 4294901760
        %3172 = vmatpush.msra.mxu0 %v3171
        %v3173 = vand.u32 %v1958, 4294901760
        %v3174 = vsub.f32 %v1958, %v3173
        %v3175 = vand.u32 %v3174, 4294901760
        %v3176 = vsub.f32 %v3174, %v3175
        %v3177 = vand.u32 %v3176, 4294901760
        %3178 = vmatpush.msra.mxu0 %v3177
        %v3179 = vand.u32 %v1953, 4294901760
        %3180 = vmatmul.f32.gmra.mxu0 %v3179
        %v3181 = vpop.f32.mrf.mxu0
        %v3182 = vadd.f32 %v3081, %v3181
        %3183 = vdwg.mxu0
        %v3184 = vand.u32 %v2018, 4294901760
        %v3185 = vsub.f32 %v2018, %v3184
        %3186 = vmatpush.msra.mxu0 %v3185
        %v3187 = vand.u32 %v2014, 4294901760
        %v3188 = vsub.f32 %v2014, %v3187
        %3189 = vmatpush.msra.mxu0 %v3188
        %v3190 = vand.u32 %v2010, 4294901760
        %v3191 = vsub.f32 %v2010, %v3190
        %3192 = vmatpush.msra.mxu0 %v3191
        %v3193 = vand.u32 %v2006, 4294901760
        %v3194 = vsub.f32 %v2006, %v3193
        %3195 = vmatpush.msra.mxu0 %v3194
        %v3196 = vand.u32 %v2002, 4294901760
        %v3197 = vsub.f32 %v2002, %v3196
        %3198 = vmatpush.msra.mxu0 %v3197
        %v3199 = vand.u32 %v1998, 4294901760
        %v3200 = vsub.f32 %v1998, %v3199
        %3201 = vmatpush.msra.mxu0 %v3200
        %v3202 = vand.u32 %v1994, 4294901760
        %v3203 = vsub.f32 %v1994, %v3202
        %3204 = vmatpush.msra.mxu0 %v3203
        %v3205 = vand.u32 %v1990, 4294901760
        %v3206 = vsub.f32 %v1990, %v3205
        %3207 = vmatpush.msra.mxu0 %v3206
        %v3208 = vand.u32 %v1986, 4294901760
        %v3209 = vsub.f32 %v1986, %v3208
        %3210 = vmatpush.msra.mxu0 %v3209
        %v3211 = vand.u32 %v1982, 4294901760
        %v3212 = vsub.f32 %v1982, %v3211
        %3213 = vmatpush.msra.mxu0 %v3212
        %v3214 = vand.u32 %v1978, 4294901760
        %v3215 = vsub.f32 %v1978, %v3214
        %3216 = vmatpush.msra.mxu0 %v3215
        %v3217 = vand.u32 %v1974, 4294901760
        %v3218 = vsub.f32 %v1974, %v3217
        %3219 = vmatpush.msra.mxu0 %v3218
        %v3220 = vand.u32 %v1970, 4294901760
        %v3221 = vsub.f32 %v1970, %v3220
        %3222 = vmatpush.msra.mxu0 %v3221
        %v3223 = vand.u32 %v1966, 4294901760
        %v3224 = vsub.f32 %v1966, %v3223
        %3225 = vmatpush.msra.mxu0 %v3224
        %v3226 = vand.u32 %v1962, 4294901760
        %v3227 = vsub.f32 %v1962, %v3226
        %3228 = vmatpush.msra.mxu0 %v3227
        %v3229 = vand.u32 %v1958, 4294901760
        %v3230 = vsub.f32 %v1958, %v3229
        %3231 = vmatpush.msra.mxu0 %v3230
        %v3232 = vand.u32 %v1953, 4294901760
        %v3233 = vsub.f32 %v1953, %v3232
        %3234 = vmatmul.f32.gmra.mxu0 %v3233
        %v3235 = vpop.f32.mrf.mxu0
        %v3236 = vadd.f32 %v3182, %v3235
        %3237 = vdwg.mxu0
        %v3238 = vand.u32 %v2018, 4294901760
        %3239 = vmatpush.msra.mxu0 %v3238
        %v3240 = vand.u32 %v2014, 4294901760
        %3241 = vmatpush.msra.mxu0 %v3240
        %v3242 = vand.u32 %v2010, 4294901760
        %3243 = vmatpush.msra.mxu0 %v3242
        %v3244 = vand.u32 %v2006, 4294901760
        %3245 = vmatpush.msra.mxu0 %v3244
        %v3246 = vand.u32 %v2002, 4294901760
        %3247 = vmatpush.msra.mxu0 %v3246
        %v3248 = vand.u32 %v1998, 4294901760
        %3249 = vmatpush.msra.mxu0 %v3248
        %v3250 = vand.u32 %v1994, 4294901760
        %3251 = vmatpush.msra.mxu0 %v3250
        %v3252 = vand.u32 %v1990, 4294901760
        %3253 = vmatpush.msra.mxu0 %v3252
        %v3254 = vand.u32 %v1986, 4294901760
        %3255 = vmatpush.msra.mxu0 %v3254
        %v3256 = vand.u32 %v1982, 4294901760
        %3257 = vmatpush.msra.mxu0 %v3256
        %v3258 = vand.u32 %v1978, 4294901760
        %3259 = vmatpush.msra.mxu0 %v3258
        %v3260 = vand.u32 %v1974, 4294901760
        %3261 = vmatpush.msra.mxu0 %v3260
        %v3262 = vand.u32 %v1970, 4294901760
        %3263 = vmatpush.msra.mxu0 %v3262
        %v3264 = vand.u32 %v1966, 4294901760
        %3265 = vmatpush.msra.mxu0 %v3264
        %v3266 = vand.u32 %v1962, 4294901760
        %3267 = vmatpush.msra.mxu0 %v3266
        %v3268 = vand.u32 %v1958, 4294901760
        %3269 = vmatpush.msra.mxu0 %v3268
        %v3270 = vand.u32 %v1953, 4294901760
        %v3271 = vsub.f32 %v1953, %v3270
        %v3272 = vand.u32 %v3271, 4294901760
        %3273 = vmatmul.f32.gmra.mxu0 %v3272
        %v3274 = vpop.f32.mrf.mxu0
        %v3275 = vadd.f32 %v3236, %v3274
        %3276 = vdwg.mxu0
        %v3277 = vand.u32 %v2018, 4294901760
        %v3278 = vsub.f32 %v2018, %v3277
        %v3279 = vand.u32 %v3278, 4294901760
        %3280 = vmatpush.msra.mxu0 %v3279
        %v3281 = vand.u32 %v2014, 4294901760
        %v3282 = vsub.f32 %v2014, %v3281
        %v3283 = vand.u32 %v3282, 4294901760
        %3284 = vmatpush.msra.mxu0 %v3283
        %v3285 = vand.u32 %v2010, 4294901760
        %v3286 = vsub.f32 %v2010, %v3285
        %v3287 = vand.u32 %v3286, 4294901760
        %3288 = vmatpush.msra.mxu0 %v3287
        %v3289 = vand.u32 %v2006, 4294901760
        %v3290 = vsub.f32 %v2006, %v3289
        %v3291 = vand.u32 %v3290, 4294901760
        %3292 = vmatpush.msra.mxu0 %v3291
        %v3293 = vand.u32 %v2002, 4294901760
        %v3294 = vsub.f32 %v2002, %v3293
        %v3295 = vand.u32 %v3294, 4294901760
        %3296 = vmatpush.msra.mxu0 %v3295
        %v3297 = vand.u32 %v1998, 4294901760
        %v3298 = vsub.f32 %v1998, %v3297
        %v3299 = vand.u32 %v3298, 4294901760
        %3300 = vmatpush.msra.mxu0 %v3299
        %v3301 = vand.u32 %v1994, 4294901760
        %v3302 = vsub.f32 %v1994, %v3301
        %v3303 = vand.u32 %v3302, 4294901760
        %3304 = vmatpush.msra.mxu0 %v3303
        %v3305 = vand.u32 %v1990, 4294901760
        %v3306 = vsub.f32 %v1990, %v3305
        %v3307 = vand.u32 %v3306, 4294901760
        %3308 = vmatpush.msra.mxu0 %v3307
        %v3309 = vand.u32 %v1986, 4294901760
        %v3310 = vsub.f32 %v1986, %v3309
        %v3311 = vand.u32 %v3310, 4294901760
        %3312 = vmatpush.msra.mxu0 %v3311
        %v3313 = vand.u32 %v1982, 4294901760
        %v3314 = vsub.f32 %v1982, %v3313
        %v3315 = vand.u32 %v3314, 4294901760
        %3316 = vmatpush.msra.mxu0 %v3315
        %v3317 = vand.u32 %v1978, 4294901760
        %v3318 = vsub.f32 %v1978, %v3317
        %v3319 = vand.u32 %v3318, 4294901760
        %3320 = vmatpush.msra.mxu0 %v3319
        %v3321 = vand.u32 %v1974, 4294901760
        %v3322 = vsub.f32 %v1974, %v3321
        %v3323 = vand.u32 %v3322, 4294901760
        %3324 = vmatpush.msra.mxu0 %v3323
        %v3325 = vand.u32 %v1970, 4294901760
        %v3326 = vsub.f32 %v1970, %v3325
        %v3327 = vand.u32 %v3326, 4294901760
        %3328 = vmatpush.msra.mxu0 %v3327
        %v3329 = vand.u32 %v1966, 4294901760
        %v3330 = vsub.f32 %v1966, %v3329
        %v3331 = vand.u32 %v3330, 4294901760
        %3332 = vmatpush.msra.mxu0 %v3331
        %v3333 = vand.u32 %v1962, 4294901760
        %v3334 = vsub.f32 %v1962, %v3333
        %v3335 = vand.u32 %v3334, 4294901760
        %3336 = vmatpush.msra.mxu0 %v3335
        %v3337 = vand.u32 %v1958, 4294901760
        %v3338 = vsub.f32 %v1958, %v3337
        %v3339 = vand.u32 %v3338, 4294901760
        %3340 = vmatpush.msra.mxu0 %v3339
        %v3341 = vand.u32 %v1953, 4294901760
        %3342 = vmatmul.f32.gmra.mxu0 %v3341
        %v3343 = vpop.f32.mrf.mxu0
        %v3344 = vadd.f32 %v3275, %v3343
        %3345 = vdwg.mxu0
        %v3346 = vand.u32 %v2018, 4294901760
        %3347 = vmatpush.msra.mxu0 %v3346
        %v3348 = vand.u32 %v2014, 4294901760
        %3349 = vmatpush.msra.mxu0 %v3348
        %v3350 = vand.u32 %v2010, 4294901760
        %3351 = vmatpush.msra.mxu0 %v3350
        %v3352 = vand.u32 %v2006, 4294901760
        %3353 = vmatpush.msra.mxu0 %v3352
        %v3354 = vand.u32 %v2002, 4294901760
        %3355 = vmatpush.msra.mxu0 %v3354
        %v3356 = vand.u32 %v1998, 4294901760
        %3357 = vmatpush.msra.mxu0 %v3356
        %v3358 = vand.u32 %v1994, 4294901760
        %3359 = vmatpush.msra.mxu0 %v3358
        %v3360 = vand.u32 %v1990, 4294901760
        %3361 = vmatpush.msra.mxu0 %v3360
        %v3362 = vand.u32 %v1986, 4294901760
        %3363 = vmatpush.msra.mxu0 %v3362
        %v3364 = vand.u32 %v1982, 4294901760
        %3365 = vmatpush.msra.mxu0 %v3364
        %v3366 = vand.u32 %v1978, 4294901760
        %3367 = vmatpush.msra.mxu0 %v3366
        %v3368 = vand.u32 %v1974, 4294901760
        %3369 = vmatpush.msra.mxu0 %v3368
        %v3370 = vand.u32 %v1970, 4294901760
        %3371 = vmatpush.msra.mxu0 %v3370
        %v3372 = vand.u32 %v1966, 4294901760
        %3373 = vmatpush.msra.mxu0 %v3372
        %v3374 = vand.u32 %v1962, 4294901760
        %3375 = vmatpush.msra.mxu0 %v3374
        %v3376 = vand.u32 %v1958, 4294901760
        %3377 = vmatpush.msra.mxu0 %v3376
        %v3378 = vand.u32 %v1953, 4294901760
        %3379 = vmatmul.f32.gmra.mxu0 %v3378
        %v3380 = vpop.f32.mrf.mxu0
        %v3381 = vadd.f32 %v3344, %v3380
        %3382 = vdwg.mxu0
        %v3383 = vadd.f32 %v1949, %v2358
        %v3384 = vadd.f32 %v1950, %v2699
        %v3385 = vadd.f32 %v1951, %v3040
        %v3386 = vadd.f32 %v1952, %v3381
        %v3387 = vld [vmem:[#allocation2 + $0x10] sm:$0xff]
        %s3388 = scalar_lea.vmem [#allocation3], 1024
        %v3389 = vld [vmem:[%s3388] sm:$0xff]
        %v3390 = vld [vmem:[%s3388 + $0x8] sm:$0xff]
        %v3391 = vld [vmem:[%s3388 + $0x10] sm:$0xff]
        %v3392 = vld [vmem:[%s3388 + $0x18] sm:$0xff]
        %v3393 = vld [vmem:[%s3388 + $0x20] sm:$0xff]
        %v3394 = vld [vmem:[%s3388 + $0x28] sm:$0xff]
        %v3395 = vld [vmem:[%s3388 + $0x30] sm:$0xff]
        %v3396 = vld [vmem:[%s3388 + $0x38] sm:$0xff]
        %v3397 = vld [vmem:[%s3388 + $0x40] sm:$0xff]
        %v3398 = vld [vmem:[%s3388 + $0x48] sm:$0xff]
        %v3399 = vld [vmem:[%s3388 + $0x50] sm:$0xff]
        %v3400 = vld [vmem:[%s3388 + $0x58] sm:$0xff]
        %v3401 = vld [vmem:[%s3388 + $0x60] sm:$0xff]
        %v3402 = vld [vmem:[%s3388 + $0x68] sm:$0xff]
        %v3403 = vld [vmem:[%s3388 + $0x70] sm:$0xff]
        %v3404 = vld [vmem:[%s3388 + $0x78] sm:$0xff]
        %v3405 = vld [vmem:[%s3388 + $0x80] sm:$0xff]
        %v3406 = vld [vmem:[%s3388 + $0x88] sm:$0xff]
        %v3407 = vld [vmem:[%s3388 + $0x90] sm:$0xff]
        %v3408 = vld [vmem:[%s3388 + $0x98] sm:$0xff]
        %v3409 = vld [vmem:[%s3388 + $0xa0] sm:$0xff]
        %v3410 = vld [vmem:[%s3388 + $0xa8] sm:$0xff]
        %v3411 = vld [vmem:[%s3388 + $0xb0] sm:$0xff]
        %v3412 = vld [vmem:[%s3388 + $0xb8] sm:$0xff]
        %v3413 = vld [vmem:[%s3388 + $0xc0] sm:$0xff]
        %v3414 = vld [vmem:[%s3388 + $0xc8] sm:$0xff]
        %v3415 = vld [vmem:[%s3388 + $0xd0] sm:$0xff]
        %v3416 = vld [vmem:[%s3388 + $0xd8] sm:$0xff]
        %v3417 = vld [vmem:[%s3388 + $0xe0] sm:$0xff]
        %v3418 = vld [vmem:[%s3388 + $0xe8] sm:$0xff]
        %v3419 = vld [vmem:[%s3388 + $0xf0] sm:$0xff]
        %v3420 = vld [vmem:[%s3388 + $0xf8] sm:$0xff]
        %v3421 = vld [vmem:[%s3388 + $0x100] sm:$0xff]
        %v3422 = vld [vmem:[%s3388 + $0x108] sm:$0xff]
        %v3423 = vld [vmem:[%s3388 + $0x110] sm:$0xff]
        %v3424 = vld [vmem:[%s3388 + $0x118] sm:$0xff]
        %v3425 = vld [vmem:[%s3388 + $0x120] sm:$0xff]
        %v3426 = vld [vmem:[%s3388 + $0x128] sm:$0xff]
        %v3427 = vld [vmem:[%s3388 + $0x130] sm:$0xff]
        %v3428 = vld [vmem:[%s3388 + $0x138] sm:$0xff]
        %v3429 = vld [vmem:[%s3388 + $0x140] sm:$0xff]
        %v3430 = vld [vmem:[%s3388 + $0x148] sm:$0xff]
        %v3431 = vld [vmem:[%s3388 + $0x150] sm:$0xff]
        %v3432 = vld [vmem:[%s3388 + $0x158] sm:$0xff]
        %v3433 = vld [vmem:[%s3388 + $0x160] sm:$0xff]
        %v3434 = vld [vmem:[%s3388 + $0x168] sm:$0xff]
        %v3435 = vld [vmem:[%s3388 + $0x170] sm:$0xff]
        %v3436 = vld [vmem:[%s3388 + $0x178] sm:$0xff]
        %v3437 = vld [vmem:[%s3388 + $0x180] sm:$0xff]
        %v3438 = vld [vmem:[%s3388 + $0x188] sm:$0xff]
        %v3439 = vld [vmem:[%s3388 + $0x190] sm:$0xff]
        %v3440 = vld [vmem:[%s3388 + $0x198] sm:$0xff]
        %v3441 = vld [vmem:[%s3388 + $0x1a0] sm:$0xff]
        %v3442 = vld [vmem:[%s3388 + $0x1a8] sm:$0xff]
        %v3443 = vld [vmem:[%s3388 + $0x1b0] sm:$0xff]
        %v3444 = vld [vmem:[%s3388 + $0x1b8] sm:$0xff]
        %v3445 = vld [vmem:[%s3388 + $0x1c0] sm:$0xff]
        %v3446 = vld [vmem:[%s3388 + $0x1c8] sm:$0xff]
        %v3447 = vld [vmem:[%s3388 + $0x1d0] sm:$0xff]
        %v3448 = vld [vmem:[%s3388 + $0x1d8] sm:$0xff]
        %v3449 = vld [vmem:[%s3388 + $0x1e0] sm:$0xff]
        %v3450 = vld [vmem:[%s3388 + $0x1e8] sm:$0xff]
        %v3451 = vld [vmem:[%s3388 + $0x1f0] sm:$0xff]
        %v3452 = vld [vmem:[%s3388 + $0x1f8] sm:$0xff]
        %v3453 = vand.u32 %v3449, 4294901760
        %3454 = vmatpush.msra.mxu0 %v3453
        %v3455 = vand.u32 %v3445, 4294901760
        %3456 = vmatpush.msra.mxu0 %v3455
        %v3457 = vand.u32 %v3441, 4294901760
        %3458 = vmatpush.msra.mxu0 %v3457
        %v3459 = vand.u32 %v3437, 4294901760
        %3460 = vmatpush.msra.mxu0 %v3459
        %v3461 = vand.u32 %v3433, 4294901760
        %3462 = vmatpush.msra.mxu0 %v3461
        %v3463 = vand.u32 %v3429, 4294901760
        %3464 = vmatpush.msra.mxu0 %v3463
        %v3465 = vand.u32 %v3425, 4294901760
        %3466 = vmatpush.msra.mxu0 %v3465
        %v3467 = vand.u32 %v3421, 4294901760
        %3468 = vmatpush.msra.mxu0 %v3467
        %v3469 = vand.u32 %v3417, 4294901760
        %3470 = vmatpush.msra.mxu0 %v3469
        %v3471 = vand.u32 %v3413, 4294901760
        %3472 = vmatpush.msra.mxu0 %v3471
        %v3473 = vand.u32 %v3409, 4294901760
        %3474 = vmatpush.msra.mxu0 %v3473
        %v3475 = vand.u32 %v3405, 4294901760
        %3476 = vmatpush.msra.mxu0 %v3475
        %v3477 = vand.u32 %v3401, 4294901760
        %3478 = vmatpush.msra.mxu0 %v3477
        %v3479 = vand.u32 %v3397, 4294901760
        %3480 = vmatpush.msra.mxu0 %v3479
        %v3481 = vand.u32 %v3393, 4294901760
        %3482 = vmatpush.msra.mxu0 %v3481
        %v3483 = vand.u32 %v3389, 4294901760
        %3484 = vmatpush.msra.mxu0 %v3483
        %v3485 = vand.u32 %v3387, 4294901760
        %v3486 = vsub.f32 %v3387, %v3485
        %v3487 = vand.u32 %v3486, 4294901760
        %v3488 = vsub.f32 %v3486, %v3487
        %v3489 = vand.u32 %v3488, 4294901760
        %3490 = vmatmul.f32.gmra.mxu0 %v3489
        %v3491 = vpop.f32.mrf.mxu0
        %v3492 = vadd.f32 0.0, %v3491
        %3493 = vdwg.mxu0
        %v3494 = vand.u32 %v3449, 4294901760
        %v3495 = vsub.f32 %v3449, %v3494
        %v3496 = vand.u32 %v3495, 4294901760
        %v3497 = vsub.f32 %v3495, %v3496
        %v3498 = vand.u32 %v3497, 4294901760
        %3499 = vmatpush.msra.mxu0 %v3498
        %v3500 = vand.u32 %v3445, 4294901760
        %v3501 = vsub.f32 %v3445, %v3500
        %v3502 = vand.u32 %v3501, 4294901760
        %v3503 = vsub.f32 %v3501, %v3502
        %v3504 = vand.u32 %v3503, 4294901760
        %3505 = vmatpush.msra.mxu0 %v3504
        %v3506 = vand.u32 %v3441, 4294901760
        %v3507 = vsub.f32 %v3441, %v3506
        %v3508 = vand.u32 %v3507, 4294901760
        %v3509 = vsub.f32 %v3507, %v3508
        %v3510 = vand.u32 %v3509, 4294901760
        %3511 = vmatpush.msra.mxu0 %v3510
        %v3512 = vand.u32 %v3437, 4294901760
        %v3513 = vsub.f32 %v3437, %v3512
        %v3514 = vand.u32 %v3513, 4294901760
        %v3515 = vsub.f32 %v3513, %v3514
        %v3516 = vand.u32 %v3515, 4294901760
        %3517 = vmatpush.msra.mxu0 %v3516
        %v3518 = vand.u32 %v3433, 4294901760
        %v3519 = vsub.f32 %v3433, %v3518
        %v3520 = vand.u32 %v3519, 4294901760
        %v3521 = vsub.f32 %v3519, %v3520
        %v3522 = vand.u32 %v3521, 4294901760
        %3523 = vmatpush.msra.mxu0 %v3522
        %v3524 = vand.u32 %v3429, 4294901760
        %v3525 = vsub.f32 %v3429, %v3524
        %v3526 = vand.u32 %v3525, 4294901760
        %v3527 = vsub.f32 %v3525, %v3526
        %v3528 = vand.u32 %v3527, 4294901760
        %3529 = vmatpush.msra.mxu0 %v3528
        %v3530 = vand.u32 %v3425, 4294901760
        %v3531 = vsub.f32 %v3425, %v3530
        %v3532 = vand.u32 %v3531, 4294901760
        %v3533 = vsub.f32 %v3531, %v3532
        %v3534 = vand.u32 %v3533, 4294901760
        %3535 = vmatpush.msra.mxu0 %v3534
        %v3536 = vand.u32 %v3421, 4294901760
        %v3537 = vsub.f32 %v3421, %v3536
        %v3538 = vand.u32 %v3537, 4294901760
        %v3539 = vsub.f32 %v3537, %v3538
        %v3540 = vand.u32 %v3539, 4294901760
        %3541 = vmatpush.msra.mxu0 %v3540
        %v3542 = vand.u32 %v3417, 4294901760
        %v3543 = vsub.f32 %v3417, %v3542
        %v3544 = vand.u32 %v3543, 4294901760
        %v3545 = vsub.f32 %v3543, %v3544
        %v3546 = vand.u32 %v3545, 4294901760
        %3547 = vmatpush.msra.mxu0 %v3546
        %v3548 = vand.u32 %v3413, 4294901760
        %v3549 = vsub.f32 %v3413, %v3548
        %v3550 = vand.u32 %v3549, 4294901760
        %v3551 = vsub.f32 %v3549, %v3550
        %v3552 = vand.u32 %v3551, 4294901760
        %3553 = vmatpush.msra.mxu0 %v3552
        %v3554 = vand.u32 %v3409, 4294901760
        %v3555 = vsub.f32 %v3409, %v3554
        %v3556 = vand.u32 %v3555, 4294901760
        %v3557 = vsub.f32 %v3555, %v3556
        %v3558 = vand.u32 %v3557, 4294901760
        %3559 = vmatpush.msra.mxu0 %v3558
        %v3560 = vand.u32 %v3405, 4294901760
        %v3561 = vsub.f32 %v3405, %v3560
        %v3562 = vand.u32 %v3561, 4294901760
        %v3563 = vsub.f32 %v3561, %v3562
        %v3564 = vand.u32 %v3563, 4294901760
        %3565 = vmatpush.msra.mxu0 %v3564
        %v3566 = vand.u32 %v3401, 4294901760
        %v3567 = vsub.f32 %v3401, %v3566
        %v3568 = vand.u32 %v3567, 4294901760
        %v3569 = vsub.f32 %v3567, %v3568
        %v3570 = vand.u32 %v3569, 4294901760
        %3571 = vmatpush.msra.mxu0 %v3570
        %v3572 = vand.u32 %v3397, 4294901760
        %v3573 = vsub.f32 %v3397, %v3572
        %v3574 = vand.u32 %v3573, 4294901760
        %v3575 = vsub.f32 %v3573, %v3574
        %v3576 = vand.u32 %v3575, 4294901760
        %3577 = vmatpush.msra.mxu0 %v3576
        %v3578 = vand.u32 %v3393, 4294901760
        %v3579 = vsub.f32 %v3393, %v3578
        %v3580 = vand.u32 %v3579, 4294901760
        %v3581 = vsub.f32 %v3579, %v3580
        %v3582 = vand.u32 %v3581, 4294901760
        %3583 = vmatpush.msra.mxu0 %v3582
        %v3584 = vand.u32 %v3389, 4294901760
        %v3585 = vsub.f32 %v3389, %v3584
        %v3586 = vand.u32 %v3585, 4294901760
        %v3587 = vsub.f32 %v3585, %v3586
        %v3588 = vand.u32 %v3587, 4294901760
        %3589 = vmatpush.msra.mxu0 %v3588
        %v3590 = vand.u32 %v3387, 4294901760
        %3591 = vmatmul.f32.gmra.mxu0 %v3590
        %v3592 = vpop.f32.mrf.mxu0
        %v3593 = vadd.f32 %v3492, %v3592
        %3594 = vdwg.mxu0
        %v3595 = vand.u32 %v3449, 4294901760
        %v3596 = vsub.f32 %v3449, %v3595
        %3597 = vmatpush.msra.mxu0 %v3596
        %v3598 = vand.u32 %v3445, 4294901760
        %v3599 = vsub.f32 %v3445, %v3598
        %3600 = vmatpush.msra.mxu0 %v3599
        %v3601 = vand.u32 %v3441, 4294901760
        %v3602 = vsub.f32 %v3441, %v3601
        %3603 = vmatpush.msra.mxu0 %v3602
        %v3604 = vand.u32 %v3437, 4294901760
        %v3605 = vsub.f32 %v3437, %v3604
        %3606 = vmatpush.msra.mxu0 %v3605
        %v3607 = vand.u32 %v3433, 4294901760
        %v3608 = vsub.f32 %v3433, %v3607
        %3609 = vmatpush.msra.mxu0 %v3608
        %v3610 = vand.u32 %v3429, 4294901760
        %v3611 = vsub.f32 %v3429, %v3610
        %3612 = vmatpush.msra.mxu0 %v3611
        %v3613 = vand.u32 %v3425, 4294901760
        %v3614 = vsub.f32 %v3425, %v3613
        %3615 = vmatpush.msra.mxu0 %v3614
        %v3616 = vand.u32 %v3421, 4294901760
        %v3617 = vsub.f32 %v3421, %v3616
        %3618 = vmatpush.msra.mxu0 %v3617
        %v3619 = vand.u32 %v3417, 4294901760
        %v3620 = vsub.f32 %v3417, %v3619
        %3621 = vmatpush.msra.mxu0 %v3620
        %v3622 = vand.u32 %v3413, 4294901760
        %v3623 = vsub.f32 %v3413, %v3622
        %3624 = vmatpush.msra.mxu0 %v3623
        %v3625 = vand.u32 %v3409, 4294901760
        %v3626 = vsub.f32 %v3409, %v3625
        %3627 = vmatpush.msra.mxu0 %v3626
        %v3628 = vand.u32 %v3405, 4294901760
        %v3629 = vsub.f32 %v3405, %v3628
        %3630 = vmatpush.msra.mxu0 %v3629
        %v3631 = vand.u32 %v3401, 4294901760
        %v3632 = vsub.f32 %v3401, %v3631
        %3633 = vmatpush.msra.mxu0 %v3632
        %v3634 = vand.u32 %v3397, 4294901760
        %v3635 = vsub.f32 %v3397, %v3634
        %3636 = vmatpush.msra.mxu0 %v3635
        %v3637 = vand.u32 %v3393, 4294901760
        %v3638 = vsub.f32 %v3393, %v3637
        %3639 = vmatpush.msra.mxu0 %v3638
        %v3640 = vand.u32 %v3389, 4294901760
        %v3641 = vsub.f32 %v3389, %v3640
        %3642 = vmatpush.msra.mxu0 %v3641
        %v3643 = vand.u32 %v3387, 4294901760
        %v3644 = vsub.f32 %v3387, %v3643
        %3645 = vmatmul.f32.gmra.mxu0 %v3644
        %v3646 = vpop.f32.mrf.mxu0
        %v3647 = vadd.f32 %v3593, %v3646
        %3648 = vdwg.mxu0
        %v3649 = vand.u32 %v3449, 4294901760
        %3650 = vmatpush.msra.mxu0 %v3649
        %v3651 = vand.u32 %v3445, 4294901760
        %3652 = vmatpush.msra.mxu0 %v3651
        %v3653 = vand.u32 %v3441, 4294901760
        %3654 = vmatpush.msra.mxu0 %v3653
        %v3655 = vand.u32 %v3437, 4294901760
        %3656 = vmatpush.msra.mxu0 %v3655
        %v3657 = vand.u32 %v3433, 4294901760
        %3658 = vmatpush.msra.mxu0 %v3657
        %v3659 = vand.u32 %v3429, 4294901760
        %3660 = vmatpush.msra.mxu0 %v3659
        %v3661 = vand.u32 %v3425, 4294901760
        %3662 = vmatpush.msra.mxu0 %v3661
        %v3663 = vand.u32 %v3421, 4294901760
        %3664 = vmatpush.msra.mxu0 %v3663
        %v3665 = vand.u32 %v3417, 4294901760
        %3666 = vmatpush.msra.mxu0 %v3665
        %v3667 = vand.u32 %v3413, 4294901760
        %3668 = vmatpush.msra.mxu0 %v3667
        %v3669 = vand.u32 %v3409, 4294901760
        %3670 = vmatpush.msra.mxu0 %v3669
        %v3671 = vand.u32 %v3405, 4294901760
        %3672 = vmatpush.msra.mxu0 %v3671
        %v3673 = vand.u32 %v3401, 4294901760
        %3674 = vmatpush.msra.mxu0 %v3673
        %v3675 = vand.u32 %v3397, 4294901760
        %3676 = vmatpush.msra.mxu0 %v3675
        %v3677 = vand.u32 %v3393, 4294901760
        %3678 = vmatpush.msra.mxu0 %v3677
        %v3679 = vand.u32 %v3389, 4294901760
        %3680 = vmatpush.msra.mxu0 %v3679
        %v3681 = vand.u32 %v3387, 4294901760
        %v3682 = vsub.f32 %v3387, %v3681
        %v3683 = vand.u32 %v3682, 4294901760
        %3684 = vmatmul.f32.gmra.mxu0 %v3683
        %v3685 = vpop.f32.mrf.mxu0
        %v3686 = vadd.f32 %v3647, %v3685
        %3687 = vdwg.mxu0
        %v3688 = vand.u32 %v3449, 4294901760
        %v3689 = vsub.f32 %v3449, %v3688
        %v3690 = vand.u32 %v3689, 4294901760
        %3691 = vmatpush.msra.mxu0 %v3690
        %v3692 = vand.u32 %v3445, 4294901760
        %v3693 = vsub.f32 %v3445, %v3692
        %v3694 = vand.u32 %v3693, 4294901760
        %3695 = vmatpush.msra.mxu0 %v3694
        %v3696 = vand.u32 %v3441, 4294901760
        %v3697 = vsub.f32 %v3441, %v3696
        %v3698 = vand.u32 %v3697, 4294901760
        %3699 = vmatpush.msra.mxu0 %v3698
        %v3700 = vand.u32 %v3437, 4294901760
        %v3701 = vsub.f32 %v3437, %v3700
        %v3702 = vand.u32 %v3701, 4294901760
        %3703 = vmatpush.msra.mxu0 %v3702
        %v3704 = vand.u32 %v3433, 4294901760
        %v3705 = vsub.f32 %v3433, %v3704
        %v3706 = vand.u32 %v3705, 4294901760
        %3707 = vmatpush.msra.mxu0 %v3706
        %v3708 = vand.u32 %v3429, 4294901760
        %v3709 = vsub.f32 %v3429, %v3708
        %v3710 = vand.u32 %v3709, 4294901760
        %3711 = vmatpush.msra.mxu0 %v3710
        %v3712 = vand.u32 %v3425, 4294901760
        %v3713 = vsub.f32 %v3425, %v3712
        %v3714 = vand.u32 %v3713, 4294901760
        %3715 = vmatpush.msra.mxu0 %v3714
        %v3716 = vand.u32 %v3421, 4294901760
        %v3717 = vsub.f32 %v3421, %v3716
        %v3718 = vand.u32 %v3717, 4294901760
        %3719 = vmatpush.msra.mxu0 %v3718
        %v3720 = vand.u32 %v3417, 4294901760
        %v3721 = vsub.f32 %v3417, %v3720
        %v3722 = vand.u32 %v3721, 4294901760
        %3723 = vmatpush.msra.mxu0 %v3722
        %v3724 = vand.u32 %v3413, 4294901760
        %v3725 = vsub.f32 %v3413, %v3724
        %v3726 = vand.u32 %v3725, 4294901760
        %3727 = vmatpush.msra.mxu0 %v3726
        %v3728 = vand.u32 %v3409, 4294901760
        %v3729 = vsub.f32 %v3409, %v3728
        %v3730 = vand.u32 %v3729, 4294901760
        %3731 = vmatpush.msra.mxu0 %v3730
        %v3732 = vand.u32 %v3405, 4294901760
        %v3733 = vsub.f32 %v3405, %v3732
        %v3734 = vand.u32 %v3733, 4294901760
        %3735 = vmatpush.msra.mxu0 %v3734
        %v3736 = vand.u32 %v3401, 4294901760
        %v3737 = vsub.f32 %v3401, %v3736
        %v3738 = vand.u32 %v3737, 4294901760
        %3739 = vmatpush.msra.mxu0 %v3738
        %v3740 = vand.u32 %v3397, 4294901760
        %v3741 = vsub.f32 %v3397, %v3740
        %v3742 = vand.u32 %v3741, 4294901760
        %3743 = vmatpush.msra.mxu0 %v3742
        %v3744 = vand.u32 %v3393, 4294901760
        %v3745 = vsub.f32 %v3393, %v3744
        %v3746 = vand.u32 %v3745, 4294901760
        %3747 = vmatpush.msra.mxu0 %v3746
        %v3748 = vand.u32 %v3389, 4294901760
        %v3749 = vsub.f32 %v3389, %v3748
        %v3750 = vand.u32 %v3749, 4294901760
        %3751 = vmatpush.msra.mxu0 %v3750
        %v3752 = vand.u32 %v3387, 4294901760
        %3753 = vmatmul.f32.gmra.mxu0 %v3752
        %v3754 = vpop.f32.mrf.mxu0
        %v3755 = vadd.f32 %v3686, %v3754
        %3756 = vdwg.mxu0
        %v3757 = vand.u32 %v3449, 4294901760
        %3758 = vmatpush.msra.mxu0 %v3757
        %v3759 = vand.u32 %v3445, 4294901760
        %3760 = vmatpush.msra.mxu0 %v3759
        %v3761 = vand.u32 %v3441, 4294901760
        %3762 = vmatpush.msra.mxu0 %v3761
        %v3763 = vand.u32 %v3437, 4294901760
        %3764 = vmatpush.msra.mxu0 %v3763
        %v3765 = vand.u32 %v3433, 4294901760
        %3766 = vmatpush.msra.mxu0 %v3765
        %v3767 = vand.u32 %v3429, 4294901760
        %3768 = vmatpush.msra.mxu0 %v3767
        %v3769 = vand.u32 %v3425, 4294901760
        %3770 = vmatpush.msra.mxu0 %v3769
        %v3771 = vand.u32 %v3421, 4294901760
        %3772 = vmatpush.msra.mxu0 %v3771
        %v3773 = vand.u32 %v3417, 4294901760
        %3774 = vmatpush.msra.mxu0 %v3773
        %v3775 = vand.u32 %v3413, 4294901760
        %3776 = vmatpush.msra.mxu0 %v3775
        %v3777 = vand.u32 %v3409, 4294901760
        %3778 = vmatpush.msra.mxu0 %v3777
        %v3779 = vand.u32 %v3405, 4294901760
        %3780 = vmatpush.msra.mxu0 %v3779
        %v3781 = vand.u32 %v3401, 4294901760
        %3782 = vmatpush.msra.mxu0 %v3781
        %v3783 = vand.u32 %v3397, 4294901760
        %3784 = vmatpush.msra.mxu0 %v3783
        %v3785 = vand.u32 %v3393, 4294901760
        %3786 = vmatpush.msra.mxu0 %v3785
        %v3787 = vand.u32 %v3389, 4294901760
        %3788 = vmatpush.msra.mxu0 %v3787
        %v3789 = vand.u32 %v3387, 4294901760
        %3790 = vmatmul.f32.gmra.mxu0 %v3789
        %v3791 = vpop.f32.mrf.mxu0
        %v3792 = vadd.f32 %v3755, %v3791
        %3793 = vdwg.mxu0
        %v3794 = vand.u32 %v3450, 4294901760
        %3795 = vmatpush.msra.mxu0 %v3794
        %v3796 = vand.u32 %v3446, 4294901760
        %3797 = vmatpush.msra.mxu0 %v3796
        %v3798 = vand.u32 %v3442, 4294901760
        %3799 = vmatpush.msra.mxu0 %v3798
        %v3800 = vand.u32 %v3438, 4294901760
        %3801 = vmatpush.msra.mxu0 %v3800
        %v3802 = vand.u32 %v3434, 4294901760
        %3803 = vmatpush.msra.mxu0 %v3802
        %v3804 = vand.u32 %v3430, 4294901760
        %3805 = vmatpush.msra.mxu0 %v3804
        %v3806 = vand.u32 %v3426, 4294901760
        %3807 = vmatpush.msra.mxu0 %v3806
        %v3808 = vand.u32 %v3422, 4294901760
        %3809 = vmatpush.msra.mxu0 %v3808
        %v3810 = vand.u32 %v3418, 4294901760
        %3811 = vmatpush.msra.mxu0 %v3810
        %v3812 = vand.u32 %v3414, 4294901760
        %3813 = vmatpush.msra.mxu0 %v3812
        %v3814 = vand.u32 %v3410, 4294901760
        %3815 = vmatpush.msra.mxu0 %v3814
        %v3816 = vand.u32 %v3406, 4294901760
        %3817 = vmatpush.msra.mxu0 %v3816
        %v3818 = vand.u32 %v3402, 4294901760
        %3819 = vmatpush.msra.mxu0 %v3818
        %v3820 = vand.u32 %v3398, 4294901760
        %3821 = vmatpush.msra.mxu0 %v3820
        %v3822 = vand.u32 %v3394, 4294901760
        %3823 = vmatpush.msra.mxu0 %v3822
        %v3824 = vand.u32 %v3390, 4294901760
        %3825 = vmatpush.msra.mxu0 %v3824
        %v3826 = vand.u32 %v3387, 4294901760
        %v3827 = vsub.f32 %v3387, %v3826
        %v3828 = vand.u32 %v3827, 4294901760
        %v3829 = vsub.f32 %v3827, %v3828
        %v3830 = vand.u32 %v3829, 4294901760
        %3831 = vmatmul.f32.gmra.mxu0 %v3830
        %v3832 = vpop.f32.mrf.mxu0
        %v3833 = vadd.f32 0.0, %v3832
        %3834 = vdwg.mxu0
        %v3835 = vand.u32 %v3450, 4294901760
        %v3836 = vsub.f32 %v3450, %v3835
        %v3837 = vand.u32 %v3836, 4294901760
        %v3838 = vsub.f32 %v3836, %v3837
        %v3839 = vand.u32 %v3838, 4294901760
        %3840 = vmatpush.msra.mxu0 %v3839
        %v3841 = vand.u32 %v3446, 4294901760
        %v3842 = vsub.f32 %v3446, %v3841
        %v3843 = vand.u32 %v3842, 4294901760
        %v3844 = vsub.f32 %v3842, %v3843
        %v3845 = vand.u32 %v3844, 4294901760
        %3846 = vmatpush.msra.mxu0 %v3845
        %v3847 = vand.u32 %v3442, 4294901760
        %v3848 = vsub.f32 %v3442, %v3847
        %v3849 = vand.u32 %v3848, 4294901760
        %v3850 = vsub.f32 %v3848, %v3849
        %v3851 = vand.u32 %v3850, 4294901760
        %3852 = vmatpush.msra.mxu0 %v3851
        %v3853 = vand.u32 %v3438, 4294901760
        %v3854 = vsub.f32 %v3438, %v3853
        %v3855 = vand.u32 %v3854, 4294901760
        %v3856 = vsub.f32 %v3854, %v3855
        %v3857 = vand.u32 %v3856, 4294901760
        %3858 = vmatpush.msra.mxu0 %v3857
        %v3859 = vand.u32 %v3434, 4294901760
        %v3860 = vsub.f32 %v3434, %v3859
        %v3861 = vand.u32 %v3860, 4294901760
        %v3862 = vsub.f32 %v3860, %v3861
        %v3863 = vand.u32 %v3862, 4294901760
        %3864 = vmatpush.msra.mxu0 %v3863
        %v3865 = vand.u32 %v3430, 4294901760
        %v3866 = vsub.f32 %v3430, %v3865
        %v3867 = vand.u32 %v3866, 4294901760
        %v3868 = vsub.f32 %v3866, %v3867
        %v3869 = vand.u32 %v3868, 4294901760
        %3870 = vmatpush.msra.mxu0 %v3869
        %v3871 = vand.u32 %v3426, 4294901760
        %v3872 = vsub.f32 %v3426, %v3871
        %v3873 = vand.u32 %v3872, 4294901760
        %v3874 = vsub.f32 %v3872, %v3873
        %v3875 = vand.u32 %v3874, 4294901760
        %3876 = vmatpush.msra.mxu0 %v3875
        %v3877 = vand.u32 %v3422, 4294901760
        %v3878 = vsub.f32 %v3422, %v3877
        %v3879 = vand.u32 %v3878, 4294901760
        %v3880 = vsub.f32 %v3878, %v3879
        %v3881 = vand.u32 %v3880, 4294901760
        %3882 = vmatpush.msra.mxu0 %v3881
        %v3883 = vand.u32 %v3418, 4294901760
        %v3884 = vsub.f32 %v3418, %v3883
        %v3885 = vand.u32 %v3884, 4294901760
        %v3886 = vsub.f32 %v3884, %v3885
        %v3887 = vand.u32 %v3886, 4294901760
        %3888 = vmatpush.msra.mxu0 %v3887
        %v3889 = vand.u32 %v3414, 4294901760
        %v3890 = vsub.f32 %v3414, %v3889
        %v3891 = vand.u32 %v3890, 4294901760
        %v3892 = vsub.f32 %v3890, %v3891
        %v3893 = vand.u32 %v3892, 4294901760
        %3894 = vmatpush.msra.mxu0 %v3893
        %v3895 = vand.u32 %v3410, 4294901760
        %v3896 = vsub.f32 %v3410, %v3895
        %v3897 = vand.u32 %v3896, 4294901760
        %v3898 = vsub.f32 %v3896, %v3897
        %v3899 = vand.u32 %v3898, 4294901760
        %3900 = vmatpush.msra.mxu0 %v3899
        %v3901 = vand.u32 %v3406, 4294901760
        %v3902 = vsub.f32 %v3406, %v3901
        %v3903 = vand.u32 %v3902, 4294901760
        %v3904 = vsub.f32 %v3902, %v3903
        %v3905 = vand.u32 %v3904, 4294901760
        %3906 = vmatpush.msra.mxu0 %v3905
        %v3907 = vand.u32 %v3402, 4294901760
        %v3908 = vsub.f32 %v3402, %v3907
        %v3909 = vand.u32 %v3908, 4294901760
        %v3910 = vsub.f32 %v3908, %v3909
        %v3911 = vand.u32 %v3910, 4294901760
        %3912 = vmatpush.msra.mxu0 %v3911
        %v3913 = vand.u32 %v3398, 4294901760
        %v3914 = vsub.f32 %v3398, %v3913
        %v3915 = vand.u32 %v3914, 4294901760
        %v3916 = vsub.f32 %v3914, %v3915
        %v3917 = vand.u32 %v3916, 4294901760
        %3918 = vmatpush.msra.mxu0 %v3917
        %v3919 = vand.u32 %v3394, 4294901760
        %v3920 = vsub.f32 %v3394, %v3919
        %v3921 = vand.u32 %v3920, 4294901760
        %v3922 = vsub.f32 %v3920, %v3921
        %v3923 = vand.u32 %v3922, 4294901760
        %3924 = vmatpush.msra.mxu0 %v3923
        %v3925 = vand.u32 %v3390, 4294901760
        %v3926 = vsub.f32 %v3390, %v3925
        %v3927 = vand.u32 %v3926, 4294901760
        %v3928 = vsub.f32 %v3926, %v3927
        %v3929 = vand.u32 %v3928, 4294901760
        %3930 = vmatpush.msra.mxu0 %v3929
        %v3931 = vand.u32 %v3387, 4294901760
        %3932 = vmatmul.f32.gmra.mxu0 %v3931
        %v3933 = vpop.f32.mrf.mxu0
        %v3934 = vadd.f32 %v3833, %v3933
        %3935 = vdwg.mxu0
        %v3936 = vand.u32 %v3450, 4294901760
        %v3937 = vsub.f32 %v3450, %v3936
        %3938 = vmatpush.msra.mxu0 %v3937
        %v3939 = vand.u32 %v3446, 4294901760
        %v3940 = vsub.f32 %v3446, %v3939
        %3941 = vmatpush.msra.mxu0 %v3940
        %v3942 = vand.u32 %v3442, 4294901760
        %v3943 = vsub.f32 %v3442, %v3942
        %3944 = vmatpush.msra.mxu0 %v3943
        %v3945 = vand.u32 %v3438, 4294901760
        %v3946 = vsub.f32 %v3438, %v3945
        %3947 = vmatpush.msra.mxu0 %v3946
        %v3948 = vand.u32 %v3434, 4294901760
        %v3949 = vsub.f32 %v3434, %v3948
        %3950 = vmatpush.msra.mxu0 %v3949
        %v3951 = vand.u32 %v3430, 4294901760
        %v3952 = vsub.f32 %v3430, %v3951
        %3953 = vmatpush.msra.mxu0 %v3952
        %v3954 = vand.u32 %v3426, 4294901760
        %v3955 = vsub.f32 %v3426, %v3954
        %3956 = vmatpush.msra.mxu0 %v3955
        %v3957 = vand.u32 %v3422, 4294901760
        %v3958 = vsub.f32 %v3422, %v3957
        %3959 = vmatpush.msra.mxu0 %v3958
        %v3960 = vand.u32 %v3418, 4294901760
        %v3961 = vsub.f32 %v3418, %v3960
        %3962 = vmatpush.msra.mxu0 %v3961
        %v3963 = vand.u32 %v3414, 4294901760
        %v3964 = vsub.f32 %v3414, %v3963
        %3965 = vmatpush.msra.mxu0 %v3964
        %v3966 = vand.u32 %v3410, 4294901760
        %v3967 = vsub.f32 %v3410, %v3966
        %3968 = vmatpush.msra.mxu0 %v3967
        %v3969 = vand.u32 %v3406, 4294901760
        %v3970 = vsub.f32 %v3406, %v3969
        %3971 = vmatpush.msra.mxu0 %v3970
        %v3972 = vand.u32 %v3402, 4294901760
        %v3973 = vsub.f32 %v3402, %v3972
        %3974 = vmatpush.msra.mxu0 %v3973
        %v3975 = vand.u32 %v3398, 4294901760
        %v3976 = vsub.f32 %v3398, %v3975
        %3977 = vmatpush.msra.mxu0 %v3976
        %v3978 = vand.u32 %v3394, 4294901760
        %v3979 = vsub.f32 %v3394, %v3978
        %3980 = vmatpush.msra.mxu0 %v3979
        %v3981 = vand.u32 %v3390, 4294901760
        %v3982 = vsub.f32 %v3390, %v3981
        %3983 = vmatpush.msra.mxu0 %v3982
        %v3984 = vand.u32 %v3387, 4294901760
        %v3985 = vsub.f32 %v3387, %v3984
        %3986 = vmatmul.f32.gmra.mxu0 %v3985
        %v3987 = vpop.f32.mrf.mxu0
        %v3988 = vadd.f32 %v3934, %v3987
        %3989 = vdwg.mxu0
        %v3990 = vand.u32 %v3450, 4294901760
        %3991 = vmatpush.msra.mxu0 %v3990
        %v3992 = vand.u32 %v3446, 4294901760
        %3993 = vmatpush.msra.mxu0 %v3992
        %v3994 = vand.u32 %v3442, 4294901760
        %3995 = vmatpush.msra.mxu0 %v3994
        %v3996 = vand.u32 %v3438, 4294901760
        %3997 = vmatpush.msra.mxu0 %v3996
        %v3998 = vand.u32 %v3434, 4294901760
        %3999 = vmatpush.msra.mxu0 %v3998
        %v4000 = vand.u32 %v3430, 4294901760
        %4001 = vmatpush.msra.mxu0 %v4000
        %v4002 = vand.u32 %v3426, 4294901760
        %4003 = vmatpush.msra.mxu0 %v4002
        %v4004 = vand.u32 %v3422, 4294901760
        %4005 = vmatpush.msra.mxu0 %v4004
        %v4006 = vand.u32 %v3418, 4294901760
        %4007 = vmatpush.msra.mxu0 %v4006
        %v4008 = vand.u32 %v3414, 4294901760
        %4009 = vmatpush.msra.mxu0 %v4008
        %v4010 = vand.u32 %v3410, 4294901760
        %4011 = vmatpush.msra.mxu0 %v4010
        %v4012 = vand.u32 %v3406, 4294901760
        %4013 = vmatpush.msra.mxu0 %v4012
        %v4014 = vand.u32 %v3402, 4294901760
        %4015 = vmatpush.msra.mxu0 %v4014
        %v4016 = vand.u32 %v3398, 4294901760
        %4017 = vmatpush.msra.mxu0 %v4016
        %v4018 = vand.u32 %v3394, 4294901760
        %4019 = vmatpush.msra.mxu0 %v4018
        %v4020 = vand.u32 %v3390, 4294901760
        %4021 = vmatpush.msra.mxu0 %v4020
        %v4022 = vand.u32 %v3387, 4294901760
        %v4023 = vsub.f32 %v3387, %v4022
        %v4024 = vand.u32 %v4023, 4294901760
        %4025 = vmatmul.f32.gmra.mxu0 %v4024
        %v4026 = vpop.f32.mrf.mxu0
        %v4027 = vadd.f32 %v3988, %v4026
        %4028 = vdwg.mxu0
        %v4029 = vand.u32 %v3450, 4294901760
        %v4030 = vsub.f32 %v3450, %v4029
        %v4031 = vand.u32 %v4030, 4294901760
        %4032 = vmatpush.msra.mxu0 %v4031
        %v4033 = vand.u32 %v3446, 4294901760
        %v4034 = vsub.f32 %v3446, %v4033
        %v4035 = vand.u32 %v4034, 4294901760
        %4036 = vmatpush.msra.mxu0 %v4035
        %v4037 = vand.u32 %v3442, 4294901760
        %v4038 = vsub.f32 %v3442, %v4037
        %v4039 = vand.u32 %v4038, 4294901760
        %4040 = vmatpush.msra.mxu0 %v4039
        %v4041 = vand.u32 %v3438, 4294901760
        %v4042 = vsub.f32 %v3438, %v4041
        %v4043 = vand.u32 %v4042, 4294901760
        %4044 = vmatpush.msra.mxu0 %v4043
        %v4045 = vand.u32 %v3434, 4294901760
        %v4046 = vsub.f32 %v3434, %v4045
        %v4047 = vand.u32 %v4046, 4294901760
        %4048 = vmatpush.msra.mxu0 %v4047
        %v4049 = vand.u32 %v3430, 4294901760
        %v4050 = vsub.f32 %v3430, %v4049
        %v4051 = vand.u32 %v4050, 4294901760
        %4052 = vmatpush.msra.mxu0 %v4051
        %v4053 = vand.u32 %v3426, 4294901760
        %v4054 = vsub.f32 %v3426, %v4053
        %v4055 = vand.u32 %v4054, 4294901760
        %4056 = vmatpush.msra.mxu0 %v4055
        %v4057 = vand.u32 %v3422, 4294901760
        %v4058 = vsub.f32 %v3422, %v4057
        %v4059 = vand.u32 %v4058, 4294901760
        %4060 = vmatpush.msra.mxu0 %v4059
        %v4061 = vand.u32 %v3418, 4294901760
        %v4062 = vsub.f32 %v3418, %v4061
        %v4063 = vand.u32 %v4062, 4294901760
        %4064 = vmatpush.msra.mxu0 %v4063
        %v4065 = vand.u32 %v3414, 4294901760
        %v4066 = vsub.f32 %v3414, %v4065
        %v4067 = vand.u32 %v4066, 4294901760
        %4068 = vmatpush.msra.mxu0 %v4067
        %v4069 = vand.u32 %v3410, 4294901760
        %v4070 = vsub.f32 %v3410, %v4069
        %v4071 = vand.u32 %v4070, 4294901760
        %4072 = vmatpush.msra.mxu0 %v4071
        %v4073 = vand.u32 %v3406, 4294901760
        %v4074 = vsub.f32 %v3406, %v4073
        %v4075 = vand.u32 %v4074, 4294901760
        %4076 = vmatpush.msra.mxu0 %v4075
        %v4077 = vand.u32 %v3402, 4294901760
        %v4078 = vsub.f32 %v3402, %v4077
        %v4079 = vand.u32 %v4078, 4294901760
        %4080 = vmatpush.msra.mxu0 %v4079
        %v4081 = vand.u32 %v3398, 4294901760
        %v4082 = vsub.f32 %v3398, %v4081
        %v4083 = vand.u32 %v4082, 4294901760
        %4084 = vmatpush.msra.mxu0 %v4083
        %v4085 = vand.u32 %v3394, 4294901760
        %v4086 = vsub.f32 %v3394, %v4085
        %v4087 = vand.u32 %v4086, 4294901760
        %4088 = vmatpush.msra.mxu0 %v4087
        %v4089 = vand.u32 %v3390, 4294901760
        %v4090 = vsub.f32 %v3390, %v4089
        %v4091 = vand.u32 %v4090, 4294901760
        %4092 = vmatpush.msra.mxu0 %v4091
        %v4093 = vand.u32 %v3387, 4294901760
        %4094 = vmatmul.f32.gmra.mxu0 %v4093
        %v4095 = vpop.f32.mrf.mxu0
        %v4096 = vadd.f32 %v4027, %v4095
        %4097 = vdwg.mxu0
        %v4098 = vand.u32 %v3450, 4294901760
        %4099 = vmatpush.msra.mxu0 %v4098
        %v4100 = vand.u32 %v3446, 4294901760
        %4101 = vmatpush.msra.mxu0 %v4100
        %v4102 = vand.u32 %v3442, 4294901760
        %4103 = vmatpush.msra.mxu0 %v4102
        %v4104 = vand.u32 %v3438, 4294901760
        %4105 = vmatpush.msra.mxu0 %v4104
        %v4106 = vand.u32 %v3434, 4294901760
        %4107 = vmatpush.msra.mxu0 %v4106
        %v4108 = vand.u32 %v3430, 4294901760
        %4109 = vmatpush.msra.mxu0 %v4108
        %v4110 = vand.u32 %v3426, 4294901760
        %4111 = vmatpush.msra.mxu0 %v4110
        %v4112 = vand.u32 %v3422, 4294901760
        %4113 = vmatpush.msra.mxu0 %v4112
        %v4114 = vand.u32 %v3418, 4294901760
        %4115 = vmatpush.msra.mxu0 %v4114
        %v4116 = vand.u32 %v3414, 4294901760
        %4117 = vmatpush.msra.mxu0 %v4116
        %v4118 = vand.u32 %v3410, 4294901760
        %4119 = vmatpush.msra.mxu0 %v4118
        %v4120 = vand.u32 %v3406, 4294901760
        %4121 = vmatpush.msra.mxu0 %v4120
        %v4122 = vand.u32 %v3402, 4294901760
        %4123 = vmatpush.msra.mxu0 %v4122
        %v4124 = vand.u32 %v3398, 4294901760
        %4125 = vmatpush.msra.mxu0 %v4124
        %v4126 = vand.u32 %v3394, 4294901760
        %4127 = vmatpush.msra.mxu0 %v4126
        %v4128 = vand.u32 %v3390, 4294901760
        %4129 = vmatpush.msra.mxu0 %v4128
        %v4130 = vand.u32 %v3387, 4294901760
        %4131 = vmatmul.f32.gmra.mxu0 %v4130
        %v4132 = vpop.f32.mrf.mxu0
        %v4133 = vadd.f32 %v4096, %v4132
        %4134 = vdwg.mxu0
        %v4135 = vand.u32 %v3451, 4294901760
        %4136 = vmatpush.msra.mxu0 %v4135
        %v4137 = vand.u32 %v3447, 4294901760
        %4138 = vmatpush.msra.mxu0 %v4137
        %v4139 = vand.u32 %v3443, 4294901760
        %4140 = vmatpush.msra.mxu0 %v4139
        %v4141 = vand.u32 %v3439, 4294901760
        %4142 = vmatpush.msra.mxu0 %v4141
        %v4143 = vand.u32 %v3435, 4294901760
        %4144 = vmatpush.msra.mxu0 %v4143
        %v4145 = vand.u32 %v3431, 4294901760
        %4146 = vmatpush.msra.mxu0 %v4145
        %v4147 = vand.u32 %v3427, 4294901760
        %4148 = vmatpush.msra.mxu0 %v4147
        %v4149 = vand.u32 %v3423, 4294901760
        %4150 = vmatpush.msra.mxu0 %v4149
        %v4151 = vand.u32 %v3419, 4294901760
        %4152 = vmatpush.msra.mxu0 %v4151
        %v4153 = vand.u32 %v3415, 4294901760
        %4154 = vmatpush.msra.mxu0 %v4153
        %v4155 = vand.u32 %v3411, 4294901760
        %4156 = vmatpush.msra.mxu0 %v4155
        %v4157 = vand.u32 %v3407, 4294901760
        %4158 = vmatpush.msra.mxu0 %v4157
        %v4159 = vand.u32 %v3403, 4294901760
        %4160 = vmatpush.msra.mxu0 %v4159
        %v4161 = vand.u32 %v3399, 4294901760
        %4162 = vmatpush.msra.mxu0 %v4161
        %v4163 = vand.u32 %v3395, 4294901760
        %4164 = vmatpush.msra.mxu0 %v4163
        %v4165 = vand.u32 %v3391, 4294901760
        %4166 = vmatpush.msra.mxu0 %v4165
        %v4167 = vand.u32 %v3387, 4294901760
        %v4168 = vsub.f32 %v3387, %v4167
        %v4169 = vand.u32 %v4168, 4294901760
        %v4170 = vsub.f32 %v4168, %v4169
        %v4171 = vand.u32 %v4170, 4294901760
        %4172 = vmatmul.f32.gmra.mxu0 %v4171
        %v4173 = vpop.f32.mrf.mxu0
        %v4174 = vadd.f32 0.0, %v4173
        %4175 = vdwg.mxu0
        %v4176 = vand.u32 %v3451, 4294901760
        %v4177 = vsub.f32 %v3451, %v4176
        %v4178 = vand.u32 %v4177, 4294901760
        %v4179 = vsub.f32 %v4177, %v4178
        %v4180 = vand.u32 %v4179, 4294901760
        %4181 = vmatpush.msra.mxu0 %v4180
        %v4182 = vand.u32 %v3447, 4294901760
        %v4183 = vsub.f32 %v3447, %v4182
        %v4184 = vand.u32 %v4183, 4294901760
        %v4185 = vsub.f32 %v4183, %v4184
        %v4186 = vand.u32 %v4185, 4294901760
        %4187 = vmatpush.msra.mxu0 %v4186
        %v4188 = vand.u32 %v3443, 4294901760
        %v4189 = vsub.f32 %v3443, %v4188
        %v4190 = vand.u32 %v4189, 4294901760
        %v4191 = vsub.f32 %v4189, %v4190
        %v4192 = vand.u32 %v4191, 4294901760
        %4193 = vmatpush.msra.mxu0 %v4192
        %v4194 = vand.u32 %v3439, 4294901760
        %v4195 = vsub.f32 %v3439, %v4194
        %v4196 = vand.u32 %v4195, 4294901760
        %v4197 = vsub.f32 %v4195, %v4196
        %v4198 = vand.u32 %v4197, 4294901760
        %4199 = vmatpush.msra.mxu0 %v4198
        %v4200 = vand.u32 %v3435, 4294901760
        %v4201 = vsub.f32 %v3435, %v4200
        %v4202 = vand.u32 %v4201, 4294901760
        %v4203 = vsub.f32 %v4201, %v4202
        %v4204 = vand.u32 %v4203, 4294901760
        %4205 = vmatpush.msra.mxu0 %v4204
        %v4206 = vand.u32 %v3431, 4294901760
        %v4207 = vsub.f32 %v3431, %v4206
        %v4208 = vand.u32 %v4207, 4294901760
        %v4209 = vsub.f32 %v4207, %v4208
        %v4210 = vand.u32 %v4209, 4294901760
        %4211 = vmatpush.msra.mxu0 %v4210
        %v4212 = vand.u32 %v3427, 4294901760
        %v4213 = vsub.f32 %v3427, %v4212
        %v4214 = vand.u32 %v4213, 4294901760
        %v4215 = vsub.f32 %v4213, %v4214
        %v4216 = vand.u32 %v4215, 4294901760
        %4217 = vmatpush.msra.mxu0 %v4216
        %v4218 = vand.u32 %v3423, 4294901760
        %v4219 = vsub.f32 %v3423, %v4218
        %v4220 = vand.u32 %v4219, 4294901760
        %v4221 = vsub.f32 %v4219, %v4220
        %v4222 = vand.u32 %v4221, 4294901760
        %4223 = vmatpush.msra.mxu0 %v4222
        %v4224 = vand.u32 %v3419, 4294901760
        %v4225 = vsub.f32 %v3419, %v4224
        %v4226 = vand.u32 %v4225, 4294901760
        %v4227 = vsub.f32 %v4225, %v4226
        %v4228 = vand.u32 %v4227, 4294901760
        %4229 = vmatpush.msra.mxu0 %v4228
        %v4230 = vand.u32 %v3415, 4294901760
        %v4231 = vsub.f32 %v3415, %v4230
        %v4232 = vand.u32 %v4231, 4294901760
        %v4233 = vsub.f32 %v4231, %v4232
        %v4234 = vand.u32 %v4233, 4294901760
        %4235 = vmatpush.msra.mxu0 %v4234
        %v4236 = vand.u32 %v3411, 4294901760
        %v4237 = vsub.f32 %v3411, %v4236
        %v4238 = vand.u32 %v4237, 4294901760
        %v4239 = vsub.f32 %v4237, %v4238
        %v4240 = vand.u32 %v4239, 4294901760
        %4241 = vmatpush.msra.mxu0 %v4240
        %v4242 = vand.u32 %v3407, 4294901760
        %v4243 = vsub.f32 %v3407, %v4242
        %v4244 = vand.u32 %v4243, 4294901760
        %v4245 = vsub.f32 %v4243, %v4244
        %v4246 = vand.u32 %v4245, 4294901760
        %4247 = vmatpush.msra.mxu0 %v4246
        %v4248 = vand.u32 %v3403, 4294901760
        %v4249 = vsub.f32 %v3403, %v4248
        %v4250 = vand.u32 %v4249, 4294901760
        %v4251 = vsub.f32 %v4249, %v4250
        %v4252 = vand.u32 %v4251, 4294901760
        %4253 = vmatpush.msra.mxu0 %v4252
        %v4254 = vand.u32 %v3399, 4294901760
        %v4255 = vsub.f32 %v3399, %v4254
        %v4256 = vand.u32 %v4255, 4294901760
        %v4257 = vsub.f32 %v4255, %v4256
        %v4258 = vand.u32 %v4257, 4294901760
        %4259 = vmatpush.msra.mxu0 %v4258
        %v4260 = vand.u32 %v3395, 4294901760
        %v4261 = vsub.f32 %v3395, %v4260
        %v4262 = vand.u32 %v4261, 4294901760
        %v4263 = vsub.f32 %v4261, %v4262
        %v4264 = vand.u32 %v4263, 4294901760
        %4265 = vmatpush.msra.mxu0 %v4264
        %v4266 = vand.u32 %v3391, 4294901760
        %v4267 = vsub.f32 %v3391, %v4266
        %v4268 = vand.u32 %v4267, 4294901760
        %v4269 = vsub.f32 %v4267, %v4268
        %v4270 = vand.u32 %v4269, 4294901760
        %4271 = vmatpush.msra.mxu0 %v4270
        %v4272 = vand.u32 %v3387, 4294901760
        %4273 = vmatmul.f32.gmra.mxu0 %v4272
        %v4274 = vpop.f32.mrf.mxu0
        %v4275 = vadd.f32 %v4174, %v4274
        %4276 = vdwg.mxu0
        %v4277 = vand.u32 %v3451, 4294901760
        %v4278 = vsub.f32 %v3451, %v4277
        %4279 = vmatpush.msra.mxu0 %v4278
        %v4280 = vand.u32 %v3447, 4294901760
        %v4281 = vsub.f32 %v3447, %v4280
        %4282 = vmatpush.msra.mxu0 %v4281
        %v4283 = vand.u32 %v3443, 4294901760
        %v4284 = vsub.f32 %v3443, %v4283
        %4285 = vmatpush.msra.mxu0 %v4284
        %v4286 = vand.u32 %v3439, 4294901760
        %v4287 = vsub.f32 %v3439, %v4286
        %4288 = vmatpush.msra.mxu0 %v4287
        %v4289 = vand.u32 %v3435, 4294901760
        %v4290 = vsub.f32 %v3435, %v4289
        %4291 = vmatpush.msra.mxu0 %v4290
        %v4292 = vand.u32 %v3431, 4294901760
        %v4293 = vsub.f32 %v3431, %v4292
        %4294 = vmatpush.msra.mxu0 %v4293
        %v4295 = vand.u32 %v3427, 4294901760
        %v4296 = vsub.f32 %v3427, %v4295
        %4297 = vmatpush.msra.mxu0 %v4296
        %v4298 = vand.u32 %v3423, 4294901760
        %v4299 = vsub.f32 %v3423, %v4298
        %4300 = vmatpush.msra.mxu0 %v4299
        %v4301 = vand.u32 %v3419, 4294901760
        %v4302 = vsub.f32 %v3419, %v4301
        %4303 = vmatpush.msra.mxu0 %v4302
        %v4304 = vand.u32 %v3415, 4294901760
        %v4305 = vsub.f32 %v3415, %v4304
        %4306 = vmatpush.msra.mxu0 %v4305
        %v4307 = vand.u32 %v3411, 4294901760
        %v4308 = vsub.f32 %v3411, %v4307
        %4309 = vmatpush.msra.mxu0 %v4308
        %v4310 = vand.u32 %v3407, 4294901760
        %v4311 = vsub.f32 %v3407, %v4310
        %4312 = vmatpush.msra.mxu0 %v4311
        %v4313 = vand.u32 %v3403, 4294901760
        %v4314 = vsub.f32 %v3403, %v4313
        %4315 = vmatpush.msra.mxu0 %v4314
        %v4316 = vand.u32 %v3399, 4294901760
        %v4317 = vsub.f32 %v3399, %v4316
        %4318 = vmatpush.msra.mxu0 %v4317
        %v4319 = vand.u32 %v3395, 4294901760
        %v4320 = vsub.f32 %v3395, %v4319
        %4321 = vmatpush.msra.mxu0 %v4320
        %v4322 = vand.u32 %v3391, 4294901760
        %v4323 = vsub.f32 %v3391, %v4322
        %4324 = vmatpush.msra.mxu0 %v4323
        %v4325 = vand.u32 %v3387, 4294901760
        %v4326 = vsub.f32 %v3387, %v4325
        %4327 = vmatmul.f32.gmra.mxu0 %v4326
        %v4328 = vpop.f32.mrf.mxu0
        %v4329 = vadd.f32 %v4275, %v4328
        %4330 = vdwg.mxu0
        %v4331 = vand.u32 %v3451, 4294901760
        %4332 = vmatpush.msra.mxu0 %v4331
        %v4333 = vand.u32 %v3447, 4294901760
        %4334 = vmatpush.msra.mxu0 %v4333
        %v4335 = vand.u32 %v3443, 4294901760
        %4336 = vmatpush.msra.mxu0 %v4335
        %v4337 = vand.u32 %v3439, 4294901760
        %4338 = vmatpush.msra.mxu0 %v4337
        %v4339 = vand.u32 %v3435, 4294901760
        %4340 = vmatpush.msra.mxu0 %v4339
        %v4341 = vand.u32 %v3431, 4294901760
        %4342 = vmatpush.msra.mxu0 %v4341
        %v4343 = vand.u32 %v3427, 4294901760
        %4344 = vmatpush.msra.mxu0 %v4343
        %v4345 = vand.u32 %v3423, 4294901760
        %4346 = vmatpush.msra.mxu0 %v4345
        %v4347 = vand.u32 %v3419, 4294901760
        %4348 = vmatpush.msra.mxu0 %v4347
        %v4349 = vand.u32 %v3415, 4294901760
        %4350 = vmatpush.msra.mxu0 %v4349
        %v4351 = vand.u32 %v3411, 4294901760
        %4352 = vmatpush.msra.mxu0 %v4351
        %v4353 = vand.u32 %v3407, 4294901760
        %4354 = vmatpush.msra.mxu0 %v4353
        %v4355 = vand.u32 %v3403, 4294901760
        %4356 = vmatpush.msra.mxu0 %v4355
        %v4357 = vand.u32 %v3399, 4294901760
        %4358 = vmatpush.msra.mxu0 %v4357
        %v4359 = vand.u32 %v3395, 4294901760
        %4360 = vmatpush.msra.mxu0 %v4359
        %v4361 = vand.u32 %v3391, 4294901760
        %4362 = vmatpush.msra.mxu0 %v4361
        %v4363 = vand.u32 %v3387, 4294901760
        %v4364 = vsub.f32 %v3387, %v4363
        %v4365 = vand.u32 %v4364, 4294901760
        %4366 = vmatmul.f32.gmra.mxu0 %v4365
        %v4367 = vpop.f32.mrf.mxu0
        %v4368 = vadd.f32 %v4329, %v4367
        %4369 = vdwg.mxu0
        %v4370 = vand.u32 %v3451, 4294901760
        %v4371 = vsub.f32 %v3451, %v4370
        %v4372 = vand.u32 %v4371, 4294901760
        %4373 = vmatpush.msra.mxu0 %v4372
        %v4374 = vand.u32 %v3447, 4294901760
        %v4375 = vsub.f32 %v3447, %v4374
        %v4376 = vand.u32 %v4375, 4294901760
        %4377 = vmatpush.msra.mxu0 %v4376
        %v4378 = vand.u32 %v3443, 4294901760
        %v4379 = vsub.f32 %v3443, %v4378
        %v4380 = vand.u32 %v4379, 4294901760
        %4381 = vmatpush.msra.mxu0 %v4380
        %v4382 = vand.u32 %v3439, 4294901760
        %v4383 = vsub.f32 %v3439, %v4382
        %v4384 = vand.u32 %v4383, 4294901760
        %4385 = vmatpush.msra.mxu0 %v4384
        %v4386 = vand.u32 %v3435, 4294901760
        %v4387 = vsub.f32 %v3435, %v4386
        %v4388 = vand.u32 %v4387, 4294901760
        %4389 = vmatpush.msra.mxu0 %v4388
        %v4390 = vand.u32 %v3431, 4294901760
        %v4391 = vsub.f32 %v3431, %v4390
        %v4392 = vand.u32 %v4391, 4294901760
        %4393 = vmatpush.msra.mxu0 %v4392
        %v4394 = vand.u32 %v3427, 4294901760
        %v4395 = vsub.f32 %v3427, %v4394
        %v4396 = vand.u32 %v4395, 4294901760
        %4397 = vmatpush.msra.mxu0 %v4396
        %v4398 = vand.u32 %v3423, 4294901760
        %v4399 = vsub.f32 %v3423, %v4398
        %v4400 = vand.u32 %v4399, 4294901760
        %4401 = vmatpush.msra.mxu0 %v4400
        %v4402 = vand.u32 %v3419, 4294901760
        %v4403 = vsub.f32 %v3419, %v4402
        %v4404 = vand.u32 %v4403, 4294901760
        %4405 = vmatpush.msra.mxu0 %v4404
        %v4406 = vand.u32 %v3415, 4294901760
        %v4407 = vsub.f32 %v3415, %v4406
        %v4408 = vand.u32 %v4407, 4294901760
        %4409 = vmatpush.msra.mxu0 %v4408
        %v4410 = vand.u32 %v3411, 4294901760
        %v4411 = vsub.f32 %v3411, %v4410
        %v4412 = vand.u32 %v4411, 4294901760
        %4413 = vmatpush.msra.mxu0 %v4412
        %v4414 = vand.u32 %v3407, 4294901760
        %v4415 = vsub.f32 %v3407, %v4414
        %v4416 = vand.u32 %v4415, 4294901760
        %4417 = vmatpush.msra.mxu0 %v4416
        %v4418 = vand.u32 %v3403, 4294901760
        %v4419 = vsub.f32 %v3403, %v4418
        %v4420 = vand.u32 %v4419, 4294901760
        %4421 = vmatpush.msra.mxu0 %v4420
        %v4422 = vand.u32 %v3399, 4294901760
        %v4423 = vsub.f32 %v3399, %v4422
        %v4424 = vand.u32 %v4423, 4294901760
        %4425 = vmatpush.msra.mxu0 %v4424
        %v4426 = vand.u32 %v3395, 4294901760
        %v4427 = vsub.f32 %v3395, %v4426
        %v4428 = vand.u32 %v4427, 4294901760
        %4429 = vmatpush.msra.mxu0 %v4428
        %v4430 = vand.u32 %v3391, 4294901760
        %v4431 = vsub.f32 %v3391, %v4430
        %v4432 = vand.u32 %v4431, 4294901760
        %4433 = vmatpush.msra.mxu0 %v4432
        %v4434 = vand.u32 %v3387, 4294901760
        %4435 = vmatmul.f32.gmra.mxu0 %v4434
        %v4436 = vpop.f32.mrf.mxu0
        %v4437 = vadd.f32 %v4368, %v4436
        %4438 = vdwg.mxu0
        %v4439 = vand.u32 %v3451, 4294901760
        %4440 = vmatpush.msra.mxu0 %v4439
        %v4441 = vand.u32 %v3447, 4294901760
        %4442 = vmatpush.msra.mxu0 %v4441
        %v4443 = vand.u32 %v3443, 4294901760
        %4444 = vmatpush.msra.mxu0 %v4443
        %v4445 = vand.u32 %v3439, 4294901760
        %4446 = vmatpush.msra.mxu0 %v4445
        %v4447 = vand.u32 %v3435, 4294901760
        %4448 = vmatpush.msra.mxu0 %v4447
        %v4449 = vand.u32 %v3431, 4294901760
        %4450 = vmatpush.msra.mxu0 %v4449
        %v4451 = vand.u32 %v3427, 4294901760
        %4452 = vmatpush.msra.mxu0 %v4451
        %v4453 = vand.u32 %v3423, 4294901760
        %4454 = vmatpush.msra.mxu0 %v4453
        %v4455 = vand.u32 %v3419, 4294901760
        %4456 = vmatpush.msra.mxu0 %v4455
        %v4457 = vand.u32 %v3415, 4294901760
        %4458 = vmatpush.msra.mxu0 %v4457
        %v4459 = vand.u32 %v3411, 4294901760
        %4460 = vmatpush.msra.mxu0 %v4459
        %v4461 = vand.u32 %v3407, 4294901760
        %4462 = vmatpush.msra.mxu0 %v4461
        %v4463 = vand.u32 %v3403, 4294901760
        %4464 = vmatpush.msra.mxu0 %v4463
        %v4465 = vand.u32 %v3399, 4294901760
        %4466 = vmatpush.msra.mxu0 %v4465
        %v4467 = vand.u32 %v3395, 4294901760
        %4468 = vmatpush.msra.mxu0 %v4467
        %v4469 = vand.u32 %v3391, 4294901760
        %4470 = vmatpush.msra.mxu0 %v4469
        %v4471 = vand.u32 %v3387, 4294901760
        %4472 = vmatmul.f32.gmra.mxu0 %v4471
        %v4473 = vpop.f32.mrf.mxu0
        %v4474 = vadd.f32 %v4437, %v4473
        %4475 = vdwg.mxu0
        %v4476 = vand.u32 %v3452, 4294901760
        %4477 = vmatpush.msra.mxu0 %v4476
        %v4478 = vand.u32 %v3448, 4294901760
        %4479 = vmatpush.msra.mxu0 %v4478
        %v4480 = vand.u32 %v3444, 4294901760
        %4481 = vmatpush.msra.mxu0 %v4480
        %v4482 = vand.u32 %v3440, 4294901760
        %4483 = vmatpush.msra.mxu0 %v4482
        %v4484 = vand.u32 %v3436, 4294901760
        %4485 = vmatpush.msra.mxu0 %v4484
        %v4486 = vand.u32 %v3432, 4294901760
        %4487 = vmatpush.msra.mxu0 %v4486
        %v4488 = vand.u32 %v3428, 4294901760
        %4489 = vmatpush.msra.mxu0 %v4488
        %v4490 = vand.u32 %v3424, 4294901760
        %4491 = vmatpush.msra.mxu0 %v4490
        %v4492 = vand.u32 %v3420, 4294901760
        %4493 = vmatpush.msra.mxu0 %v4492
        %v4494 = vand.u32 %v3416, 4294901760
        %4495 = vmatpush.msra.mxu0 %v4494
        %v4496 = vand.u32 %v3412, 4294901760
        %4497 = vmatpush.msra.mxu0 %v4496
        %v4498 = vand.u32 %v3408, 4294901760
        %4499 = vmatpush.msra.mxu0 %v4498
        %v4500 = vand.u32 %v3404, 4294901760
        %4501 = vmatpush.msra.mxu0 %v4500
        %v4502 = vand.u32 %v3400, 4294901760
        %4503 = vmatpush.msra.mxu0 %v4502
        %v4504 = vand.u32 %v3396, 4294901760
        %4505 = vmatpush.msra.mxu0 %v4504
        %v4506 = vand.u32 %v3392, 4294901760
        %4507 = vmatpush.msra.mxu0 %v4506
        %v4508 = vand.u32 %v3387, 4294901760
        %v4509 = vsub.f32 %v3387, %v4508
        %v4510 = vand.u32 %v4509, 4294901760
        %v4511 = vsub.f32 %v4509, %v4510
        %v4512 = vand.u32 %v4511, 4294901760
        %4513 = vmatmul.f32.gmra.mxu0 %v4512
        %v4514 = vpop.f32.mrf.mxu0
        %v4515 = vadd.f32 0.0, %v4514
        %4516 = vdwg.mxu0
        %v4517 = vand.u32 %v3452, 4294901760
        %v4518 = vsub.f32 %v3452, %v4517
        %v4519 = vand.u32 %v4518, 4294901760
        %v4520 = vsub.f32 %v4518, %v4519
        %v4521 = vand.u32 %v4520, 4294901760
        %4522 = vmatpush.msra.mxu0 %v4521
        %v4523 = vand.u32 %v3448, 4294901760
        %v4524 = vsub.f32 %v3448, %v4523
        %v4525 = vand.u32 %v4524, 4294901760
        %v4526 = vsub.f32 %v4524, %v4525
        %v4527 = vand.u32 %v4526, 4294901760
        %4528 = vmatpush.msra.mxu0 %v4527
        %v4529 = vand.u32 %v3444, 4294901760
        %v4530 = vsub.f32 %v3444, %v4529
        %v4531 = vand.u32 %v4530, 4294901760
        %v4532 = vsub.f32 %v4530, %v4531
        %v4533 = vand.u32 %v4532, 4294901760
        %4534 = vmatpush.msra.mxu0 %v4533
        %v4535 = vand.u32 %v3440, 4294901760
        %v4536 = vsub.f32 %v3440, %v4535
        %v4537 = vand.u32 %v4536, 4294901760
        %v4538 = vsub.f32 %v4536, %v4537
        %v4539 = vand.u32 %v4538, 4294901760
        %4540 = vmatpush.msra.mxu0 %v4539
        %v4541 = vand.u32 %v3436, 4294901760
        %v4542 = vsub.f32 %v3436, %v4541
        %v4543 = vand.u32 %v4542, 4294901760
        %v4544 = vsub.f32 %v4542, %v4543
        %v4545 = vand.u32 %v4544, 4294901760
        %4546 = vmatpush.msra.mxu0 %v4545
        %v4547 = vand.u32 %v3432, 4294901760
        %v4548 = vsub.f32 %v3432, %v4547
        %v4549 = vand.u32 %v4548, 4294901760
        %v4550 = vsub.f32 %v4548, %v4549
        %v4551 = vand.u32 %v4550, 4294901760
        %4552 = vmatpush.msra.mxu0 %v4551
        %v4553 = vand.u32 %v3428, 4294901760
        %v4554 = vsub.f32 %v3428, %v4553
        %v4555 = vand.u32 %v4554, 4294901760
        %v4556 = vsub.f32 %v4554, %v4555
        %v4557 = vand.u32 %v4556, 4294901760
        %4558 = vmatpush.msra.mxu0 %v4557
        %v4559 = vand.u32 %v3424, 4294901760
        %v4560 = vsub.f32 %v3424, %v4559
        %v4561 = vand.u32 %v4560, 4294901760
        %v4562 = vsub.f32 %v4560, %v4561
        %v4563 = vand.u32 %v4562, 4294901760
        %4564 = vmatpush.msra.mxu0 %v4563
        %v4565 = vand.u32 %v3420, 4294901760
        %v4566 = vsub.f32 %v3420, %v4565
        %v4567 = vand.u32 %v4566, 4294901760
        %v4568 = vsub.f32 %v4566, %v4567
        %v4569 = vand.u32 %v4568, 4294901760
        %4570 = vmatpush.msra.mxu0 %v4569
        %v4571 = vand.u32 %v3416, 4294901760
        %v4572 = vsub.f32 %v3416, %v4571
        %v4573 = vand.u32 %v4572, 4294901760
        %v4574 = vsub.f32 %v4572, %v4573
        %v4575 = vand.u32 %v4574, 4294901760
        %4576 = vmatpush.msra.mxu0 %v4575
        %v4577 = vand.u32 %v3412, 4294901760
        %v4578 = vsub.f32 %v3412, %v4577
        %v4579 = vand.u32 %v4578, 4294901760
        %v4580 = vsub.f32 %v4578, %v4579
        %v4581 = vand.u32 %v4580, 4294901760
        %4582 = vmatpush.msra.mxu0 %v4581
        %v4583 = vand.u32 %v3408, 4294901760
        %v4584 = vsub.f32 %v3408, %v4583
        %v4585 = vand.u32 %v4584, 4294901760
        %v4586 = vsub.f32 %v4584, %v4585
        %v4587 = vand.u32 %v4586, 4294901760
        %4588 = vmatpush.msra.mxu0 %v4587
        %v4589 = vand.u32 %v3404, 4294901760
        %v4590 = vsub.f32 %v3404, %v4589
        %v4591 = vand.u32 %v4590, 4294901760
        %v4592 = vsub.f32 %v4590, %v4591
        %v4593 = vand.u32 %v4592, 4294901760
        %4594 = vmatpush.msra.mxu0 %v4593
        %v4595 = vand.u32 %v3400, 4294901760
        %v4596 = vsub.f32 %v3400, %v4595
        %v4597 = vand.u32 %v4596, 4294901760
        %v4598 = vsub.f32 %v4596, %v4597
        %v4599 = vand.u32 %v4598, 4294901760
        %4600 = vmatpush.msra.mxu0 %v4599
        %v4601 = vand.u32 %v3396, 4294901760
        %v4602 = vsub.f32 %v3396, %v4601
        %v4603 = vand.u32 %v4602, 4294901760
        %v4604 = vsub.f32 %v4602, %v4603
        %v4605 = vand.u32 %v4604, 4294901760
        %4606 = vmatpush.msra.mxu0 %v4605
        %v4607 = vand.u32 %v3392, 4294901760
        %v4608 = vsub.f32 %v3392, %v4607
        %v4609 = vand.u32 %v4608, 4294901760
        %v4610 = vsub.f32 %v4608, %v4609
        %v4611 = vand.u32 %v4610, 4294901760
        %4612 = vmatpush.msra.mxu0 %v4611
        %v4613 = vand.u32 %v3387, 4294901760
        %4614 = vmatmul.f32.gmra.mxu0 %v4613
        %v4615 = vpop.f32.mrf.mxu0
        %v4616 = vadd.f32 %v4515, %v4615
        %4617 = vdwg.mxu0
        %v4618 = vand.u32 %v3452, 4294901760
        %v4619 = vsub.f32 %v3452, %v4618
        %4620 = vmatpush.msra.mxu0 %v4619
        %v4621 = vand.u32 %v3448, 4294901760
        %v4622 = vsub.f32 %v3448, %v4621
        %4623 = vmatpush.msra.mxu0 %v4622
        %v4624 = vand.u32 %v3444, 4294901760
        %v4625 = vsub.f32 %v3444, %v4624
        %4626 = vmatpush.msra.mxu0 %v4625
        %v4627 = vand.u32 %v3440, 4294901760
        %v4628 = vsub.f32 %v3440, %v4627
        %4629 = vmatpush.msra.mxu0 %v4628
        %v4630 = vand.u32 %v3436, 4294901760
        %v4631 = vsub.f32 %v3436, %v4630
        %4632 = vmatpush.msra.mxu0 %v4631
        %v4633 = vand.u32 %v3432, 4294901760
        %v4634 = vsub.f32 %v3432, %v4633
        %4635 = vmatpush.msra.mxu0 %v4634
        %v4636 = vand.u32 %v3428, 4294901760
        %v4637 = vsub.f32 %v3428, %v4636
        %4638 = vmatpush.msra.mxu0 %v4637
        %v4639 = vand.u32 %v3424, 4294901760
        %v4640 = vsub.f32 %v3424, %v4639
        %4641 = vmatpush.msra.mxu0 %v4640
        %v4642 = vand.u32 %v3420, 4294901760
        %v4643 = vsub.f32 %v3420, %v4642
        %4644 = vmatpush.msra.mxu0 %v4643
        %v4645 = vand.u32 %v3416, 4294901760
        %v4646 = vsub.f32 %v3416, %v4645
        %4647 = vmatpush.msra.mxu0 %v4646
        %v4648 = vand.u32 %v3412, 4294901760
        %v4649 = vsub.f32 %v3412, %v4648
        %4650 = vmatpush.msra.mxu0 %v4649
        %v4651 = vand.u32 %v3408, 4294901760
        %v4652 = vsub.f32 %v3408, %v4651
        %4653 = vmatpush.msra.mxu0 %v4652
        %v4654 = vand.u32 %v3404, 4294901760
        %v4655 = vsub.f32 %v3404, %v4654
        %4656 = vmatpush.msra.mxu0 %v4655
        %v4657 = vand.u32 %v3400, 4294901760
        %v4658 = vsub.f32 %v3400, %v4657
        %4659 = vmatpush.msra.mxu0 %v4658
        %v4660 = vand.u32 %v3396, 4294901760
        %v4661 = vsub.f32 %v3396, %v4660
        %4662 = vmatpush.msra.mxu0 %v4661
        %v4663 = vand.u32 %v3392, 4294901760
        %v4664 = vsub.f32 %v3392, %v4663
        %4665 = vmatpush.msra.mxu0 %v4664
        %v4666 = vand.u32 %v3387, 4294901760
        %v4667 = vsub.f32 %v3387, %v4666
        %4668 = vmatmul.f32.gmra.mxu0 %v4667
        %v4669 = vpop.f32.mrf.mxu0
        %v4670 = vadd.f32 %v4616, %v4669
        %4671 = vdwg.mxu0
        %v4672 = vand.u32 %v3452, 4294901760
        %4673 = vmatpush.msra.mxu0 %v4672
        %v4674 = vand.u32 %v3448, 4294901760
        %4675 = vmatpush.msra.mxu0 %v4674
        %v4676 = vand.u32 %v3444, 4294901760
        %4677 = vmatpush.msra.mxu0 %v4676
        %v4678 = vand.u32 %v3440, 4294901760
        %4679 = vmatpush.msra.mxu0 %v4678
        %v4680 = vand.u32 %v3436, 4294901760
        %4681 = vmatpush.msra.mxu0 %v4680
        %v4682 = vand.u32 %v3432, 4294901760
        %4683 = vmatpush.msra.mxu0 %v4682
        %v4684 = vand.u32 %v3428, 4294901760
        %4685 = vmatpush.msra.mxu0 %v4684
        %v4686 = vand.u32 %v3424, 4294901760
        %4687 = vmatpush.msra.mxu0 %v4686
        %v4688 = vand.u32 %v3420, 4294901760
        %4689 = vmatpush.msra.mxu0 %v4688
        %v4690 = vand.u32 %v3416, 4294901760
        %4691 = vmatpush.msra.mxu0 %v4690
        %v4692 = vand.u32 %v3412, 4294901760
        %4693 = vmatpush.msra.mxu0 %v4692
        %v4694 = vand.u32 %v3408, 4294901760
        %4695 = vmatpush.msra.mxu0 %v4694
        %v4696 = vand.u32 %v3404, 4294901760
        %4697 = vmatpush.msra.mxu0 %v4696
        %v4698 = vand.u32 %v3400, 4294901760
        %4699 = vmatpush.msra.mxu0 %v4698
        %v4700 = vand.u32 %v3396, 4294901760
        %4701 = vmatpush.msra.mxu0 %v4700
        %v4702 = vand.u32 %v3392, 4294901760
        %4703 = vmatpush.msra.mxu0 %v4702
        %v4704 = vand.u32 %v3387, 4294901760
        %v4705 = vsub.f32 %v3387, %v4704
        %v4706 = vand.u32 %v4705, 4294901760
        %4707 = vmatmul.f32.gmra.mxu0 %v4706
        %v4708 = vpop.f32.mrf.mxu0
        %v4709 = vadd.f32 %v4670, %v4708
        %4710 = vdwg.mxu0
        %v4711 = vand.u32 %v3452, 4294901760
        %v4712 = vsub.f32 %v3452, %v4711
        %v4713 = vand.u32 %v4712, 4294901760
        %4714 = vmatpush.msra.mxu0 %v4713
        %v4715 = vand.u32 %v3448, 4294901760
        %v4716 = vsub.f32 %v3448, %v4715
        %v4717 = vand.u32 %v4716, 4294901760
        %4718 = vmatpush.msra.mxu0 %v4717
        %v4719 = vand.u32 %v3444, 4294901760
        %v4720 = vsub.f32 %v3444, %v4719
        %v4721 = vand.u32 %v4720, 4294901760
        %4722 = vmatpush.msra.mxu0 %v4721
        %v4723 = vand.u32 %v3440, 4294901760
        %v4724 = vsub.f32 %v3440, %v4723
        %v4725 = vand.u32 %v4724, 4294901760
        %4726 = vmatpush.msra.mxu0 %v4725
        %v4727 = vand.u32 %v3436, 4294901760
        %v4728 = vsub.f32 %v3436, %v4727
        %v4729 = vand.u32 %v4728, 4294901760
        %4730 = vmatpush.msra.mxu0 %v4729
        %v4731 = vand.u32 %v3432, 4294901760
        %v4732 = vsub.f32 %v3432, %v4731
        %v4733 = vand.u32 %v4732, 4294901760
        %4734 = vmatpush.msra.mxu0 %v4733
        %v4735 = vand.u32 %v3428, 4294901760
        %v4736 = vsub.f32 %v3428, %v4735
        %v4737 = vand.u32 %v4736, 4294901760
        %4738 = vmatpush.msra.mxu0 %v4737
        %v4739 = vand.u32 %v3424, 4294901760
        %v4740 = vsub.f32 %v3424, %v4739
        %v4741 = vand.u32 %v4740, 4294901760
        %4742 = vmatpush.msra.mxu0 %v4741
        %v4743 = vand.u32 %v3420, 4294901760
        %v4744 = vsub.f32 %v3420, %v4743
        %v4745 = vand.u32 %v4744, 4294901760
        %4746 = vmatpush.msra.mxu0 %v4745
        %v4747 = vand.u32 %v3416, 4294901760
        %v4748 = vsub.f32 %v3416, %v4747
        %v4749 = vand.u32 %v4748, 4294901760
        %4750 = vmatpush.msra.mxu0 %v4749
        %v4751 = vand.u32 %v3412, 4294901760
        %v4752 = vsub.f32 %v3412, %v4751
        %v4753 = vand.u32 %v4752, 4294901760
        %4754 = vmatpush.msra.mxu0 %v4753
        %v4755 = vand.u32 %v3408, 4294901760
        %v4756 = vsub.f32 %v3408, %v4755
        %v4757 = vand.u32 %v4756, 4294901760
        %4758 = vmatpush.msra.mxu0 %v4757
        %v4759 = vand.u32 %v3404, 4294901760
        %v4760 = vsub.f32 %v3404, %v4759
        %v4761 = vand.u32 %v4760, 4294901760
        %4762 = vmatpush.msra.mxu0 %v4761
        %v4763 = vand.u32 %v3400, 4294901760
        %v4764 = vsub.f32 %v3400, %v4763
        %v4765 = vand.u32 %v4764, 4294901760
        %4766 = vmatpush.msra.mxu0 %v4765
        %v4767 = vand.u32 %v3396, 4294901760
        %v4768 = vsub.f32 %v3396, %v4767
        %v4769 = vand.u32 %v4768, 4294901760
        %4770 = vmatpush.msra.mxu0 %v4769
        %v4771 = vand.u32 %v3392, 4294901760
        %v4772 = vsub.f32 %v3392, %v4771
        %v4773 = vand.u32 %v4772, 4294901760
        %4774 = vmatpush.msra.mxu0 %v4773
        %v4775 = vand.u32 %v3387, 4294901760
        %4776 = vmatmul.f32.gmra.mxu0 %v4775
        %v4777 = vpop.f32.mrf.mxu0
        %v4778 = vadd.f32 %v4709, %v4777
        %4779 = vdwg.mxu0
        %v4780 = vand.u32 %v3452, 4294901760
        %4781 = vmatpush.msra.mxu0 %v4780
        %v4782 = vand.u32 %v3448, 4294901760
        %4783 = vmatpush.msra.mxu0 %v4782
        %v4784 = vand.u32 %v3444, 4294901760
        %4785 = vmatpush.msra.mxu0 %v4784
        %v4786 = vand.u32 %v3440, 4294901760
        %4787 = vmatpush.msra.mxu0 %v4786
        %v4788 = vand.u32 %v3436, 4294901760
        %4789 = vmatpush.msra.mxu0 %v4788
        %v4790 = vand.u32 %v3432, 4294901760
        %4791 = vmatpush.msra.mxu0 %v4790
        %v4792 = vand.u32 %v3428, 4294901760
        %4793 = vmatpush.msra.mxu0 %v4792
        %v4794 = vand.u32 %v3424, 4294901760
        %4795 = vmatpush.msra.mxu0 %v4794
        %v4796 = vand.u32 %v3420, 4294901760
        %4797 = vmatpush.msra.mxu0 %v4796
        %v4798 = vand.u32 %v3416, 4294901760
        %4799 = vmatpush.msra.mxu0 %v4798
        %v4800 = vand.u32 %v3412, 4294901760
        %4801 = vmatpush.msra.mxu0 %v4800
        %v4802 = vand.u32 %v3408, 4294901760
        %4803 = vmatpush.msra.mxu0 %v4802
        %v4804 = vand.u32 %v3404, 4294901760
        %4805 = vmatpush.msra.mxu0 %v4804
        %v4806 = vand.u32 %v3400, 4294901760
        %4807 = vmatpush.msra.mxu0 %v4806
        %v4808 = vand.u32 %v3396, 4294901760
        %4809 = vmatpush.msra.mxu0 %v4808
        %v4810 = vand.u32 %v3392, 4294901760
        %4811 = vmatpush.msra.mxu0 %v4810
        %v4812 = vand.u32 %v3387, 4294901760
        %4813 = vmatmul.f32.gmra.mxu0 %v4812
        %v4814 = vpop.f32.mrf.mxu0
        %v4815 = vadd.f32 %v4778, %v4814
        %4816 = vdwg.mxu0
        %v4817 = vadd.f32 %v3383, %v3792
        %v4818 = vadd.f32 %v3384, %v4133
        %v4819 = vadd.f32 %v3385, %v4474
        %v4820 = vadd.f32 %v3386, %v4815
        %v4821 = vld [vmem:[#allocation2 + $0x18] sm:$0xff]
        %s4822 = scalar_lea.vmem [#allocation3], 1536
        %v4823 = vld [vmem:[%s4822] sm:$0xff]
        %v4824 = vld [vmem:[%s4822 + $0x8] sm:$0xff]
        %v4825 = vld [vmem:[%s4822 + $0x10] sm:$0xff]
        %v4826 = vld [vmem:[%s4822 + $0x18] sm:$0xff]
        %v4827 = vld [vmem:[%s4822 + $0x20] sm:$0xff]
        %v4828 = vld [vmem:[%s4822 + $0x28] sm:$0xff]
        %v4829 = vld [vmem:[%s4822 + $0x30] sm:$0xff]
        %v4830 = vld [vmem:[%s4822 + $0x38] sm:$0xff]
        %v4831 = vld [vmem:[%s4822 + $0x40] sm:$0xff]
        %v4832 = vld [vmem:[%s4822 + $0x48] sm:$0xff]
        %v4833 = vld [vmem:[%s4822 + $0x50] sm:$0xff]
        %v4834 = vld [vmem:[%s4822 + $0x58] sm:$0xff]
        %v4835 = vld [vmem:[%s4822 + $0x60] sm:$0xff]
        %v4836 = vld [vmem:[%s4822 + $0x68] sm:$0xff]
        %v4837 = vld [vmem:[%s4822 + $0x70] sm:$0xff]
        %v4838 = vld [vmem:[%s4822 + $0x78] sm:$0xff]
        %v4839 = vld [vmem:[%s4822 + $0x80] sm:$0xff]
        %v4840 = vld [vmem:[%s4822 + $0x88] sm:$0xff]
        %v4841 = vld [vmem:[%s4822 + $0x90] sm:$0xff]
        %v4842 = vld [vmem:[%s4822 + $0x98] sm:$0xff]
        %v4843 = vld [vmem:[%s4822 + $0xa0] sm:$0xff]
        %v4844 = vld [vmem:[%s4822 + $0xa8] sm:$0xff]
        %v4845 = vld [vmem:[%s4822 + $0xb0] sm:$0xff]
        %v4846 = vld [vmem:[%s4822 + $0xb8] sm:$0xff]
        %v4847 = vld [vmem:[%s4822 + $0xc0] sm:$0xff]
        %v4848 = vld [vmem:[%s4822 + $0xc8] sm:$0xff]
        %v4849 = vld [vmem:[%s4822 + $0xd0] sm:$0xff]
        %v4850 = vld [vmem:[%s4822 + $0xd8] sm:$0xff]
        %v4851 = vld [vmem:[%s4822 + $0xe0] sm:$0xff]
        %v4852 = vld [vmem:[%s4822 + $0xe8] sm:$0xff]
        %v4853 = vld [vmem:[%s4822 + $0xf0] sm:$0xff]
        %v4854 = vld [vmem:[%s4822 + $0xf8] sm:$0xff]
        %v4855 = vld [vmem:[%s4822 + $0x100] sm:$0xff]
        %v4856 = vld [vmem:[%s4822 + $0x108] sm:$0xff]
        %v4857 = vld [vmem:[%s4822 + $0x110] sm:$0xff]
        %v4858 = vld [vmem:[%s4822 + $0x118] sm:$0xff]
        %v4859 = vld [vmem:[%s4822 + $0x120] sm:$0xff]
        %v4860 = vld [vmem:[%s4822 + $0x128] sm:$0xff]
        %v4861 = vld [vmem:[%s4822 + $0x130] sm:$0xff]
        %v4862 = vld [vmem:[%s4822 + $0x138] sm:$0xff]
        %v4863 = vld [vmem:[%s4822 + $0x140] sm:$0xff]
        %v4864 = vld [vmem:[%s4822 + $0x148] sm:$0xff]
        %v4865 = vld [vmem:[%s4822 + $0x150] sm:$0xff]
        %v4866 = vld [vmem:[%s4822 + $0x158] sm:$0xff]
        %v4867 = vld [vmem:[%s4822 + $0x160] sm:$0xff]
        %v4868 = vld [vmem:[%s4822 + $0x168] sm:$0xff]
        %v4869 = vld [vmem:[%s4822 + $0x170] sm:$0xff]
        %v4870 = vld [vmem:[%s4822 + $0x178] sm:$0xff]
        %v4871 = vld [vmem:[%s4822 + $0x180] sm:$0xff]
        %v4872 = vld [vmem:[%s4822 + $0x188] sm:$0xff]
        %v4873 = vld [vmem:[%s4822 + $0x190] sm:$0xff]
        %v4874 = vld [vmem:[%s4822 + $0x198] sm:$0xff]
        %v4875 = vld [vmem:[%s4822 + $0x1a0] sm:$0xff]
        %v4876 = vld [vmem:[%s4822 + $0x1a8] sm:$0xff]
        %v4877 = vld [vmem:[%s4822 + $0x1b0] sm:$0xff]
        %v4878 = vld [vmem:[%s4822 + $0x1b8] sm:$0xff]
        %v4879 = vld [vmem:[%s4822 + $0x1c0] sm:$0xff]
        %v4880 = vld [vmem:[%s4822 + $0x1c8] sm:$0xff]
        %v4881 = vld [vmem:[%s4822 + $0x1d0] sm:$0xff]
        %v4882 = vld [vmem:[%s4822 + $0x1d8] sm:$0xff]
        %v4883 = vld [vmem:[%s4822 + $0x1e0] sm:$0xff]
        %v4884 = vld [vmem:[%s4822 + $0x1e8] sm:$0xff]
        %v4885 = vld [vmem:[%s4822 + $0x1f0] sm:$0xff]
        %v4886 = vld [vmem:[%s4822 + $0x1f8] sm:$0xff]
        %v4887 = vand.u32 %v4883, 4294901760
        %4888 = vmatpush.msra.mxu0 %v4887
        %v4889 = vand.u32 %v4879, 4294901760
        %4890 = vmatpush.msra.mxu0 %v4889
        %v4891 = vand.u32 %v4875, 4294901760
        %4892 = vmatpush.msra.mxu0 %v4891
        %v4893 = vand.u32 %v4871, 4294901760
        %4894 = vmatpush.msra.mxu0 %v4893
        %v4895 = vand.u32 %v4867, 4294901760
        %4896 = vmatpush.msra.mxu0 %v4895
        %v4897 = vand.u32 %v4863, 4294901760
        %4898 = vmatpush.msra.mxu0 %v4897
        %v4899 = vand.u32 %v4859, 4294901760
        %4900 = vmatpush.msra.mxu0 %v4899
        %v4901 = vand.u32 %v4855, 4294901760
        %4902 = vmatpush.msra.mxu0 %v4901
        %v4903 = vand.u32 %v4851, 4294901760
        %4904 = vmatpush.msra.mxu0 %v4903
        %v4905 = vand.u32 %v4847, 4294901760
        %4906 = vmatpush.msra.mxu0 %v4905
        %v4907 = vand.u32 %v4843, 4294901760
        %4908 = vmatpush.msra.mxu0 %v4907
        %v4909 = vand.u32 %v4839, 4294901760
        %4910 = vmatpush.msra.mxu0 %v4909
        %v4911 = vand.u32 %v4835, 4294901760
        %4912 = vmatpush.msra.mxu0 %v4911
        %v4913 = vand.u32 %v4831, 4294901760
        %4914 = vmatpush.msra.mxu0 %v4913
        %v4915 = vand.u32 %v4827, 4294901760
        %4916 = vmatpush.msra.mxu0 %v4915
        %v4917 = vand.u32 %v4823, 4294901760
        %4918 = vmatpush.msra.mxu0 %v4917
        %v4919 = vand.u32 %v4821, 4294901760
        %v4920 = vsub.f32 %v4821, %v4919
        %v4921 = vand.u32 %v4920, 4294901760
        %v4922 = vsub.f32 %v4920, %v4921
        %v4923 = vand.u32 %v4922, 4294901760
        %4924 = vmatmul.f32.gmra.mxu0 %v4923
        %v4925 = vpop.f32.mrf.mxu0
        %v4926 = vadd.f32 0.0, %v4925
        %4927 = vdwg.mxu0
        %v4928 = vand.u32 %v4883, 4294901760
        %v4929 = vsub.f32 %v4883, %v4928
        %v4930 = vand.u32 %v4929, 4294901760
        %v4931 = vsub.f32 %v4929, %v4930
        %v4932 = vand.u32 %v4931, 4294901760
        %4933 = vmatpush.msra.mxu0 %v4932
        %v4934 = vand.u32 %v4879, 4294901760
        %v4935 = vsub.f32 %v4879, %v4934
        %v4936 = vand.u32 %v4935, 4294901760
        %v4937 = vsub.f32 %v4935, %v4936
        %v4938 = vand.u32 %v4937, 4294901760
        %4939 = vmatpush.msra.mxu0 %v4938
        %v4940 = vand.u32 %v4875, 4294901760
        %v4941 = vsub.f32 %v4875, %v4940
        %v4942 = vand.u32 %v4941, 4294901760
        %v4943 = vsub.f32 %v4941, %v4942
        %v4944 = vand.u32 %v4943, 4294901760
        %4945 = vmatpush.msra.mxu0 %v4944
        %v4946 = vand.u32 %v4871, 4294901760
        %v4947 = vsub.f32 %v4871, %v4946
        %v4948 = vand.u32 %v4947, 4294901760
        %v4949 = vsub.f32 %v4947, %v4948
        %v4950 = vand.u32 %v4949, 4294901760
        %4951 = vmatpush.msra.mxu0 %v4950
        %v4952 = vand.u32 %v4867, 4294901760
        %v4953 = vsub.f32 %v4867, %v4952
        %v4954 = vand.u32 %v4953, 4294901760
        %v4955 = vsub.f32 %v4953, %v4954
        %v4956 = vand.u32 %v4955, 4294901760
        %4957 = vmatpush.msra.mxu0 %v4956
        %v4958 = vand.u32 %v4863, 4294901760
        %v4959 = vsub.f32 %v4863, %v4958
        %v4960 = vand.u32 %v4959, 4294901760
        %v4961 = vsub.f32 %v4959, %v4960
        %v4962 = vand.u32 %v4961, 4294901760
        %4963 = vmatpush.msra.mxu0 %v4962
        %v4964 = vand.u32 %v4859, 4294901760
        %v4965 = vsub.f32 %v4859, %v4964
        %v4966 = vand.u32 %v4965, 4294901760
        %v4967 = vsub.f32 %v4965, %v4966
        %v4968 = vand.u32 %v4967, 4294901760
        %4969 = vmatpush.msra.mxu0 %v4968
        %v4970 = vand.u32 %v4855, 4294901760
        %v4971 = vsub.f32 %v4855, %v4970
        %v4972 = vand.u32 %v4971, 4294901760
        %v4973 = vsub.f32 %v4971, %v4972
        %v4974 = vand.u32 %v4973, 4294901760
        %4975 = vmatpush.msra.mxu0 %v4974
        %v4976 = vand.u32 %v4851, 4294901760
        %v4977 = vsub.f32 %v4851, %v4976
        %v4978 = vand.u32 %v4977, 4294901760
        %v4979 = vsub.f32 %v4977, %v4978
        %v4980 = vand.u32 %v4979, 4294901760
        %4981 = vmatpush.msra.mxu0 %v4980
        %v4982 = vand.u32 %v4847, 4294901760
        %v4983 = vsub.f32 %v4847, %v4982
        %v4984 = vand.u32 %v4983, 4294901760
        %v4985 = vsub.f32 %v4983, %v4984
        %v4986 = vand.u32 %v4985, 4294901760
        %4987 = vmatpush.msra.mxu0 %v4986
        %v4988 = vand.u32 %v4843, 4294901760
        %v4989 = vsub.f32 %v4843, %v4988
        %v4990 = vand.u32 %v4989, 4294901760
        %v4991 = vsub.f32 %v4989, %v4990
        %v4992 = vand.u32 %v4991, 4294901760
        %4993 = vmatpush.msra.mxu0 %v4992
        %v4994 = vand.u32 %v4839, 4294901760
        %v4995 = vsub.f32 %v4839, %v4994
        %v4996 = vand.u32 %v4995, 4294901760
        %v4997 = vsub.f32 %v4995, %v4996
        %v4998 = vand.u32 %v4997, 4294901760
        %4999 = vmatpush.msra.mxu0 %v4998
        %v5000 = vand.u32 %v4835, 4294901760
        %v5001 = vsub.f32 %v4835, %v5000
        %v5002 = vand.u32 %v5001, 4294901760
        %v5003 = vsub.f32 %v5001, %v5002
        %v5004 = vand.u32 %v5003, 4294901760
        %5005 = vmatpush.msra.mxu0 %v5004
        %v5006 = vand.u32 %v4831, 4294901760
        %v5007 = vsub.f32 %v4831, %v5006
        %v5008 = vand.u32 %v5007, 4294901760
        %v5009 = vsub.f32 %v5007, %v5008
        %v5010 = vand.u32 %v5009, 4294901760
        %5011 = vmatpush.msra.mxu0 %v5010
        %v5012 = vand.u32 %v4827, 4294901760
        %v5013 = vsub.f32 %v4827, %v5012
        %v5014 = vand.u32 %v5013, 4294901760
        %v5015 = vsub.f32 %v5013, %v5014
        %v5016 = vand.u32 %v5015, 4294901760
        %5017 = vmatpush.msra.mxu0 %v5016
        %v5018 = vand.u32 %v4823, 4294901760
        %v5019 = vsub.f32 %v4823, %v5018
        %v5020 = vand.u32 %v5019, 4294901760
        %v5021 = vsub.f32 %v5019, %v5020
        %v5022 = vand.u32 %v5021, 4294901760
        %5023 = vmatpush.msra.mxu0 %v5022
        %v5024 = vand.u32 %v4821, 4294901760
        %5025 = vmatmul.f32.gmra.mxu0 %v5024
        %v5026 = vpop.f32.mrf.mxu0
        %v5027 = vadd.f32 %v4926, %v5026
        %5028 = vdwg.mxu0
        %v5029 = vand.u32 %v4883, 4294901760
        %v5030 = vsub.f32 %v4883, %v5029
        %5031 = vmatpush.msra.mxu0 %v5030
        %v5032 = vand.u32 %v4879, 4294901760
        %v5033 = vsub.f32 %v4879, %v5032
        %5034 = vmatpush.msra.mxu0 %v5033
        %v5035 = vand.u32 %v4875, 4294901760
        %v5036 = vsub.f32 %v4875, %v5035
        %5037 = vmatpush.msra.mxu0 %v5036
        %v5038 = vand.u32 %v4871, 4294901760
        %v5039 = vsub.f32 %v4871, %v5038
        %5040 = vmatpush.msra.mxu0 %v5039
        %v5041 = vand.u32 %v4867, 4294901760
        %v5042 = vsub.f32 %v4867, %v5041
        %5043 = vmatpush.msra.mxu0 %v5042
        %v5044 = vand.u32 %v4863, 4294901760
        %v5045 = vsub.f32 %v4863, %v5044
        %5046 = vmatpush.msra.mxu0 %v5045
        %v5047 = vand.u32 %v4859, 4294901760
        %v5048 = vsub.f32 %v4859, %v5047
        %5049 = vmatpush.msra.mxu0 %v5048
        %v5050 = vand.u32 %v4855, 4294901760
        %v5051 = vsub.f32 %v4855, %v5050
        %5052 = vmatpush.msra.mxu0 %v5051
        %v5053 = vand.u32 %v4851, 4294901760
        %v5054 = vsub.f32 %v4851, %v5053
        %5055 = vmatpush.msra.mxu0 %v5054
        %v5056 = vand.u32 %v4847, 4294901760
        %v5057 = vsub.f32 %v4847, %v5056
        %5058 = vmatpush.msra.mxu0 %v5057
        %v5059 = vand.u32 %v4843, 4294901760
        %v5060 = vsub.f32 %v4843, %v5059
        %5061 = vmatpush.msra.mxu0 %v5060
        %v5062 = vand.u32 %v4839, 4294901760
        %v5063 = vsub.f32 %v4839, %v5062
        %5064 = vmatpush.msra.mxu0 %v5063
        %v5065 = vand.u32 %v4835, 4294901760
        %v5066 = vsub.f32 %v4835, %v5065
        %5067 = vmatpush.msra.mxu0 %v5066
        %v5068 = vand.u32 %v4831, 4294901760
        %v5069 = vsub.f32 %v4831, %v5068
        %5070 = vmatpush.msra.mxu0 %v5069
        %v5071 = vand.u32 %v4827, 4294901760
        %v5072 = vsub.f32 %v4827, %v5071
        %5073 = vmatpush.msra.mxu0 %v5072
        %v5074 = vand.u32 %v4823, 4294901760
        %v5075 = vsub.f32 %v4823, %v5074
        %5076 = vmatpush.msra.mxu0 %v5075
        %v5077 = vand.u32 %v4821, 4294901760
        %v5078 = vsub.f32 %v4821, %v5077
        %5079 = vmatmul.f32.gmra.mxu0 %v5078
        %v5080 = vpop.f32.mrf.mxu0
        %v5081 = vadd.f32 %v5027, %v5080
        %5082 = vdwg.mxu0
        %v5083 = vand.u32 %v4883, 4294901760
        %5084 = vmatpush.msra.mxu0 %v5083
        %v5085 = vand.u32 %v4879, 4294901760
        %5086 = vmatpush.msra.mxu0 %v5085
        %v5087 = vand.u32 %v4875, 4294901760
        %5088 = vmatpush.msra.mxu0 %v5087
        %v5089 = vand.u32 %v4871, 4294901760
        %5090 = vmatpush.msra.mxu0 %v5089
        %v5091 = vand.u32 %v4867, 4294901760
        %5092 = vmatpush.msra.mxu0 %v5091
        %v5093 = vand.u32 %v4863, 4294901760
        %5094 = vmatpush.msra.mxu0 %v5093
        %v5095 = vand.u32 %v4859, 4294901760
        %5096 = vmatpush.msra.mxu0 %v5095
        %v5097 = vand.u32 %v4855, 4294901760
        %5098 = vmatpush.msra.mxu0 %v5097
        %v5099 = vand.u32 %v4851, 4294901760
        %5100 = vmatpush.msra.mxu0 %v5099
        %v5101 = vand.u32 %v4847, 4294901760
        %5102 = vmatpush.msra.mxu0 %v5101
        %v5103 = vand.u32 %v4843, 4294901760
        %5104 = vmatpush.msra.mxu0 %v5103
        %v5105 = vand.u32 %v4839, 4294901760
        %5106 = vmatpush.msra.mxu0 %v5105
        %v5107 = vand.u32 %v4835, 4294901760
        %5108 = vmatpush.msra.mxu0 %v5107
        %v5109 = vand.u32 %v4831, 4294901760
        %5110 = vmatpush.msra.mxu0 %v5109
        %v5111 = vand.u32 %v4827, 4294901760
        %5112 = vmatpush.msra.mxu0 %v5111
        %v5113 = vand.u32 %v4823, 4294901760
        %5114 = vmatpush.msra.mxu0 %v5113
        %v5115 = vand.u32 %v4821, 4294901760
        %v5116 = vsub.f32 %v4821, %v5115
        %v5117 = vand.u32 %v5116, 4294901760
        %5118 = vmatmul.f32.gmra.mxu0 %v5117
        %v5119 = vpop.f32.mrf.mxu0
        %v5120 = vadd.f32 %v5081, %v5119
        %5121 = vdwg.mxu0
        %v5122 = vand.u32 %v4883, 4294901760
        %v5123 = vsub.f32 %v4883, %v5122
        %v5124 = vand.u32 %v5123, 4294901760
        %5125 = vmatpush.msra.mxu0 %v5124
        %v5126 = vand.u32 %v4879, 4294901760
        %v5127 = vsub.f32 %v4879, %v5126
        %v5128 = vand.u32 %v5127, 4294901760
        %5129 = vmatpush.msra.mxu0 %v5128
        %v5130 = vand.u32 %v4875, 4294901760
        %v5131 = vsub.f32 %v4875, %v5130
        %v5132 = vand.u32 %v5131, 4294901760
        %5133 = vmatpush.msra.mxu0 %v5132
        %v5134 = vand.u32 %v4871, 4294901760
        %v5135 = vsub.f32 %v4871, %v5134
        %v5136 = vand.u32 %v5135, 4294901760
        %5137 = vmatpush.msra.mxu0 %v5136
        %v5138 = vand.u32 %v4867, 4294901760
        %v5139 = vsub.f32 %v4867, %v5138
        %v5140 = vand.u32 %v5139, 4294901760
        %5141 = vmatpush.msra.mxu0 %v5140
        %v5142 = vand.u32 %v4863, 4294901760
        %v5143 = vsub.f32 %v4863, %v5142
        %v5144 = vand.u32 %v5143, 4294901760
        %5145 = vmatpush.msra.mxu0 %v5144
        %v5146 = vand.u32 %v4859, 4294901760
        %v5147 = vsub.f32 %v4859, %v5146
        %v5148 = vand.u32 %v5147, 4294901760
        %5149 = vmatpush.msra.mxu0 %v5148
        %v5150 = vand.u32 %v4855, 4294901760
        %v5151 = vsub.f32 %v4855, %v5150
        %v5152 = vand.u32 %v5151, 4294901760
        %5153 = vmatpush.msra.mxu0 %v5152
        %v5154 = vand.u32 %v4851, 4294901760
        %v5155 = vsub.f32 %v4851, %v5154
        %v5156 = vand.u32 %v5155, 4294901760
        %5157 = vmatpush.msra.mxu0 %v5156
        %v5158 = vand.u32 %v4847, 4294901760
        %v5159 = vsub.f32 %v4847, %v5158
        %v5160 = vand.u32 %v5159, 4294901760
        %5161 = vmatpush.msra.mxu0 %v5160
        %v5162 = vand.u32 %v4843, 4294901760
        %v5163 = vsub.f32 %v4843, %v5162
        %v5164 = vand.u32 %v5163, 4294901760
        %5165 = vmatpush.msra.mxu0 %v5164
        %v5166 = vand.u32 %v4839, 4294901760
        %v5167 = vsub.f32 %v4839, %v5166
        %v5168 = vand.u32 %v5167, 4294901760
        %5169 = vmatpush.msra.mxu0 %v5168
        %v5170 = vand.u32 %v4835, 4294901760
        %v5171 = vsub.f32 %v4835, %v5170
        %v5172 = vand.u32 %v5171, 4294901760
        %5173 = vmatpush.msra.mxu0 %v5172
        %v5174 = vand.u32 %v4831, 4294901760
        %v5175 = vsub.f32 %v4831, %v5174
        %v5176 = vand.u32 %v5175, 4294901760
        %5177 = vmatpush.msra.mxu0 %v5176
        %v5178 = vand.u32 %v4827, 4294901760
        %v5179 = vsub.f32 %v4827, %v5178
        %v5180 = vand.u32 %v5179, 4294901760
        %5181 = vmatpush.msra.mxu0 %v5180
        %v5182 = vand.u32 %v4823, 4294901760
        %v5183 = vsub.f32 %v4823, %v5182
        %v5184 = vand.u32 %v5183, 4294901760
        %5185 = vmatpush.msra.mxu0 %v5184
        %v5186 = vand.u32 %v4821, 4294901760
        %5187 = vmatmul.f32.gmra.mxu0 %v5186
        %v5188 = vpop.f32.mrf.mxu0
        %v5189 = vadd.f32 %v5120, %v5188
        %5190 = vdwg.mxu0
        %v5191 = vand.u32 %v4883, 4294901760
        %5192 = vmatpush.msra.mxu0 %v5191
        %v5193 = vand.u32 %v4879, 4294901760
        %5194 = vmatpush.msra.mxu0 %v5193
        %v5195 = vand.u32 %v4875, 4294901760
        %5196 = vmatpush.msra.mxu0 %v5195
        %v5197 = vand.u32 %v4871, 4294901760
        %5198 = vmatpush.msra.mxu0 %v5197
        %v5199 = vand.u32 %v4867, 4294901760
        %5200 = vmatpush.msra.mxu0 %v5199
        %v5201 = vand.u32 %v4863, 4294901760
        %5202 = vmatpush.msra.mxu0 %v5201
        %v5203 = vand.u32 %v4859, 4294901760
        %5204 = vmatpush.msra.mxu0 %v5203
        %v5205 = vand.u32 %v4855, 4294901760
        %5206 = vmatpush.msra.mxu0 %v5205
        %v5207 = vand.u32 %v4851, 4294901760
        %5208 = vmatpush.msra.mxu0 %v5207
        %v5209 = vand.u32 %v4847, 4294901760
        %5210 = vmatpush.msra.mxu0 %v5209
        %v5211 = vand.u32 %v4843, 4294901760
        %5212 = vmatpush.msra.mxu0 %v5211
        %v5213 = vand.u32 %v4839, 4294901760
        %5214 = vmatpush.msra.mxu0 %v5213
        %v5215 = vand.u32 %v4835, 4294901760
        %5216 = vmatpush.msra.mxu0 %v5215
        %v5217 = vand.u32 %v4831, 4294901760
        %5218 = vmatpush.msra.mxu0 %v5217
        %v5219 = vand.u32 %v4827, 4294901760
        %5220 = vmatpush.msra.mxu0 %v5219
        %v5221 = vand.u32 %v4823, 4294901760
        %5222 = vmatpush.msra.mxu0 %v5221
        %v5223 = vand.u32 %v4821, 4294901760
        %5224 = vmatmul.f32.gmra.mxu0 %v5223
        %v5225 = vpop.f32.mrf.mxu0
        %v5226 = vadd.f32 %v5189, %v5225
        %5227 = vdwg.mxu0
        %v5228 = vand.u32 %v4884, 4294901760
        %5229 = vmatpush.msra.mxu0 %v5228
        %v5230 = vand.u32 %v4880, 4294901760
        %5231 = vmatpush.msra.mxu0 %v5230
        %v5232 = vand.u32 %v4876, 4294901760
        %5233 = vmatpush.msra.mxu0 %v5232
        %v5234 = vand.u32 %v4872, 4294901760
        %5235 = vmatpush.msra.mxu0 %v5234
        %v5236 = vand.u32 %v4868, 4294901760
        %5237 = vmatpush.msra.mxu0 %v5236
        %v5238 = vand.u32 %v4864, 4294901760
        %5239 = vmatpush.msra.mxu0 %v5238
        %v5240 = vand.u32 %v4860, 4294901760
        %5241 = vmatpush.msra.mxu0 %v5240
        %v5242 = vand.u32 %v4856, 4294901760
        %5243 = vmatpush.msra.mxu0 %v5242
        %v5244 = vand.u32 %v4852, 4294901760
        %5245 = vmatpush.msra.mxu0 %v5244
        %v5246 = vand.u32 %v4848, 4294901760
        %5247 = vmatpush.msra.mxu0 %v5246
        %v5248 = vand.u32 %v4844, 4294901760
        %5249 = vmatpush.msra.mxu0 %v5248
        %v5250 = vand.u32 %v4840, 4294901760
        %5251 = vmatpush.msra.mxu0 %v5250
        %v5252 = vand.u32 %v4836, 4294901760
        %5253 = vmatpush.msra.mxu0 %v5252
        %v5254 = vand.u32 %v4832, 4294901760
        %5255 = vmatpush.msra.mxu0 %v5254
        %v5256 = vand.u32 %v4828, 4294901760
        %5257 = vmatpush.msra.mxu0 %v5256
        %v5258 = vand.u32 %v4824, 4294901760
        %5259 = vmatpush.msra.mxu0 %v5258
        %v5260 = vand.u32 %v4821, 4294901760
        %v5261 = vsub.f32 %v4821, %v5260
        %v5262 = vand.u32 %v5261, 4294901760
        %v5263 = vsub.f32 %v5261, %v5262
        %v5264 = vand.u32 %v5263, 4294901760
        %5265 = vmatmul.f32.gmra.mxu0 %v5264
        %v5266 = vpop.f32.mrf.mxu0
        %v5267 = vadd.f32 0.0, %v5266
        %5268 = vdwg.mxu0
        %v5269 = vand.u32 %v4884, 4294901760
        %v5270 = vsub.f32 %v4884, %v5269
        %v5271 = vand.u32 %v5270, 4294901760
        %v5272 = vsub.f32 %v5270, %v5271
        %v5273 = vand.u32 %v5272, 4294901760
        %5274 = vmatpush.msra.mxu0 %v5273
        %v5275 = vand.u32 %v4880, 4294901760
        %v5276 = vsub.f32 %v4880, %v5275
        %v5277 = vand.u32 %v5276, 4294901760
        %v5278 = vsub.f32 %v5276, %v5277
        %v5279 = vand.u32 %v5278, 4294901760
        %5280 = vmatpush.msra.mxu0 %v5279
        %v5281 = vand.u32 %v4876, 4294901760
        %v5282 = vsub.f32 %v4876, %v5281
        %v5283 = vand.u32 %v5282, 4294901760
        %v5284 = vsub.f32 %v5282, %v5283
        %v5285 = vand.u32 %v5284, 4294901760
        %5286 = vmatpush.msra.mxu0 %v5285
        %v5287 = vand.u32 %v4872, 4294901760
        %v5288 = vsub.f32 %v4872, %v5287
        %v5289 = vand.u32 %v5288, 4294901760
        %v5290 = vsub.f32 %v5288, %v5289
        %v5291 = vand.u32 %v5290, 4294901760
        %5292 = vmatpush.msra.mxu0 %v5291
        %v5293 = vand.u32 %v4868, 4294901760
        %v5294 = vsub.f32 %v4868, %v5293
        %v5295 = vand.u32 %v5294, 4294901760
        %v5296 = vsub.f32 %v5294, %v5295
        %v5297 = vand.u32 %v5296, 4294901760
        %5298 = vmatpush.msra.mxu0 %v5297
        %v5299 = vand.u32 %v4864, 4294901760
        %v5300 = vsub.f32 %v4864, %v5299
        %v5301 = vand.u32 %v5300, 4294901760
        %v5302 = vsub.f32 %v5300, %v5301
        %v5303 = vand.u32 %v5302, 4294901760
        %5304 = vmatpush.msra.mxu0 %v5303
        %v5305 = vand.u32 %v4860, 4294901760
        %v5306 = vsub.f32 %v4860, %v5305
        %v5307 = vand.u32 %v5306, 4294901760
        %v5308 = vsub.f32 %v5306, %v5307
        %v5309 = vand.u32 %v5308, 4294901760
        %5310 = vmatpush.msra.mxu0 %v5309
        %v5311 = vand.u32 %v4856, 4294901760
        %v5312 = vsub.f32 %v4856, %v5311
        %v5313 = vand.u32 %v5312, 4294901760
        %v5314 = vsub.f32 %v5312, %v5313
        %v5315 = vand.u32 %v5314, 4294901760
        %5316 = vmatpush.msra.mxu0 %v5315
        %v5317 = vand.u32 %v4852, 4294901760
        %v5318 = vsub.f32 %v4852, %v5317
        %v5319 = vand.u32 %v5318, 4294901760
        %v5320 = vsub.f32 %v5318, %v5319
        %v5321 = vand.u32 %v5320, 4294901760
        %5322 = vmatpush.msra.mxu0 %v5321
        %v5323 = vand.u32 %v4848, 4294901760
        %v5324 = vsub.f32 %v4848, %v5323
        %v5325 = vand.u32 %v5324, 4294901760
        %v5326 = vsub.f32 %v5324, %v5325
        %v5327 = vand.u32 %v5326, 4294901760
        %5328 = vmatpush.msra.mxu0 %v5327
        %v5329 = vand.u32 %v4844, 4294901760
        %v5330 = vsub.f32 %v4844, %v5329
        %v5331 = vand.u32 %v5330, 4294901760
        %v5332 = vsub.f32 %v5330, %v5331
        %v5333 = vand.u32 %v5332, 4294901760
        %5334 = vmatpush.msra.mxu0 %v5333
        %v5335 = vand.u32 %v4840, 4294901760
        %v5336 = vsub.f32 %v4840, %v5335
        %v5337 = vand.u32 %v5336, 4294901760
        %v5338 = vsub.f32 %v5336, %v5337
        %v5339 = vand.u32 %v5338, 4294901760
        %5340 = vmatpush.msra.mxu0 %v5339
        %v5341 = vand.u32 %v4836, 4294901760
        %v5342 = vsub.f32 %v4836, %v5341
        %v5343 = vand.u32 %v5342, 4294901760
        %v5344 = vsub.f32 %v5342, %v5343
        %v5345 = vand.u32 %v5344, 4294901760
        %5346 = vmatpush.msra.mxu0 %v5345
        %v5347 = vand.u32 %v4832, 4294901760
        %v5348 = vsub.f32 %v4832, %v5347
        %v5349 = vand.u32 %v5348, 4294901760
        %v5350 = vsub.f32 %v5348, %v5349
        %v5351 = vand.u32 %v5350, 4294901760
        %5352 = vmatpush.msra.mxu0 %v5351
        %v5353 = vand.u32 %v4828, 4294901760
        %v5354 = vsub.f32 %v4828, %v5353
        %v5355 = vand.u32 %v5354, 4294901760
        %v5356 = vsub.f32 %v5354, %v5355
        %v5357 = vand.u32 %v5356, 4294901760
        %5358 = vmatpush.msra.mxu0 %v5357
        %v5359 = vand.u32 %v4824, 4294901760
        %v5360 = vsub.f32 %v4824, %v5359
        %v5361 = vand.u32 %v5360, 4294901760
        %v5362 = vsub.f32 %v5360, %v5361
        %v5363 = vand.u32 %v5362, 4294901760
        %5364 = vmatpush.msra.mxu0 %v5363
        %v5365 = vand.u32 %v4821, 4294901760
        %5366 = vmatmul.f32.gmra.mxu0 %v5365
        %v5367 = vpop.f32.mrf.mxu0
        %v5368 = vadd.f32 %v5267, %v5367
        %5369 = vdwg.mxu0
        %v5370 = vand.u32 %v4884, 4294901760
        %v5371 = vsub.f32 %v4884, %v5370
        %5372 = vmatpush.msra.mxu0 %v5371
        %v5373 = vand.u32 %v4880, 4294901760
        %v5374 = vsub.f32 %v4880, %v5373
        %5375 = vmatpush.msra.mxu0 %v5374
        %v5376 = vand.u32 %v4876, 4294901760
        %v5377 = vsub.f32 %v4876, %v5376
        %5378 = vmatpush.msra.mxu0 %v5377
        %v5379 = vand.u32 %v4872, 4294901760
        %v5380 = vsub.f32 %v4872, %v5379
        %5381 = vmatpush.msra.mxu0 %v5380
        %v5382 = vand.u32 %v4868, 4294901760
        %v5383 = vsub.f32 %v4868, %v5382
        %5384 = vmatpush.msra.mxu0 %v5383
        %v5385 = vand.u32 %v4864, 4294901760
        %v5386 = vsub.f32 %v4864, %v5385
        %5387 = vmatpush.msra.mxu0 %v5386
        %v5388 = vand.u32 %v4860, 4294901760
        %v5389 = vsub.f32 %v4860, %v5388
        %5390 = vmatpush.msra.mxu0 %v5389
        %v5391 = vand.u32 %v4856, 4294901760
        %v5392 = vsub.f32 %v4856, %v5391
        %5393 = vmatpush.msra.mxu0 %v5392
        %v5394 = vand.u32 %v4852, 4294901760
        %v5395 = vsub.f32 %v4852, %v5394
        %5396 = vmatpush.msra.mxu0 %v5395
        %v5397 = vand.u32 %v4848, 4294901760
        %v5398 = vsub.f32 %v4848, %v5397
        %5399 = vmatpush.msra.mxu0 %v5398
        %v5400 = vand.u32 %v4844, 4294901760
        %v5401 = vsub.f32 %v4844, %v5400
        %5402 = vmatpush.msra.mxu0 %v5401
        %v5403 = vand.u32 %v4840, 4294901760
        %v5404 = vsub.f32 %v4840, %v5403
        %5405 = vmatpush.msra.mxu0 %v5404
        %v5406 = vand.u32 %v4836, 4294901760
        %v5407 = vsub.f32 %v4836, %v5406
        %5408 = vmatpush.msra.mxu0 %v5407
        %v5409 = vand.u32 %v4832, 4294901760
        %v5410 = vsub.f32 %v4832, %v5409
        %5411 = vmatpush.msra.mxu0 %v5410
        %v5412 = vand.u32 %v4828, 4294901760
        %v5413 = vsub.f32 %v4828, %v5412
        %5414 = vmatpush.msra.mxu0 %v5413
        %v5415 = vand.u32 %v4824, 4294901760
        %v5416 = vsub.f32 %v4824, %v5415
        %5417 = vmatpush.msra.mxu0 %v5416
        %v5418 = vand.u32 %v4821, 4294901760
        %v5419 = vsub.f32 %v4821, %v5418
        %5420 = vmatmul.f32.gmra.mxu0 %v5419
        %v5421 = vpop.f32.mrf.mxu0
        %v5422 = vadd.f32 %v5368, %v5421
        %5423 = vdwg.mxu0
        %v5424 = vand.u32 %v4884, 4294901760
        %5425 = vmatpush.msra.mxu0 %v5424
        %v5426 = vand.u32 %v4880, 4294901760
        %5427 = vmatpush.msra.mxu0 %v5426
        %v5428 = vand.u32 %v4876, 4294901760
        %5429 = vmatpush.msra.mxu0 %v5428
        %v5430 = vand.u32 %v4872, 4294901760
        %5431 = vmatpush.msra.mxu0 %v5430
        %v5432 = vand.u32 %v4868, 4294901760
        %5433 = vmatpush.msra.mxu0 %v5432
        %v5434 = vand.u32 %v4864, 4294901760
        %5435 = vmatpush.msra.mxu0 %v5434
        %v5436 = vand.u32 %v4860, 4294901760
        %5437 = vmatpush.msra.mxu0 %v5436
        %v5438 = vand.u32 %v4856, 4294901760
        %5439 = vmatpush.msra.mxu0 %v5438
        %v5440 = vand.u32 %v4852, 4294901760
        %5441 = vmatpush.msra.mxu0 %v5440
        %v5442 = vand.u32 %v4848, 4294901760
        %5443 = vmatpush.msra.mxu0 %v5442
        %v5444 = vand.u32 %v4844, 4294901760
        %5445 = vmatpush.msra.mxu0 %v5444
        %v5446 = vand.u32 %v4840, 4294901760
        %5447 = vmatpush.msra.mxu0 %v5446
        %v5448 = vand.u32 %v4836, 4294901760
        %5449 = vmatpush.msra.mxu0 %v5448
        %v5450 = vand.u32 %v4832, 4294901760
        %5451 = vmatpush.msra.mxu0 %v5450
        %v5452 = vand.u32 %v4828, 4294901760
        %5453 = vmatpush.msra.mxu0 %v5452
        %v5454 = vand.u32 %v4824, 4294901760
        %5455 = vmatpush.msra.mxu0 %v5454
        %v5456 = vand.u32 %v4821, 4294901760
        %v5457 = vsub.f32 %v4821, %v5456
        %v5458 = vand.u32 %v5457, 4294901760
        %5459 = vmatmul.f32.gmra.mxu0 %v5458
        %v5460 = vpop.f32.mrf.mxu0
        %v5461 = vadd.f32 %v5422, %v5460
        %5462 = vdwg.mxu0
        %v5463 = vand.u32 %v4884, 4294901760
        %v5464 = vsub.f32 %v4884, %v5463
        %v5465 = vand.u32 %v5464, 4294901760
        %5466 = vmatpush.msra.mxu0 %v5465
        %v5467 = vand.u32 %v4880, 4294901760
        %v5468 = vsub.f32 %v4880, %v5467
        %v5469 = vand.u32 %v5468, 4294901760
        %5470 = vmatpush.msra.mxu0 %v5469
        %v5471 = vand.u32 %v4876, 4294901760
        %v5472 = vsub.f32 %v4876, %v5471
        %v5473 = vand.u32 %v5472, 4294901760
        %5474 = vmatpush.msra.mxu0 %v5473
        %v5475 = vand.u32 %v4872, 4294901760
        %v5476 = vsub.f32 %v4872, %v5475
        %v5477 = vand.u32 %v5476, 4294901760
        %5478 = vmatpush.msra.mxu0 %v5477
        %v5479 = vand.u32 %v4868, 4294901760
        %v5480 = vsub.f32 %v4868, %v5479
        %v5481 = vand.u32 %v5480, 4294901760
        %5482 = vmatpush.msra.mxu0 %v5481
        %v5483 = vand.u32 %v4864, 4294901760
        %v5484 = vsub.f32 %v4864, %v5483
        %v5485 = vand.u32 %v5484, 4294901760
        %5486 = vmatpush.msra.mxu0 %v5485
        %v5487 = vand.u32 %v4860, 4294901760
        %v5488 = vsub.f32 %v4860, %v5487
        %v5489 = vand.u32 %v5488, 4294901760
        %5490 = vmatpush.msra.mxu0 %v5489
        %v5491 = vand.u32 %v4856, 4294901760
        %v5492 = vsub.f32 %v4856, %v5491
        %v5493 = vand.u32 %v5492, 4294901760
        %5494 = vmatpush.msra.mxu0 %v5493
        %v5495 = vand.u32 %v4852, 4294901760
        %v5496 = vsub.f32 %v4852, %v5495
        %v5497 = vand.u32 %v5496, 4294901760
        %5498 = vmatpush.msra.mxu0 %v5497
        %v5499 = vand.u32 %v4848, 4294901760
        %v5500 = vsub.f32 %v4848, %v5499
        %v5501 = vand.u32 %v5500, 4294901760
        %5502 = vmatpush.msra.mxu0 %v5501
        %v5503 = vand.u32 %v4844, 4294901760
        %v5504 = vsub.f32 %v4844, %v5503
        %v5505 = vand.u32 %v5504, 4294901760
        %5506 = vmatpush.msra.mxu0 %v5505
        %v5507 = vand.u32 %v4840, 4294901760
        %v5508 = vsub.f32 %v4840, %v5507
        %v5509 = vand.u32 %v5508, 4294901760
        %5510 = vmatpush.msra.mxu0 %v5509
        %v5511 = vand.u32 %v4836, 4294901760
        %v5512 = vsub.f32 %v4836, %v5511
        %v5513 = vand.u32 %v5512, 4294901760
        %5514 = vmatpush.msra.mxu0 %v5513
        %v5515 = vand.u32 %v4832, 4294901760
        %v5516 = vsub.f32 %v4832, %v5515
        %v5517 = vand.u32 %v5516, 4294901760
        %5518 = vmatpush.msra.mxu0 %v5517
        %v5519 = vand.u32 %v4828, 4294901760
        %v5520 = vsub.f32 %v4828, %v5519
        %v5521 = vand.u32 %v5520, 4294901760
        %5522 = vmatpush.msra.mxu0 %v5521
        %v5523 = vand.u32 %v4824, 4294901760
        %v5524 = vsub.f32 %v4824, %v5523
        %v5525 = vand.u32 %v5524, 4294901760
        %5526 = vmatpush.msra.mxu0 %v5525
        %v5527 = vand.u32 %v4821, 4294901760
        %5528 = vmatmul.f32.gmra.mxu0 %v5527
        %v5529 = vpop.f32.mrf.mxu0
        %v5530 = vadd.f32 %v5461, %v5529
        %5531 = vdwg.mxu0
        %v5532 = vand.u32 %v4884, 4294901760
        %5533 = vmatpush.msra.mxu0 %v5532
        %v5534 = vand.u32 %v4880, 4294901760
        %5535 = vmatpush.msra.mxu0 %v5534
        %v5536 = vand.u32 %v4876, 4294901760
        %5537 = vmatpush.msra.mxu0 %v5536
        %v5538 = vand.u32 %v4872, 4294901760
        %5539 = vmatpush.msra.mxu0 %v5538
        %v5540 = vand.u32 %v4868, 4294901760
        %5541 = vmatpush.msra.mxu0 %v5540
        %v5542 = vand.u32 %v4864, 4294901760
        %5543 = vmatpush.msra.mxu0 %v5542
        %v5544 = vand.u32 %v4860, 4294901760
        %5545 = vmatpush.msra.mxu0 %v5544
        %v5546 = vand.u32 %v4856, 4294901760
        %5547 = vmatpush.msra.mxu0 %v5546
        %v5548 = vand.u32 %v4852, 4294901760
        %5549 = vmatpush.msra.mxu0 %v5548
        %v5550 = vand.u32 %v4848, 4294901760
        %5551 = vmatpush.msra.mxu0 %v5550
        %v5552 = vand.u32 %v4844, 4294901760
        %5553 = vmatpush.msra.mxu0 %v5552
        %v5554 = vand.u32 %v4840, 4294901760
        %5555 = vmatpush.msra.mxu0 %v5554
        %v5556 = vand.u32 %v4836, 4294901760
        %5557 = vmatpush.msra.mxu0 %v5556
        %v5558 = vand.u32 %v4832, 4294901760
        %5559 = vmatpush.msra.mxu0 %v5558
        %v5560 = vand.u32 %v4828, 4294901760
        %5561 = vmatpush.msra.mxu0 %v5560
        %v5562 = vand.u32 %v4824, 4294901760
        %5563 = vmatpush.msra.mxu0 %v5562
        %v5564 = vand.u32 %v4821, 4294901760
        %5565 = vmatmul.f32.gmra.mxu0 %v5564
        %v5566 = vpop.f32.mrf.mxu0
        %v5567 = vadd.f32 %v5530, %v5566
        %5568 = vdwg.mxu0
        %v5569 = vand.u32 %v4885, 4294901760
        %5570 = vmatpush.msra.mxu0 %v5569
        %v5571 = vand.u32 %v4881, 4294901760
        %5572 = vmatpush.msra.mxu0 %v5571
        %v5573 = vand.u32 %v4877, 4294901760
        %5574 = vmatpush.msra.mxu0 %v5573
        %v5575 = vand.u32 %v4873, 4294901760
        %5576 = vmatpush.msra.mxu0 %v5575
        %v5577 = vand.u32 %v4869, 4294901760
        %5578 = vmatpush.msra.mxu0 %v5577
        %v5579 = vand.u32 %v4865, 4294901760
        %5580 = vmatpush.msra.mxu0 %v5579
        %v5581 = vand.u32 %v4861, 4294901760
        %5582 = vmatpush.msra.mxu0 %v5581
        %v5583 = vand.u32 %v4857, 4294901760
        %5584 = vmatpush.msra.mxu0 %v5583
        %v5585 = vand.u32 %v4853, 4294901760
        %5586 = vmatpush.msra.mxu0 %v5585
        %v5587 = vand.u32 %v4849, 4294901760
        %5588 = vmatpush.msra.mxu0 %v5587
        %v5589 = vand.u32 %v4845, 4294901760
        %5590 = vmatpush.msra.mxu0 %v5589
        %v5591 = vand.u32 %v4841, 4294901760
        %5592 = vmatpush.msra.mxu0 %v5591
        %v5593 = vand.u32 %v4837, 4294901760
        %5594 = vmatpush.msra.mxu0 %v5593
        %v5595 = vand.u32 %v4833, 4294901760
        %5596 = vmatpush.msra.mxu0 %v5595
        %v5597 = vand.u32 %v4829, 4294901760
        %5598 = vmatpush.msra.mxu0 %v5597
        %v5599 = vand.u32 %v4825, 4294901760
        %5600 = vmatpush.msra.mxu0 %v5599
        %v5601 = vand.u32 %v4821, 4294901760
        %v5602 = vsub.f32 %v4821, %v5601
        %v5603 = vand.u32 %v5602, 4294901760
        %v5604 = vsub.f32 %v5602, %v5603
        %v5605 = vand.u32 %v5604, 4294901760
        %5606 = vmatmul.f32.gmra.mxu0 %v5605
        %v5607 = vpop.f32.mrf.mxu0
        %v5608 = vadd.f32 0.0, %v5607
        %5609 = vdwg.mxu0
        %v5610 = vand.u32 %v4885, 4294901760
        %v5611 = vsub.f32 %v4885, %v5610
        %v5612 = vand.u32 %v5611, 4294901760
        %v5613 = vsub.f32 %v5611, %v5612
        %v5614 = vand.u32 %v5613, 4294901760
        %5615 = vmatpush.msra.mxu0 %v5614
        %v5616 = vand.u32 %v4881, 4294901760
        %v5617 = vsub.f32 %v4881, %v5616
        %v5618 = vand.u32 %v5617, 4294901760
        %v5619 = vsub.f32 %v5617, %v5618
        %v5620 = vand.u32 %v5619, 4294901760
        %5621 = vmatpush.msra.mxu0 %v5620
        %v5622 = vand.u32 %v4877, 4294901760
        %v5623 = vsub.f32 %v4877, %v5622
        %v5624 = vand.u32 %v5623, 4294901760
        %v5625 = vsub.f32 %v5623, %v5624
        %v5626 = vand.u32 %v5625, 4294901760
        %5627 = vmatpush.msra.mxu0 %v5626
        %v5628 = vand.u32 %v4873, 4294901760
        %v5629 = vsub.f32 %v4873, %v5628
        %v5630 = vand.u32 %v5629, 4294901760
        %v5631 = vsub.f32 %v5629, %v5630
        %v5632 = vand.u32 %v5631, 4294901760
        %5633 = vmatpush.msra.mxu0 %v5632
        %v5634 = vand.u32 %v4869, 4294901760
        %v5635 = vsub.f32 %v4869, %v5634
        %v5636 = vand.u32 %v5635, 4294901760
        %v5637 = vsub.f32 %v5635, %v5636
        %v5638 = vand.u32 %v5637, 4294901760
        %5639 = vmatpush.msra.mxu0 %v5638
        %v5640 = vand.u32 %v4865, 4294901760
        %v5641 = vsub.f32 %v4865, %v5640
        %v5642 = vand.u32 %v5641, 4294901760
        %v5643 = vsub.f32 %v5641, %v5642
        %v5644 = vand.u32 %v5643, 4294901760
        %5645 = vmatpush.msra.mxu0 %v5644
        %v5646 = vand.u32 %v4861, 4294901760
        %v5647 = vsub.f32 %v4861, %v5646
        %v5648 = vand.u32 %v5647, 4294901760
        %v5649 = vsub.f32 %v5647, %v5648
        %v5650 = vand.u32 %v5649, 4294901760
        %5651 = vmatpush.msra.mxu0 %v5650
        %v5652 = vand.u32 %v4857, 4294901760
        %v5653 = vsub.f32 %v4857, %v5652
        %v5654 = vand.u32 %v5653, 4294901760
        %v5655 = vsub.f32 %v5653, %v5654
        %v5656 = vand.u32 %v5655, 4294901760
        %5657 = vmatpush.msra.mxu0 %v5656
        %v5658 = vand.u32 %v4853, 4294901760
        %v5659 = vsub.f32 %v4853, %v5658
        %v5660 = vand.u32 %v5659, 4294901760
        %v5661 = vsub.f32 %v5659, %v5660
        %v5662 = vand.u32 %v5661, 4294901760
        %5663 = vmatpush.msra.mxu0 %v5662
        %v5664 = vand.u32 %v4849, 4294901760
        %v5665 = vsub.f32 %v4849, %v5664
        %v5666 = vand.u32 %v5665, 4294901760
        %v5667 = vsub.f32 %v5665, %v5666
        %v5668 = vand.u32 %v5667, 4294901760
        %5669 = vmatpush.msra.mxu0 %v5668
        %v5670 = vand.u32 %v4845, 4294901760
        %v5671 = vsub.f32 %v4845, %v5670
        %v5672 = vand.u32 %v5671, 4294901760
        %v5673 = vsub.f32 %v5671, %v5672
        %v5674 = vand.u32 %v5673, 4294901760
        %5675 = vmatpush.msra.mxu0 %v5674
        %v5676 = vand.u32 %v4841, 4294901760
        %v5677 = vsub.f32 %v4841, %v5676
        %v5678 = vand.u32 %v5677, 4294901760
        %v5679 = vsub.f32 %v5677, %v5678
        %v5680 = vand.u32 %v5679, 4294901760
        %5681 = vmatpush.msra.mxu0 %v5680
        %v5682 = vand.u32 %v4837, 4294901760
        %v5683 = vsub.f32 %v4837, %v5682
        %v5684 = vand.u32 %v5683, 4294901760
        %v5685 = vsub.f32 %v5683, %v5684
        %v5686 = vand.u32 %v5685, 4294901760
        %5687 = vmatpush.msra.mxu0 %v5686
        %v5688 = vand.u32 %v4833, 4294901760
        %v5689 = vsub.f32 %v4833, %v5688
        %v5690 = vand.u32 %v5689, 4294901760
        %v5691 = vsub.f32 %v5689, %v5690
        %v5692 = vand.u32 %v5691, 4294901760
        %5693 = vmatpush.msra.mxu0 %v5692
        %v5694 = vand.u32 %v4829, 4294901760
        %v5695 = vsub.f32 %v4829, %v5694
        %v5696 = vand.u32 %v5695, 4294901760
        %v5697 = vsub.f32 %v5695, %v5696
        %v5698 = vand.u32 %v5697, 4294901760
        %5699 = vmatpush.msra.mxu0 %v5698
        %v5700 = vand.u32 %v4825, 4294901760
        %v5701 = vsub.f32 %v4825, %v5700
        %v5702 = vand.u32 %v5701, 4294901760
        %v5703 = vsub.f32 %v5701, %v5702
        %v5704 = vand.u32 %v5703, 4294901760
        %5705 = vmatpush.msra.mxu0 %v5704
        %v5706 = vand.u32 %v4821, 4294901760
        %5707 = vmatmul.f32.gmra.mxu0 %v5706
        %v5708 = vpop.f32.mrf.mxu0
        %v5709 = vadd.f32 %v5608, %v5708
        %5710 = vdwg.mxu0
        %v5711 = vand.u32 %v4885, 4294901760
        %v5712 = vsub.f32 %v4885, %v5711
        %5713 = vmatpush.msra.mxu0 %v5712
        %v5714 = vand.u32 %v4881, 4294901760
        %v5715 = vsub.f32 %v4881, %v5714
        %5716 = vmatpush.msra.mxu0 %v5715
        %v5717 = vand.u32 %v4877, 4294901760
        %v5718 = vsub.f32 %v4877, %v5717
        %5719 = vmatpush.msra.mxu0 %v5718
        %v5720 = vand.u32 %v4873, 4294901760
        %v5721 = vsub.f32 %v4873, %v5720
        %5722 = vmatpush.msra.mxu0 %v5721
        %v5723 = vand.u32 %v4869, 4294901760
        %v5724 = vsub.f32 %v4869, %v5723
        %5725 = vmatpush.msra.mxu0 %v5724
        %v5726 = vand.u32 %v4865, 4294901760
        %v5727 = vsub.f32 %v4865, %v5726
        %5728 = vmatpush.msra.mxu0 %v5727
        %v5729 = vand.u32 %v4861, 4294901760
        %v5730 = vsub.f32 %v4861, %v5729
        %5731 = vmatpush.msra.mxu0 %v5730
        %v5732 = vand.u32 %v4857, 4294901760
        %v5733 = vsub.f32 %v4857, %v5732
        %5734 = vmatpush.msra.mxu0 %v5733
        %v5735 = vand.u32 %v4853, 4294901760
        %v5736 = vsub.f32 %v4853, %v5735
        %5737 = vmatpush.msra.mxu0 %v5736
        %v5738 = vand.u32 %v4849, 4294901760
        %v5739 = vsub.f32 %v4849, %v5738
        %5740 = vmatpush.msra.mxu0 %v5739
        %v5741 = vand.u32 %v4845, 4294901760
        %v5742 = vsub.f32 %v4845, %v5741
        %5743 = vmatpush.msra.mxu0 %v5742
        %v5744 = vand.u32 %v4841, 4294901760
        %v5745 = vsub.f32 %v4841, %v5744
        %5746 = vmatpush.msra.mxu0 %v5745
        %v5747 = vand.u32 %v4837, 4294901760
        %v5748 = vsub.f32 %v4837, %v5747
        %5749 = vmatpush.msra.mxu0 %v5748
        %v5750 = vand.u32 %v4833, 4294901760
        %v5751 = vsub.f32 %v4833, %v5750
        %5752 = vmatpush.msra.mxu0 %v5751
        %v5753 = vand.u32 %v4829, 4294901760
        %v5754 = vsub.f32 %v4829, %v5753
        %5755 = vmatpush.msra.mxu0 %v5754
        %v5756 = vand.u32 %v4825, 4294901760
        %v5757 = vsub.f32 %v4825, %v5756
        %5758 = vmatpush.msra.mxu0 %v5757
        %v5759 = vand.u32 %v4821, 4294901760
        %v5760 = vsub.f32 %v4821, %v5759
        %5761 = vmatmul.f32.gmra.mxu0 %v5760
        %v5762 = vpop.f32.mrf.mxu0
        %v5763 = vadd.f32 %v5709, %v5762
        %5764 = vdwg.mxu0
        %v5765 = vand.u32 %v4885, 4294901760
        %5766 = vmatpush.msra.mxu0 %v5765
        %v5767 = vand.u32 %v4881, 4294901760
        %5768 = vmatpush.msra.mxu0 %v5767
        %v5769 = vand.u32 %v4877, 4294901760
        %5770 = vmatpush.msra.mxu0 %v5769
        %v5771 = vand.u32 %v4873, 4294901760
        %5772 = vmatpush.msra.mxu0 %v5771
        %v5773 = vand.u32 %v4869, 4294901760
        %5774 = vmatpush.msra.mxu0 %v5773
        %v5775 = vand.u32 %v4865, 4294901760
        %5776 = vmatpush.msra.mxu0 %v5775
        %v5777 = vand.u32 %v4861, 4294901760
        %5778 = vmatpush.msra.mxu0 %v5777
        %v5779 = vand.u32 %v4857, 4294901760
        %5780 = vmatpush.msra.mxu0 %v5779
        %v5781 = vand.u32 %v4853, 4294901760
        %5782 = vmatpush.msra.mxu0 %v5781
        %v5783 = vand.u32 %v4849, 4294901760
        %5784 = vmatpush.msra.mxu0 %v5783
        %v5785 = vand.u32 %v4845, 4294901760
        %5786 = vmatpush.msra.mxu0 %v5785
        %v5787 = vand.u32 %v4841, 4294901760
        %5788 = vmatpush.msra.mxu0 %v5787
        %v5789 = vand.u32 %v4837, 4294901760
        %5790 = vmatpush.msra.mxu0 %v5789
        %v5791 = vand.u32 %v4833, 4294901760
        %5792 = vmatpush.msra.mxu0 %v5791
        %v5793 = vand.u32 %v4829, 4294901760
        %5794 = vmatpush.msra.mxu0 %v5793
        %v5795 = vand.u32 %v4825, 4294901760
        %5796 = vmatpush.msra.mxu0 %v5795
        %v5797 = vand.u32 %v4821, 4294901760
        %v5798 = vsub.f32 %v4821, %v5797
        %v5799 = vand.u32 %v5798, 4294901760
        %5800 = vmatmul.f32.gmra.mxu0 %v5799
        %v5801 = vpop.f32.mrf.mxu0
        %v5802 = vadd.f32 %v5763, %v5801
        %5803 = vdwg.mxu0
        %v5804 = vand.u32 %v4885, 4294901760
        %v5805 = vsub.f32 %v4885, %v5804
        %v5806 = vand.u32 %v5805, 4294901760
        %5807 = vmatpush.msra.mxu0 %v5806
        %v5808 = vand.u32 %v4881, 4294901760
        %v5809 = vsub.f32 %v4881, %v5808
        %v5810 = vand.u32 %v5809, 4294901760
        %5811 = vmatpush.msra.mxu0 %v5810
        %v5812 = vand.u32 %v4877, 4294901760
        %v5813 = vsub.f32 %v4877, %v5812
        %v5814 = vand.u32 %v5813, 4294901760
        %5815 = vmatpush.msra.mxu0 %v5814
        %v5816 = vand.u32 %v4873, 4294901760
        %v5817 = vsub.f32 %v4873, %v5816
        %v5818 = vand.u32 %v5817, 4294901760
        %5819 = vmatpush.msra.mxu0 %v5818
        %v5820 = vand.u32 %v4869, 4294901760
        %v5821 = vsub.f32 %v4869, %v5820
        %v5822 = vand.u32 %v5821, 4294901760
        %5823 = vmatpush.msra.mxu0 %v5822
        %v5824 = vand.u32 %v4865, 4294901760
        %v5825 = vsub.f32 %v4865, %v5824
        %v5826 = vand.u32 %v5825, 4294901760
        %5827 = vmatpush.msra.mxu0 %v5826
        %v5828 = vand.u32 %v4861, 4294901760
        %v5829 = vsub.f32 %v4861, %v5828
        %v5830 = vand.u32 %v5829, 4294901760
        %5831 = vmatpush.msra.mxu0 %v5830
        %v5832 = vand.u32 %v4857, 4294901760
        %v5833 = vsub.f32 %v4857, %v5832
        %v5834 = vand.u32 %v5833, 4294901760
        %5835 = vmatpush.msra.mxu0 %v5834
        %v5836 = vand.u32 %v4853, 4294901760
        %v5837 = vsub.f32 %v4853, %v5836
        %v5838 = vand.u32 %v5837, 4294901760
        %5839 = vmatpush.msra.mxu0 %v5838
        %v5840 = vand.u32 %v4849, 4294901760
        %v5841 = vsub.f32 %v4849, %v5840
        %v5842 = vand.u32 %v5841, 4294901760
        %5843 = vmatpush.msra.mxu0 %v5842
        %v5844 = vand.u32 %v4845, 4294901760
        %v5845 = vsub.f32 %v4845, %v5844
        %v5846 = vand.u32 %v5845, 4294901760
        %5847 = vmatpush.msra.mxu0 %v5846
        %v5848 = vand.u32 %v4841, 4294901760
        %v5849 = vsub.f32 %v4841, %v5848
        %v5850 = vand.u32 %v5849, 4294901760
        %5851 = vmatpush.msra.mxu0 %v5850
        %v5852 = vand.u32 %v4837, 4294901760
        %v5853 = vsub.f32 %v4837, %v5852
        %v5854 = vand.u32 %v5853, 4294901760
        %5855 = vmatpush.msra.mxu0 %v5854
        %v5856 = vand.u32 %v4833, 4294901760
        %v5857 = vsub.f32 %v4833, %v5856
        %v5858 = vand.u32 %v5857, 4294901760
        %5859 = vmatpush.msra.mxu0 %v5858
        %v5860 = vand.u32 %v4829, 4294901760
        %v5861 = vsub.f32 %v4829, %v5860
        %v5862 = vand.u32 %v5861, 4294901760
        %5863 = vmatpush.msra.mxu0 %v5862
        %v5864 = vand.u32 %v4825, 4294901760
        %v5865 = vsub.f32 %v4825, %v5864
        %v5866 = vand.u32 %v5865, 4294901760
        %5867 = vmatpush.msra.mxu0 %v5866
        %v5868 = vand.u32 %v4821, 4294901760
        %5869 = vmatmul.f32.gmra.mxu0 %v5868
        %v5870 = vpop.f32.mrf.mxu0
        %v5871 = vadd.f32 %v5802, %v5870
        %5872 = vdwg.mxu0
        %v5873 = vand.u32 %v4885, 4294901760
        %5874 = vmatpush.msra.mxu0 %v5873
        %v5875 = vand.u32 %v4881, 4294901760
        %5876 = vmatpush.msra.mxu0 %v5875
        %v5877 = vand.u32 %v4877, 4294901760
        %5878 = vmatpush.msra.mxu0 %v5877
        %v5879 = vand.u32 %v4873, 4294901760
        %5880 = vmatpush.msra.mxu0 %v5879
        %v5881 = vand.u32 %v4869, 4294901760
        %5882 = vmatpush.msra.mxu0 %v5881
        %v5883 = vand.u32 %v4865, 4294901760
        %5884 = vmatpush.msra.mxu0 %v5883
        %v5885 = vand.u32 %v4861, 4294901760
        %5886 = vmatpush.msra.mxu0 %v5885
        %v5887 = vand.u32 %v4857, 4294901760
        %5888 = vmatpush.msra.mxu0 %v5887
        %v5889 = vand.u32 %v4853, 4294901760
        %5890 = vmatpush.msra.mxu0 %v5889
        %v5891 = vand.u32 %v4849, 4294901760
        %5892 = vmatpush.msra.mxu0 %v5891
        %v5893 = vand.u32 %v4845, 4294901760
        %5894 = vmatpush.msra.mxu0 %v5893
        %v5895 = vand.u32 %v4841, 4294901760
        %5896 = vmatpush.msra.mxu0 %v5895
        %v5897 = vand.u32 %v4837, 4294901760
        %5898 = vmatpush.msra.mxu0 %v5897
        %v5899 = vand.u32 %v4833, 4294901760
        %5900 = vmatpush.msra.mxu0 %v5899
        %v5901 = vand.u32 %v4829, 4294901760
        %5902 = vmatpush.msra.mxu0 %v5901
        %v5903 = vand.u32 %v4825, 4294901760
        %5904 = vmatpush.msra.mxu0 %v5903
        %v5905 = vand.u32 %v4821, 4294901760
        %5906 = vmatmul.f32.gmra.mxu0 %v5905
        %v5907 = vpop.f32.mrf.mxu0
        %v5908 = vadd.f32 %v5871, %v5907
        %5909 = vdwg.mxu0
        %v5910 = vand.u32 %v4886, 4294901760
        %5911 = vmatpush.msra.mxu0 %v5910
        %v5912 = vand.u32 %v4882, 4294901760
        %5913 = vmatpush.msra.mxu0 %v5912
        %v5914 = vand.u32 %v4878, 4294901760
        %5915 = vmatpush.msra.mxu0 %v5914
        %v5916 = vand.u32 %v4874, 4294901760
        %5917 = vmatpush.msra.mxu0 %v5916
        %v5918 = vand.u32 %v4870, 4294901760
        %5919 = vmatpush.msra.mxu0 %v5918
        %v5920 = vand.u32 %v4866, 4294901760
        %5921 = vmatpush.msra.mxu0 %v5920
        %v5922 = vand.u32 %v4862, 4294901760
        %5923 = vmatpush.msra.mxu0 %v5922
        %v5924 = vand.u32 %v4858, 4294901760
        %5925 = vmatpush.msra.mxu0 %v5924
        %v5926 = vand.u32 %v4854, 4294901760
        %5927 = vmatpush.msra.mxu0 %v5926
        %v5928 = vand.u32 %v4850, 4294901760
        %5929 = vmatpush.msra.mxu0 %v5928
        %v5930 = vand.u32 %v4846, 4294901760
        %5931 = vmatpush.msra.mxu0 %v5930
        %v5932 = vand.u32 %v4842, 4294901760
        %5933 = vmatpush.msra.mxu0 %v5932
        %v5934 = vand.u32 %v4838, 4294901760
        %5935 = vmatpush.msra.mxu0 %v5934
        %v5936 = vand.u32 %v4834, 4294901760
        %5937 = vmatpush.msra.mxu0 %v5936
        %v5938 = vand.u32 %v4830, 4294901760
        %5939 = vmatpush.msra.mxu0 %v5938
        %v5940 = vand.u32 %v4826, 4294901760
        %5941 = vmatpush.msra.mxu0 %v5940
        %v5942 = vand.u32 %v4821, 4294901760
        %v5943 = vsub.f32 %v4821, %v5942
        %v5944 = vand.u32 %v5943, 4294901760
        %v5945 = vsub.f32 %v5943, %v5944
        %v5946 = vand.u32 %v5945, 4294901760
        %5947 = vmatmul.f32.gmra.mxu0 %v5946
        %v5948 = vpop.f32.mrf.mxu0
        %v5949 = vadd.f32 0.0, %v5948
        %5950 = vdwg.mxu0
        %v5951 = vand.u32 %v4886, 4294901760
        %v5952 = vsub.f32 %v4886, %v5951
        %v5953 = vand.u32 %v5952, 4294901760
        %v5954 = vsub.f32 %v5952, %v5953
        %v5955 = vand.u32 %v5954, 4294901760
        %5956 = vmatpush.msra.mxu0 %v5955
        %v5957 = vand.u32 %v4882, 4294901760
        %v5958 = vsub.f32 %v4882, %v5957
        %v5959 = vand.u32 %v5958, 4294901760
        %v5960 = vsub.f32 %v5958, %v5959
        %v5961 = vand.u32 %v5960, 4294901760
        %5962 = vmatpush.msra.mxu0 %v5961
        %v5963 = vand.u32 %v4878, 4294901760
        %v5964 = vsub.f32 %v4878, %v5963
        %v5965 = vand.u32 %v5964, 4294901760
        %v5966 = vsub.f32 %v5964, %v5965
        %v5967 = vand.u32 %v5966, 4294901760
        %5968 = vmatpush.msra.mxu0 %v5967
        %v5969 = vand.u32 %v4874, 4294901760
        %v5970 = vsub.f32 %v4874, %v5969
        %v5971 = vand.u32 %v5970, 4294901760
        %v5972 = vsub.f32 %v5970, %v5971
        %v5973 = vand.u32 %v5972, 4294901760
        %5974 = vmatpush.msra.mxu0 %v5973
        %v5975 = vand.u32 %v4870, 4294901760
        %v5976 = vsub.f32 %v4870, %v5975
        %v5977 = vand.u32 %v5976, 4294901760
        %v5978 = vsub.f32 %v5976, %v5977
        %v5979 = vand.u32 %v5978, 4294901760
        %5980 = vmatpush.msra.mxu0 %v5979
        %v5981 = vand.u32 %v4866, 4294901760
        %v5982 = vsub.f32 %v4866, %v5981
        %v5983 = vand.u32 %v5982, 4294901760
        %v5984 = vsub.f32 %v5982, %v5983
        %v5985 = vand.u32 %v5984, 4294901760
        %5986 = vmatpush.msra.mxu0 %v5985
        %v5987 = vand.u32 %v4862, 4294901760
        %v5988 = vsub.f32 %v4862, %v5987
        %v5989 = vand.u32 %v5988, 4294901760
        %v5990 = vsub.f32 %v5988, %v5989
        %v5991 = vand.u32 %v5990, 4294901760
        %5992 = vmatpush.msra.mxu0 %v5991
        %v5993 = vand.u32 %v4858, 4294901760
        %v5994 = vsub.f32 %v4858, %v5993
        %v5995 = vand.u32 %v5994, 4294901760
        %v5996 = vsub.f32 %v5994, %v5995
        %v5997 = vand.u32 %v5996, 4294901760
        %5998 = vmatpush.msra.mxu0 %v5997
        %v5999 = vand.u32 %v4854, 4294901760
        %v6000 = vsub.f32 %v4854, %v5999
        %v6001 = vand.u32 %v6000, 4294901760
        %v6002 = vsub.f32 %v6000, %v6001
        %v6003 = vand.u32 %v6002, 4294901760
        %6004 = vmatpush.msra.mxu0 %v6003
        %v6005 = vand.u32 %v4850, 4294901760
        %v6006 = vsub.f32 %v4850, %v6005
        %v6007 = vand.u32 %v6006, 4294901760
        %v6008 = vsub.f32 %v6006, %v6007
        %v6009 = vand.u32 %v6008, 4294901760
        %6010 = vmatpush.msra.mxu0 %v6009
        %v6011 = vand.u32 %v4846, 4294901760
        %v6012 = vsub.f32 %v4846, %v6011
        %v6013 = vand.u32 %v6012, 4294901760
        %v6014 = vsub.f32 %v6012, %v6013
        %v6015 = vand.u32 %v6014, 4294901760
        %6016 = vmatpush.msra.mxu0 %v6015
        %v6017 = vand.u32 %v4842, 4294901760
        %v6018 = vsub.f32 %v4842, %v6017
        %v6019 = vand.u32 %v6018, 4294901760
        %v6020 = vsub.f32 %v6018, %v6019
        %v6021 = vand.u32 %v6020, 4294901760
        %6022 = vmatpush.msra.mxu0 %v6021
        %v6023 = vand.u32 %v4838, 4294901760
        %v6024 = vsub.f32 %v4838, %v6023
        %v6025 = vand.u32 %v6024, 4294901760
        %v6026 = vsub.f32 %v6024, %v6025
        %v6027 = vand.u32 %v6026, 4294901760
        %6028 = vmatpush.msra.mxu0 %v6027
        %v6029 = vand.u32 %v4834, 4294901760
        %v6030 = vsub.f32 %v4834, %v6029
        %v6031 = vand.u32 %v6030, 4294901760
        %v6032 = vsub.f32 %v6030, %v6031
        %v6033 = vand.u32 %v6032, 4294901760
        %6034 = vmatpush.msra.mxu0 %v6033
        %v6035 = vand.u32 %v4830, 4294901760
        %v6036 = vsub.f32 %v4830, %v6035
        %v6037 = vand.u32 %v6036, 4294901760
        %v6038 = vsub.f32 %v6036, %v6037
        %v6039 = vand.u32 %v6038, 4294901760
        %6040 = vmatpush.msra.mxu0 %v6039
        %v6041 = vand.u32 %v4826, 4294901760
        %v6042 = vsub.f32 %v4826, %v6041
        %v6043 = vand.u32 %v6042, 4294901760
        %v6044 = vsub.f32 %v6042, %v6043
        %v6045 = vand.u32 %v6044, 4294901760
        %6046 = vmatpush.msra.mxu0 %v6045
        %v6047 = vand.u32 %v4821, 4294901760
        %6048 = vmatmul.f32.gmra.mxu0 %v6047
        %v6049 = vpop.f32.mrf.mxu0
        %v6050 = vadd.f32 %v5949, %v6049
        %6051 = vdwg.mxu0
        %v6052 = vand.u32 %v4886, 4294901760
        %v6053 = vsub.f32 %v4886, %v6052
        %6054 = vmatpush.msra.mxu0 %v6053
        %v6055 = vand.u32 %v4882, 4294901760
        %v6056 = vsub.f32 %v4882, %v6055
        %6057 = vmatpush.msra.mxu0 %v6056
        %v6058 = vand.u32 %v4878, 4294901760
        %v6059 = vsub.f32 %v4878, %v6058
        %6060 = vmatpush.msra.mxu0 %v6059
        %v6061 = vand.u32 %v4874, 4294901760
        %v6062 = vsub.f32 %v4874, %v6061
        %6063 = vmatpush.msra.mxu0 %v6062
        %v6064 = vand.u32 %v4870, 4294901760
        %v6065 = vsub.f32 %v4870, %v6064
        %6066 = vmatpush.msra.mxu0 %v6065
        %v6067 = vand.u32 %v4866, 4294901760
        %v6068 = vsub.f32 %v4866, %v6067
        %6069 = vmatpush.msra.mxu0 %v6068
        %v6070 = vand.u32 %v4862, 4294901760
        %v6071 = vsub.f32 %v4862, %v6070
        %6072 = vmatpush.msra.mxu0 %v6071
        %v6073 = vand.u32 %v4858, 4294901760
        %v6074 = vsub.f32 %v4858, %v6073
        %6075 = vmatpush.msra.mxu0 %v6074
        %v6076 = vand.u32 %v4854, 4294901760
        %v6077 = vsub.f32 %v4854, %v6076
        %6078 = vmatpush.msra.mxu0 %v6077
        %v6079 = vand.u32 %v4850, 4294901760
        %v6080 = vsub.f32 %v4850, %v6079
        %6081 = vmatpush.msra.mxu0 %v6080
        %v6082 = vand.u32 %v4846, 4294901760
        %v6083 = vsub.f32 %v4846, %v6082
        %6084 = vmatpush.msra.mxu0 %v6083
        %v6085 = vand.u32 %v4842, 4294901760
        %v6086 = vsub.f32 %v4842, %v6085
        %6087 = vmatpush.msra.mxu0 %v6086
        %v6088 = vand.u32 %v4838, 4294901760
        %v6089 = vsub.f32 %v4838, %v6088
        %6090 = vmatpush.msra.mxu0 %v6089
        %v6091 = vand.u32 %v4834, 4294901760
        %v6092 = vsub.f32 %v4834, %v6091
        %6093 = vmatpush.msra.mxu0 %v6092
        %v6094 = vand.u32 %v4830, 4294901760
        %v6095 = vsub.f32 %v4830, %v6094
        %6096 = vmatpush.msra.mxu0 %v6095
        %v6097 = vand.u32 %v4826, 4294901760
        %v6098 = vsub.f32 %v4826, %v6097
        %6099 = vmatpush.msra.mxu0 %v6098
        %v6100 = vand.u32 %v4821, 4294901760
        %v6101 = vsub.f32 %v4821, %v6100
        %6102 = vmatmul.f32.gmra.mxu0 %v6101
        %v6103 = vpop.f32.mrf.mxu0
        %v6104 = vadd.f32 %v6050, %v6103
        %6105 = vdwg.mxu0
        %v6106 = vand.u32 %v4886, 4294901760
        %6107 = vmatpush.msra.mxu0 %v6106
        %v6108 = vand.u32 %v4882, 4294901760
        %6109 = vmatpush.msra.mxu0 %v6108
        %v6110 = vand.u32 %v4878, 4294901760
        %6111 = vmatpush.msra.mxu0 %v6110
        %v6112 = vand.u32 %v4874, 4294901760
        %6113 = vmatpush.msra.mxu0 %v6112
        %v6114 = vand.u32 %v4870, 4294901760
        %6115 = vmatpush.msra.mxu0 %v6114
        %v6116 = vand.u32 %v4866, 4294901760
        %6117 = vmatpush.msra.mxu0 %v6116
        %v6118 = vand.u32 %v4862, 4294901760
        %6119 = vmatpush.msra.mxu0 %v6118
        %v6120 = vand.u32 %v4858, 4294901760
        %6121 = vmatpush.msra.mxu0 %v6120
        %v6122 = vand.u32 %v4854, 4294901760
        %6123 = vmatpush.msra.mxu0 %v6122
        %v6124 = vand.u32 %v4850, 4294901760
        %6125 = vmatpush.msra.mxu0 %v6124
        %v6126 = vand.u32 %v4846, 4294901760
        %6127 = vmatpush.msra.mxu0 %v6126
        %v6128 = vand.u32 %v4842, 4294901760
        %6129 = vmatpush.msra.mxu0 %v6128
        %v6130 = vand.u32 %v4838, 4294901760
        %6131 = vmatpush.msra.mxu0 %v6130
        %v6132 = vand.u32 %v4834, 4294901760
        %6133 = vmatpush.msra.mxu0 %v6132
        %v6134 = vand.u32 %v4830, 4294901760
        %6135 = vmatpush.msra.mxu0 %v6134
        %v6136 = vand.u32 %v4826, 4294901760
        %6137 = vmatpush.msra.mxu0 %v6136
        %v6138 = vand.u32 %v4821, 4294901760
        %v6139 = vsub.f32 %v4821, %v6138
        %v6140 = vand.u32 %v6139, 4294901760
        %6141 = vmatmul.f32.gmra.mxu0 %v6140
        %v6142 = vpop.f32.mrf.mxu0
        %v6143 = vadd.f32 %v6104, %v6142
        %6144 = vdwg.mxu0
        %v6145 = vand.u32 %v4886, 4294901760
        %v6146 = vsub.f32 %v4886, %v6145
        %v6147 = vand.u32 %v6146, 4294901760
        %6148 = vmatpush.msra.mxu0 %v6147
        %v6149 = vand.u32 %v4882, 4294901760
        %v6150 = vsub.f32 %v4882, %v6149
        %v6151 = vand.u32 %v6150, 4294901760
        %6152 = vmatpush.msra.mxu0 %v6151
        %v6153 = vand.u32 %v4878, 4294901760
        %v6154 = vsub.f32 %v4878, %v6153
        %v6155 = vand.u32 %v6154, 4294901760
        %6156 = vmatpush.msra.mxu0 %v6155
        %v6157 = vand.u32 %v4874, 4294901760
        %v6158 = vsub.f32 %v4874, %v6157
        %v6159 = vand.u32 %v6158, 4294901760
        %6160 = vmatpush.msra.mxu0 %v6159
        %v6161 = vand.u32 %v4870, 4294901760
        %v6162 = vsub.f32 %v4870, %v6161
        %v6163 = vand.u32 %v6162, 4294901760
        %6164 = vmatpush.msra.mxu0 %v6163
        %v6165 = vand.u32 %v4866, 4294901760
        %v6166 = vsub.f32 %v4866, %v6165
        %v6167 = vand.u32 %v6166, 4294901760
        %6168 = vmatpush.msra.mxu0 %v6167
        %v6169 = vand.u32 %v4862, 4294901760
        %v6170 = vsub.f32 %v4862, %v6169
        %v6171 = vand.u32 %v6170, 4294901760
        %6172 = vmatpush.msra.mxu0 %v6171
        %v6173 = vand.u32 %v4858, 4294901760
        %v6174 = vsub.f32 %v4858, %v6173
        %v6175 = vand.u32 %v6174, 4294901760
        %6176 = vmatpush.msra.mxu0 %v6175
        %v6177 = vand.u32 %v4854, 4294901760
        %v6178 = vsub.f32 %v4854, %v6177
        %v6179 = vand.u32 %v6178, 4294901760
        %6180 = vmatpush.msra.mxu0 %v6179
        %v6181 = vand.u32 %v4850, 4294901760
        %v6182 = vsub.f32 %v4850, %v6181
        %v6183 = vand.u32 %v6182, 4294901760
        %6184 = vmatpush.msra.mxu0 %v6183
        %v6185 = vand.u32 %v4846, 4294901760
        %v6186 = vsub.f32 %v4846, %v6185
        %v6187 = vand.u32 %v6186, 4294901760
        %6188 = vmatpush.msra.mxu0 %v6187
        %v6189 = vand.u32 %v4842, 4294901760
        %v6190 = vsub.f32 %v4842, %v6189
        %v6191 = vand.u32 %v6190, 4294901760
        %6192 = vmatpush.msra.mxu0 %v6191
        %v6193 = vand.u32 %v4838, 4294901760
        %v6194 = vsub.f32 %v4838, %v6193
        %v6195 = vand.u32 %v6194, 4294901760
        %6196 = vmatpush.msra.mxu0 %v6195
        %v6197 = vand.u32 %v4834, 4294901760
        %v6198 = vsub.f32 %v4834, %v6197
        %v6199 = vand.u32 %v6198, 4294901760
        %6200 = vmatpush.msra.mxu0 %v6199
        %v6201 = vand.u32 %v4830, 4294901760
        %v6202 = vsub.f32 %v4830, %v6201
        %v6203 = vand.u32 %v6202, 4294901760
        %6204 = vmatpush.msra.mxu0 %v6203
        %v6205 = vand.u32 %v4826, 4294901760
        %v6206 = vsub.f32 %v4826, %v6205
        %v6207 = vand.u32 %v6206, 4294901760
        %6208 = vmatpush.msra.mxu0 %v6207
        %v6209 = vand.u32 %v4821, 4294901760
        %6210 = vmatmul.f32.gmra.mxu0 %v6209
        %v6211 = vpop.f32.mrf.mxu0
        %v6212 = vadd.f32 %v6143, %v6211
        %6213 = vdwg.mxu0
        %v6214 = vand.u32 %v4886, 4294901760
        %6215 = vmatpush.msra.mxu0 %v6214
        %v6216 = vand.u32 %v4882, 4294901760
        %6217 = vmatpush.msra.mxu0 %v6216
        %v6218 = vand.u32 %v4878, 4294901760
        %6219 = vmatpush.msra.mxu0 %v6218
        %v6220 = vand.u32 %v4874, 4294901760
        %6221 = vmatpush.msra.mxu0 %v6220
        %v6222 = vand.u32 %v4870, 4294901760
        %6223 = vmatpush.msra.mxu0 %v6222
        %v6224 = vand.u32 %v4866, 4294901760
        %6225 = vmatpush.msra.mxu0 %v6224
        %v6226 = vand.u32 %v4862, 4294901760
        %6227 = vmatpush.msra.mxu0 %v6226
        %v6228 = vand.u32 %v4858, 4294901760
        %6229 = vmatpush.msra.mxu0 %v6228
        %v6230 = vand.u32 %v4854, 4294901760
        %6231 = vmatpush.msra.mxu0 %v6230
        %v6232 = vand.u32 %v4850, 4294901760
        %6233 = vmatpush.msra.mxu0 %v6232
        %v6234 = vand.u32 %v4846, 4294901760
        %6235 = vmatpush.msra.mxu0 %v6234
        %v6236 = vand.u32 %v4842, 4294901760
        %6237 = vmatpush.msra.mxu0 %v6236
        %v6238 = vand.u32 %v4838, 4294901760
        %6239 = vmatpush.msra.mxu0 %v6238
        %v6240 = vand.u32 %v4834, 4294901760
        %6241 = vmatpush.msra.mxu0 %v6240
        %v6242 = vand.u32 %v4830, 4294901760
        %6243 = vmatpush.msra.mxu0 %v6242
        %v6244 = vand.u32 %v4826, 4294901760
        %6245 = vmatpush.msra.mxu0 %v6244
        %v6246 = vand.u32 %v4821, 4294901760
        %6247 = vmatmul.f32.gmra.mxu0 %v6246
        %v6248 = vpop.f32.mrf.mxu0
        %v6249 = vadd.f32 %v6212, %v6248
        %6250 = vdwg.mxu0
        %v6251 = vadd.f32 %v4817, %v5226
        %v6252 = vadd.f32 %v4818, %v5567
        %v6253 = vadd.f32 %v4819, %v5908
        %v6254 = vadd.f32 %v4820, %v6249
        %6255 = vst [vmem:[%s247] sm:$0xff] %v6251
        %6256 = vst [vmem:[%s247 + $0x8] sm:$0xff] %v6252
        %6257 = vst [vmem:[%s247 + $0x10] sm:$0xff] %v6253
        %6258 = vst [vmem:[%s247 + $0x18] sm:$0xff] %v6254
        %s6259 = smul.u32 4, %s21
        %p6260 = scmp.lt.s32.totalorder %s20, 1
        %s6261 = scalar_select %p6260, %s20, 1
        %p6262 = scmp.lt.s32.totalorder %s6259, 7
        %s6263 = scalar_select %p6262, %s6259, 7
        %s6264 = smul.addr %s6261, 8
        %s6265 = sadd.s32 %s6263, %s6264
        %s6266 = smul.addr %s6265, 8
        %s6267 = scalar_lea.vmem %s4, %s6266
        // Predicated region
        $region41: #{deconv_block_pallas.1} parent=35 // pred_check
          %p6268 = pneg %p139
        $region42: #{deconv_block_pallas.1} parent=35 // pred_check_branch
          %6270 = sbr.rel (%p6268) target = $region44
        $region43: #{deconv_block_pallas.1} parent=35 // pred_region
          %s6271 = smul.u32 4, %s21
        $region44: #{deconv_block_pallas.1} parent=35 // pred_fallthru
          _
      $region36: #{deconv_block_pallas.1} parent=5 // pred_fallthru
        _
      %p6272 = scmp.le.s32.totalorder 2, %s11
      // Predicated region
      $region45: #{deconv_block_pallas.1} parent=5 // pred_check
        %p6273 = pneg %p6272
      $region46: #{deconv_block_pallas.1} parent=5 // pred_check_branch
        %6275 = sbr.rel (%p6273) target = $region48
      $region47: #{deconv_block_pallas.1} parent=5 // pred_region
        %s6276 = ssub.s32 %s11, 2
        // Predicated region
        $region49: #{deconv_block_pallas.1} parent=47 // pred_check
          %p6277 = pneg %p145
        $region50: #{deconv_block_pallas.1} parent=47 // pred_check_branch
          %6279 = sbr.rel (%p6277) target = $region52
        $region51: #{deconv_block_pallas.1} parent=47 // pred_region
          %s6280 = smul.u32 4, %s23
          %p6281 = scmp.lt.s32.totalorder %s22, 1
          %s6282 = scalar_select %p6281, %s22, 1
          %p6283 = scmp.lt.s32.totalorder %s6280, 7
          %s6284 = scalar_select %p6283, %s6280, 7
          %s6285 = smul.addr %s6282, 8
          %s6286 = sadd.s32 %s6284, %s6285
          %s6287 = smul.addr %s6286, 8
          %s6288 = scalar_lea.vmem %s4, %s6287
        $region52: #{deconv_block_pallas.1} parent=47 // pred_fallthru
          _
      $region48: #{deconv_block_pallas.1} parent=5 // pred_fallthru
        _
    $region6: #{deconv_block_pallas.1} parent=1 // loop_footer
      %s15 = sadd.s32 1, %s11
    $region7: #{deconv_block_pallas.1} parent=1 // loop_footer_branch
      %10 = sbr.rel target = $region3
    $region8: #{deconv_block_pallas.1} parent=1 // loop_exit
      _
    %6289 = vsyncpa [#allocation4], 1
    %s6290 = scalar_lea.sflag [#allocation4], 1
    %6291 = vsyncpa %s6290, 1

</llo_original>
